<compile_context>
chip_gen: v7x
topology: tpu7x:2x2x1
jax: 0.10.0
libtpu: 0.0.40
codegen_flags: <defaults>
</compile_context>

<pallas_src>
import functools
import math

import jax
import jax.numpy as jnp
from jax.experimental import pallas as pl
from jax.experimental.pallas import tpu as pltpu


# ---------------------------------------------------------------------------
# Fused decoder-stack kernel
# ---------------------------------------------------------------------------
def _decoder_stack_kernel(*refs, nhead, eps, has_pos, has_qpos):
  f32 = jnp.float32
  bf16 = jnp.bfloat16

  it = iter(refs)
  tgt_ref = next(it)                          # (B, L, E)   f32
  mem_ref = next(it)                          # (B, Lm, E)  bf16 (value source)
  mempos_ref = next(it) if has_pos else mem_ref   # (B, Lm, E) bf16 (key source)
  qpos_ref = next(it) if has_qpos else None   # (B, L, E)   f32
  w_sa_qk_ref = next(it)                      # (1, E, 2E) bf16, Q cols pre-scaled
  w_sa_v_ref = next(it)                       # (1, E, E)  bf16
  w_sa_out_ref = next(it)                     # (1, E, E)  bf16
  w_ca_q_ref = next(it)                       # (1, E, E)  bf16, pre-scaled
  w_ca_k_ref = next(it)                       # (1, E, E)  bf16
  w_ca_v_ref = next(it)                       # (1, E, E)  bf16
  w_ca_out_ref = next(it)                     # (1, E, E)  bf16
  w1_ref = next(it)                           # (1, E, Dff) bf16
  b1_ref = next(it)                           # (1, 1, Dff) f32
  w2_ref = next(it)                           # (1, Dff, E) bf16
  b2_ref = next(it)                           # (1, 1, E)   f32
  ln_g_ref = next(it)                         # (1, 3, E)   f32
  ln_b_ref = next(it)                         # (1, 3, E)   f32
  o_ref = next(it)                            # (B, L, E)
  t_ref = next(it)                            # VMEM (B*L, E) f32 running state
  attn_ref = next(it)                         # VMEM (B*L, E) f32 head staging

  layer = pl.program_id(1)
  B, L, E = tgt_ref.shape
  Lm = mem_ref.shape[1]
  H = nhead
  dh = E // H
  rows = B * L

  # Load the initial decoder state for this batch block once (layer 0).
  @pl.when(layer == 0)
  def _():
    t_ref[...] = tgt_ref[...].reshape(rows, E).astype(f32)

  t = t_ref[...]                                             # (rows, E) f32
  qp = (qpos_ref[...].reshape(rows, E).astype(f32)
        if has_qpos else None)
  mem_bf = mem_ref[...].reshape(B * Lm, E)                   # bf16
  mempos_bf = mempos_ref[...].reshape(B * Lm, E)             # bf16

  ln_g = ln_g_ref[0]                                         # (3, E) f32
  ln_b = ln_b_ref[0]

  def layer_norm(x, idx):                                    # f32 epilogue
    mu = jnp.mean(x, axis=-1, keepdims=True)
    var = jnp.mean(jnp.square(x - mu), axis=-1, keepdims=True)
    return (x - mu) * jax.lax.rsqrt(var + eps) * ln_g[idx:idx + 1] + ln_b[idx:idx + 1]

  def mm(x_bf, w_bf):                                        # bf16 MXU, f32 acc
    return jnp.dot(x_bf, w_bf, preferred_element_type=f32)

  def attention(q_bf, k_bf, v_bf, w_out_bf, lk):
    """Multi-head attention (bias=False). Scale is folded into Wq at pack time.

    Per (batch, head): score -> softmax -> P@V written into the f32 staging
    buffer at a static lane offset; then ONE (rows,E)@(E,E) out-proj matmul.
    """
    for b in range(B):
      qr = slice(b * L, (b + 1) * L)
      kr = slice(b * lk, (b + 1) * lk)
      for h in range(H):
        hc = slice(h * dh, (h + 1) * dh)
        s = jax.lax.dot_general(                             # q @ k.T, (L, lk)
            q_bf[qr, hc], k_bf[kr, hc],
            (((1,), (1,)), ((), ())), preferred_element_type=f32)
        s = s - jnp.max(s, axis=-1, keepdims=True)
        p = jnp.exp(s)
        p = p * pl.reciprocal(jnp.sum(p, axis=-1, keepdims=True), approx=False)
        attn_ref[qr, hc] = jnp.dot(p.astype(bf16), v_bf[kr, hc],
                                   preferred_element_type=f32)
    return mm(attn_ref[...].astype(bf16), w_out_bf)

  # ---- self-attention: q = k = norm1(t) + query_pos, value = norm1(t) ----
  t2 = layer_norm(t, 0)
  t2_bf = t2.astype(bf16)
  qk_in_bf = (t2 + qp).astype(bf16) if has_qpos else t2_bf
  qk_bf = mm(qk_in_bf, w_sa_qk_ref[0]).astype(bf16)          # fused Q,K proj
  v_bf = mm(t2_bf, w_sa_v_ref[0]).astype(bf16)
  t = t + attention(qk_bf[:, :E], qk_bf[:, E:], v_bf, w_sa_out_ref[0], L)

  # ---- cross-attention: q = norm2(t)+query_pos, k = memory+pos, v = memory --
  t2 = layer_norm(t, 1)
  q_in_bf = (t2 + qp).astype(bf16) if has_qpos else t2.astype(bf16)
  q_bf = mm(q_in_bf, w_ca_q_ref[0]).astype(bf16)
  k_bf = mm(mempos_bf, w_ca_k_ref[0]).astype(bf16)
  v_bf = mm(mem_bf, w_ca_v_ref[0]).astype(bf16)
  t = t + attention(q_bf, k_bf, v_bf, w_ca_out_ref[0], Lm)

  # ---- feed-forward: t += Linear2(ReLU(Linear1(norm3(t)))) ----
  t2 = layer_norm(t, 2)
  hdn = jnp.maximum(mm(t2.astype(bf16), w1_ref[0]) + b1_ref[0], 0.0)
  t = t + mm(hdn.astype(bf16), w2_ref[0]) + b2_ref[0]

  t_ref[...] = t

  @pl.when(layer == pl.num_programs(1) - 1)
  def _():
    o_ref[...] = t.reshape(B, L, E).astype(o_ref.dtype)


# ---------------------------------------------------------------------------
# Wrapper: one pallas_call for the whole decoder stack
# ---------------------------------------------------------------------------
def _pick_batch_tile(n):
  """Largest divisor of n giving >= 2 parallel batch blocks (v7x: 2 TCs)."""
  if n <= 1:
    return 1
  for bt in range(n // 2, 0, -1):
    if n % bt == 0:
      return bt
  return 1


def transformer_decoder_forward(tgt, memory, pos, query_pos, packed, nhead,
                                batch_tile=None):
  """tgt: (L, N, E); memory: (Lm, N, E); pos/query_pos same layouts or None."""
  L, N, E = tgt.shape
  Lm = memory.shape[0]
  num_layers = packed["w_sa_qk"].shape[0]
  has_pos = pos is not None
  has_qpos = query_pos is not None
  bt = batch_tile if batch_tile is not None else _pick_batch_tile(N)
  assert N % bt == 0, (N, bt)

  bf16 = jnp.bfloat16
  x_map = lambda b, l: (b, 0, 0)      # activation blocks: indexed by batch block
  w_map = lambda b, l: (l, 0, 0)      # weight blocks: indexed by layer

  # Batch-first slabs; memory(+pos) computed / cast to bf16 exactly once here.
  tgt_b = jnp.transpose(tgt, (1, 0, 2))
  mem_b = jnp.transpose(memory, (1, 0, 2)).astype(bf16)
  args = [tgt_b, mem_b]
  in_specs = [pl.BlockSpec((bt, L, E), x_map),
              pl.BlockSpec((bt, Lm, E), x_map)]
  if has_pos:
    args.append(jnp.transpose(memory + pos, (1, 0, 2)).astype(bf16))
    in_specs.append(pl.BlockSpec((bt, Lm, E), x_map))
  if has_qpos:
    args.append(jnp.transpose(query_pos, (1, 0, 2)))
    in_specs.append(pl.BlockSpec((bt, L, E), x_map))

  w_keys = ("w_sa_qk", "w_sa_v", "w_sa_out",
            "w_ca_q", "w_ca_k", "w_ca_v", "w_ca_out",
            "w1", "b1", "w2", "b2", "ln_g", "ln_b")
  for key in w_keys:
    w = packed[key]
    args.append(w)
    in_specs.append(pl.BlockSpec((1,) + w.shape[1:], w_map))

  cp_kwargs = dict(dimension_semantics=("parallel", "arbitrary"))
  try:  # scale scoped VMEM to the chip (64 MiB physical on v7x, 128 on v5e/v6e)
    cap = pltpu.get_tpu_info().vmem_capacity_bytes
    cp_kwargs["vmem_limit_bytes"] = int(min(cap * 7 // 8, 112 * 1024 * 1024))
  except Exception:
    pass

  out_b = pl.pallas_call(
      functools.partial(_decoder_stack_kernel, nhead=nhead, eps=1e-5,
                        has_pos=has_pos, has_qpos=has_qpos),
      out_shape=jax.ShapeDtypeStruct((N, L, E), tgt.dtype),
      grid=(N // bt, num_layers),
      in_specs=in_specs,
      out_specs=pl.BlockSpec((bt, L, E), x_map),
      scratch_shapes=[pltpu.VMEM((bt * L, E), jnp.float32),   # running state
                      pltpu.VMEM((bt * L, E), jnp.float32)],  # attn head staging
      compiler_params=pltpu.CompilerParams(**cp_kwargs),
  )(*args)
  return jnp.transpose(out_b, (1, 0, 2))


# ---------------------------------------------------------------------------
# Parameters (PyTorch layouts as masters) + packing for the fused kernel
# ---------------------------------------------------------------------------
def init_layer_params(key, E, Dff):
  """Per-layer parameters in PyTorch layouts (f32 masters)."""
  ks = jax.random.split(key, 6)
  w = lambda k, shape: 0.05 * jax.random.normal(k, shape, jnp.float32)
  return {
      "sa_in_proj": w(ks[0], (3 * E, E)),      # nn.MultiheadAttention(bias=False)
      "sa_out_proj": w(ks[1], (E, E)),
      "ca_in_proj": w(ks[2], (3 * E, E)),
      "ca_out_proj": w(ks[3], (E, E)),
      "linear1_w": w(ks[4], (Dff, E)), "linear1_b": jnp.zeros((Dff,), jnp.float32),
      "linear2_w": w(ks[5], (E, Dff)), "linear2_b": jnp.zeros((E,), jnp.float32),
      "norm_g": jnp.ones((3, E), jnp.float32),   # norm1/2/3 gamma
      "norm_b": jnp.zeros((3, E), jnp.float32),  # norm1/2/3 beta
  }


def pack_decoder_params(layer_params, nhead):
  """Stack over layers, split Q/K/V, pre-transpose to (Din, Dout), fold the
  1/sqrt(head_dim) attention scale into Wq, cast matmul weights to bf16."""
  bf16 = jnp.bfloat16
  E = layer_params[0]["sa_out_proj"].shape[0]
  dh = E // nhead
  scale = 1.0 / math.sqrt(dh)

  def qkv(w_in):                       # torch in_proj layout: (3E, E)
    return w_in[:E] * scale, w_in[E:2 * E], w_in[2 * E:]

  def stk(fn, dtype=None):
    a = jnp.stack([fn(p) for p in layer_params], axis=0)
    return a if dtype is None else a.astype(dtype)

  return {
      "w_sa_qk": stk(lambda p: jnp.concatenate(
          [qkv(p["sa_in_proj"])[0].T, qkv(p["sa_in_proj"])[1].T], axis=1), bf16),
      "w_sa_v": stk(lambda p: qkv(p["sa_in_proj"])[2].T, bf16),
      "w_sa_out": stk(lambda p: p["sa_out_proj"].T, bf16),
      "w_ca_q": stk(lambda p: qkv(p["ca_in_proj"])[0].T, bf16),
      "w_ca_k": stk(lambda p: qkv(p["ca_in_proj"])[1].T, bf16),
      "w_ca_v": stk(lambda p: qkv(p["ca_in_proj"])[2].T, bf16),
      "w_ca_out": stk(lambda p: p["ca_out_proj"].T, bf16),
      "w1": stk(lambda p: p["linear1_w"].T, bf16),            # (NL, E, Dff)
      "b1": stk(lambda p: p["linear1_b"].reshape(1, -1)),     # (NL, 1, Dff) f32
      "w2": stk(lambda p: p["linear2_w"].T, bf16),            # (NL, Dff, E)
      "b2": stk(lambda p: p["linear2_b"].reshape(1, -1)),     # (NL, 1, E)  f32
      "ln_g": stk(lambda p: p["norm_g"]),                     # (NL, 3, E)  f32
      "ln_b": stk(lambda p: p["norm_b"]),
  }


# ---------------------------------------------------------------------------
# Pure-JAX reference (f32) matching the PyTorch spec, for self-validation
# ---------------------------------------------------------------------------
def reference_decoder(tgt, memory, pos, query_pos, layer_params, nhead):
  eps = 1e-5

  def layer_norm(x, g, b):
    mu = jnp.mean(x, axis=-1, keepdims=True)
    var = jnp.mean((x - mu) ** 2, axis=-1, keepdims=True)
    return (x - mu) / jnp.sqrt(var + eps) * g + b

  def mha(q_in, k_in, v_in, w_in, w_out):
    L, N, E = q_in.shape
    S = k_in.shape[0]
    dh = E // nhead
    wq, wk, wv = w_in[:E], w_in[E:2 * E], w_in[2 * E:]
    q = (q_in @ wq.T).reshape(L, N * nhead, dh).transpose(1, 0, 2)
    k = (k_in @ wk.T).reshape(S, N * nhead, dh).transpose(1, 0, 2)
    v = (v_in @ wv.T).reshape(S, N * nhead, dh).transpose(1, 0, 2)
    s = jnp.einsum("bld,bsd->bls", q, k) / math.sqrt(dh)
    p = jax.nn.softmax(s, axis=-1)
    o = jnp.einsum("bls,bsd->bld", p, v).transpose(1, 0, 2).reshape(L, N, E)
    return o @ w_out.T

  kp = memory if pos is None else memory + pos
  out = tgt
  for p_l in layer_params:
    g, b = p_l["norm_g"], p_l["norm_b"]
    t2 = layer_norm(out, g[0], b[0])
    qk = t2 if query_pos is None else t2 + query_pos
    out = out + mha(qk, qk, t2, p_l["sa_in_proj"], p_l["sa_out_proj"])
    t2 = layer_norm(out, g[1], b[1])
    qc = t2 if query_pos is None else t2 + query_pos
    out = out + mha(qc, kp, memory, p_l["ca_in_proj"], p_l["ca_out_proj"])
    t2 = layer_norm(out, g[2], b[2])
    h = jax.nn.relu(t2 @ p_l["linear1_w"].T + p_l["linear1_b"])
    out = out + (h @ p_l["linear2_w"].T + p_l["linear2_b"])
  return out


if __name__ == "__main__":
  # d_model=32, nhead=4, dim_feedforward=64, 2 decoder layers,
  # tgt seq=8, memory seq=16, batch=2 (small shapes consistent with the module).
  E, H, Dff, num_layers = 32, 4, 64, 2
  L_tgt, L_mem, N = 8, 16, 2

  root = jax.random.PRNGKey(0)
  k_tgt, k_mem, k_pos, k_qpos, k_par = jax.random.split(root, 5)

  tgt = jax.random.normal(k_tgt, (L_tgt, N, E), jnp.float32)
  memory = jax.random.normal(k_mem, (L_mem, N, E), jnp.float32)
  pos = jax.random.normal(k_pos, (L_mem, N, E), jnp.float32)
  query_pos = jax.random.normal(k_qpos, (L_tgt, N, E), jnp.float32)

  layer_params = [init_layer_params(jax.random.fold_in(k_par, i), E, Dff)
                  for i in range(num_layers)]
  packed = pack_decoder_params(layer_params, H)

  fwd = jax.jit(functools.partial(transformer_decoder_forward, nhead=H))

  # Two configs: (pos, query_pos) and the WaveletTransformerPyramid default
  # decoder path (pos=None, query_pos from sr_scale embedding).
  for name, p_arg, qp_arg in (("pos+query_pos", pos, query_pos),
                              ("query_pos only", None, query_pos)):
    out = jax.block_until_ready(fwd(tgt, memory, p_arg, qp_arg, packed))
    assert out.shape == (L_tgt, N, E), (name, out.shape)
    assert bool(jnp.all(jnp.isfinite(out))), name

    ref = reference_decoder(tgt, memory, p_arg, qp_arg, layer_params, H)
    max_err = float(jnp.max(jnp.abs(out - ref)))
    # Tighter than before (bf16 MXU contractions, exact-reciprocal softmax).
    assert max_err < 5e-2, (name, max_err)

  print("KERNEL_OK")
</pallas_src>

<mosaic_0001>
module attributes {stable_mosaic.version = 11 : i64} {
  func.func @_decoder_stack_kernel(%arg0: i32, %arg1: i32, %arg2: memref<1x8x32xf32, #tpu.memory_space<vmem>>, %arg3: memref<1x16x32xbf16, #tpu.memory_space<vmem>>, %arg4: memref<1x16x32xbf16, #tpu.memory_space<vmem>>, %arg5: memref<1x8x32xf32, #tpu.memory_space<vmem>>, %arg6: memref<1x32x64xbf16, #tpu.memory_space<vmem>>, %arg7: memref<1x32x32xbf16, #tpu.memory_space<vmem>>, %arg8: memref<1x32x32xbf16, #tpu.memory_space<vmem>>, %arg9: memref<1x32x32xbf16, #tpu.memory_space<vmem>>, %arg10: memref<1x32x32xbf16, #tpu.memory_space<vmem>>, %arg11: memref<1x32x32xbf16, #tpu.memory_space<vmem>>, %arg12: memref<1x32x32xbf16, #tpu.memory_space<vmem>>, %arg13: memref<1x32x64xbf16, #tpu.memory_space<vmem>>, %arg14: memref<1x1x64xf32, #tpu.memory_space<vmem>>, %arg15: memref<1x64x32xbf16, #tpu.memory_space<vmem>>, %arg16: memref<1x1x32xf32, #tpu.memory_space<vmem>>, %arg17: memref<1x3x32xf32, #tpu.memory_space<vmem>>, %arg18: memref<1x3x32xf32, #tpu.memory_space<vmem>>, %arg19: memref<1x8x32xf32, #tpu.memory_space<vmem>>, %arg20: memref<8x32xf32, #tpu.memory_space<vmem>>, %arg21: memref<8x32xf32, #tpu.memory_space<vmem>>) attributes {dimension_semantics = [#tpu.dimension_semantics<parallel>, #tpu.dimension_semantics<arbitrary>], iteration_bounds = array<i64: 2, 2>, scalar_prefetch = 0 : i64, scratch_operands = 2 : i64, tpu.core_type = #tpu.core_type<tc>, window_params = [{transform_indices = @transform_0, window_bounds = array<i64: 1, 8, 32>}, {transform_indices = @transform_1, window_bounds = array<i64: 1, 16, 32>}, {transform_indices = @transform_2, window_bounds = array<i64: 1, 16, 32>}, {transform_indices = @transform_3, window_bounds = array<i64: 1, 8, 32>}, {transform_indices = @transform_4, window_bounds = array<i64: 1, 32, 64>}, {transform_indices = @transform_5, window_bounds = array<i64: 1, 32, 32>}, {transform_indices = @transform_6, window_bounds = array<i64: 1, 32, 32>}, {transform_indices = @transform_7, window_bounds = array<i64: 1, 32, 32>}, {transform_indices = @transform_8, window_bounds = array<i64: 1, 32, 32>}, {transform_indices = @transform_9, window_bounds = array<i64: 1, 32, 32>}, {transform_indices = @transform_10, window_bounds = array<i64: 1, 32, 32>}, {transform_indices = @transform_11, window_bounds = array<i64: 1, 32, 64>}, {transform_indices = @transform_12, window_bounds = array<i64: 1, 1, 64>}, {transform_indices = @transform_13, window_bounds = array<i64: 1, 64, 32>}, {transform_indices = @transform_14, window_bounds = array<i64: 1, 1, 32>}, {transform_indices = @transform_15, window_bounds = array<i64: 1, 3, 32>}, {transform_indices = @transform_16, window_bounds = array<i64: 1, 3, 32>}, {transform_indices = @transform_17, window_bounds = array<i64: 1, 8, 32>}]} {
    %c0_i32 = arith.constant 0 : i32
    %0 = arith.cmpi eq, %arg1, %c0_i32 : i32
    %1 = arith.extui %0 : i1 to i32
    %c0_i32_0 = arith.constant 0 : i32
    %2 = arith.cmpi ne, %1, %c0_i32_0 : i32
    scf.if %2 {
      %c0_126 = arith.constant 0 : index
      %c0_127 = arith.constant 0 : index
      %c0_128 = arith.constant 0 : index
      %284 = vector.load %arg2[%c0_126, %c0_127, %c0_128] : memref<1x8x32xf32, #tpu.memory_space<vmem>>, vector<1x8x32xf32>
      %285 = vector.shape_cast %284 : vector<1x8x32xf32> to vector<8x32xf32>
      %c0_129 = arith.constant 0 : index
      %c0_130 = arith.constant 0 : index
      %286 = vector.load %arg20[%c0_129, %c0_130] : memref<8x32xf32, #tpu.memory_space<vmem>>, vector<8x32xf32>
      tpu.vector_store %arg20[%c0_129, %c0_130], %285 {strides = array<i32>} : memref<8x32xf32, #tpu.memory_space<vmem>>, vector<8x32xf32>,
    } else {
    }
    %c0 = arith.constant 0 : index
    %c0_1 = arith.constant 0 : index
    %3 = vector.load %arg20[%c0, %c0_1] : memref<8x32xf32, #tpu.memory_space<vmem>>, vector<8x32xf32>
    %c0_2 = arith.constant 0 : index
    %c0_3 = arith.constant 0 : index
    %c0_4 = arith.constant 0 : index
    %4 = vector.load %arg5[%c0_2, %c0_3, %c0_4] : memref<1x8x32xf32, #tpu.memory_space<vmem>>, vector<1x8x32xf32>
    %5 = vector.shape_cast %4 : vector<1x8x32xf32> to vector<8x32xf32>
    %c0_5 = arith.constant 0 : index
    %c0_6 = arith.constant 0 : index
    %c0_7 = arith.constant 0 : index
    %6 = vector.load %arg3[%c0_5, %c0_6, %c0_7] : memref<1x16x32xbf16, #tpu.memory_space<vmem>>, vector<1x16x32xbf16>
    %7 = vector.shape_cast %6 : vector<1x16x32xbf16> to vector<16x32xbf16>
    %c0_8 = arith.constant 0 : index
    %c0_9 = arith.constant 0 : index
    %c0_10 = arith.constant 0 : index
    %8 = vector.load %arg4[%c0_8, %c0_9, %c0_10] : memref<1x16x32xbf16, #tpu.memory_space<vmem>>, vector<1x16x32xbf16>
    %9 = vector.shape_cast %8 : vector<1x16x32xbf16> to vector<16x32xbf16>
    %c0_11 = arith.constant 0 : index
    %c0_12 = arith.constant 0 : index
    %c0_13 = arith.constant 0 : index
    %10 = vector.load %arg17[%c0_11, %c0_12, %c0_13] : memref<1x3x32xf32, #tpu.memory_space<vmem>>, vector<1x3x32xf32>
    %11 = vector.shape_cast %10 : vector<1x3x32xf32> to vector<3x32xf32>
    %c0_14 = arith.constant 0 : index
    %c0_15 = arith.constant 0 : index
    %c0_16 = arith.constant 0 : index
    %12 = vector.load %arg18[%c0_14, %c0_15, %c0_16] : memref<1x3x32xf32, #tpu.memory_space<vmem>>, vector<1x3x32xf32>
    %13 = vector.shape_cast %12 : vector<1x3x32xf32> to vector<3x32xf32>
    %cst = arith.constant dense<0.000000e+00> : vector<8xf32>
    %14 = vector.multi_reduction <add>, %3, %cst [1] : vector<8x32xf32> to vector<8xf32>
    %15 = vector.shape_cast %14 : vector<8xf32> to vector<8x1xf32>
    %cst_17 = arith.constant 3.200000e+01 : f32
    %16 = vector.broadcast %cst_17 : f32 to vector<8x1xf32>
    %17 = arith.divf %15, %16 : vector<8x1xf32>
    %18 = vector.broadcast %17 : vector<8x1xf32> to vector<8x32xf32>
    %19 = arith.subf %3, %18 : vector<8x32xf32>
    %20 = arith.mulf %19, %19 : vector<8x32xf32>
    %cst_18 = arith.constant dense<0.000000e+00> : vector<8xf32>
    %21 = vector.multi_reduction <add>, %20, %cst_18 [1] : vector<8x32xf32> to vector<8xf32>
    %22 = vector.shape_cast %21 : vector<8xf32> to vector<8x1xf32>
    %cst_19 = arith.constant 3.200000e+01 : f32
    %23 = vector.broadcast %cst_19 : f32 to vector<8x1xf32>
    %24 = arith.divf %22, %23 : vector<8x1xf32>
    %25 = vector.broadcast %17 : vector<8x1xf32> to vector<8x32xf32>
    %26 = arith.subf %3, %25 : vector<8x32xf32>
    %cst_20 = arith.constant 9.99999974E-6 : f32
    %27 = vector.broadcast %cst_20 : f32 to vector<8x1xf32>
    %28 = arith.addf %24, %27 : vector<8x1xf32>
    %29 = math.rsqrt %28 : vector<8x1xf32>
    %30 = vector.broadcast %29 : vector<8x1xf32> to vector<8x32xf32>
    %31 = arith.mulf %26, %30 : vector<8x32xf32>
    %32 = vector.extract_strided_slice %11 {offsets = [0, 0], sizes = [1, 32], strides = [1, 1]} : vector<3x32xf32> to vector<1x32xf32>
    %33 = vector.broadcast %32 : vector<1x32xf32> to vector<8x32xf32>
    %34 = arith.mulf %31, %33 : vector<8x32xf32>
    %35 = vector.extract_strided_slice %13 {offsets = [0, 0], sizes = [1, 32], strides = [1, 1]} : vector<3x32xf32> to vector<1x32xf32>
    %36 = vector.broadcast %35 : vector<1x32xf32> to vector<8x32xf32>
    %37 = arith.addf %34, %36 : vector<8x32xf32>
    %38 = arith.truncf %37 : vector<8x32xf32> to vector<8x32xbf16>
    %39 = arith.addf %37, %5 : vector<8x32xf32>
    %40 = arith.truncf %39 : vector<8x32xf32> to vector<8x32xbf16>
    %c0_21 = arith.constant 0 : index
    %c0_22 = arith.constant 0 : index
    %c0_23 = arith.constant 0 : index
    %41 = vector.load %arg6[%c0_21, %c0_22, %c0_23] : memref<1x32x64xbf16, #tpu.memory_space<vmem>>, vector<1x32x64xbf16>
    %42 = vector.shape_cast %41 : vector<1x32x64xbf16> to vector<32x64xbf16>
    %cst_24 = arith.constant dense<0.000000e+00> : vector<8x64xf32>
    %43 = tpu.matmul %40, %42, %cst_24 {dimension_numbers = #tpu.dot_dimension_numbers<[1], [0], [0], [1], [0, 0, 1, 1], [], []>} : vector<8x32xbf16>, vector<32x64xbf16>, vector<8x64xf32> -> vector<8x64xf32>
    %44 = arith.truncf %43 : vector<8x64xf32> to vector<8x64xbf16>
    %c0_25 = arith.constant 0 : index
    %c0_26 = arith.constant 0 : index
    %c0_27 = arith.constant 0 : index
    %45 = vector.load %arg7[%c0_25, %c0_26, %c0_27] : memref<1x32x32xbf16, #tpu.memory_space<vmem>>, vector<1x32x32xbf16>
    %46 = vector.shape_cast %45 : vector<1x32x32xbf16> to vector<32x32xbf16>
    %cst_28 = arith.constant dense<0.000000e+00> : vector<8x32xf32>
    %47 = tpu.matmul %38, %46, %cst_28 {dimension_numbers = #tpu.dot_dimension_numbers<[1], [0], [0], [1], [0, 0, 1, 1], [], []>} : vector<8x32xbf16>, vector<32x32xbf16>, vector<8x32xf32> -> vector<8x32xf32>
    %48 = arith.truncf %47 : vector<8x32xf32> to vector<8x32xbf16>
    %49 = vector.extract_strided_slice %44 {offsets = [0, 0], sizes = [8, 32], strides = [1, 1]} : vector<8x64xbf16> to vector<8x32xbf16>
    %50 = vector.extract_strided_slice %44 {offsets = [0, 32], sizes = [8, 32], strides = [1, 1]} : vector<8x64xbf16> to vector<8x32xbf16>
    %c0_29 = arith.constant 0 : index
    %c0_30 = arith.constant 0 : index
    %c0_31 = arith.constant 0 : index
    %51 = vector.load %arg8[%c0_29, %c0_30, %c0_31] : memref<1x32x32xbf16, #tpu.memory_space<vmem>>, vector<1x32x32xbf16>
    %52 = vector.shape_cast %51 : vector<1x32x32xbf16> to vector<32x32xbf16>
    %53 = vector.extract_strided_slice %49 {offsets = [0, 0], sizes = [8, 8], strides = [1, 1]} : vector<8x32xbf16> to vector<8x8xbf16>
    %54 = vector.extract_strided_slice %50 {offsets = [0, 0], sizes = [8, 8], strides = [1, 1]} : vector<8x32xbf16> to vector<8x8xbf16>
    %cst_32 = arith.constant dense<0.000000e+00> : vector<8x8xf32>
    %55 = tpu.matmul %53, %54, %cst_32 {dimension_numbers = #tpu.dot_dimension_numbers<[1], [1], [0], [0], [0, 0, 1, 0], [], []>} : vector<8x8xbf16>, vector<8x8xbf16>, vector<8x8xf32> -> vector<8x8xf32>
    %cst_33 = arith.constant dense<0xFF800000> : vector<8xf32>
    %56 = vector.multi_reduction <maximumf>, %55, %cst_33 [1] : vector<8x8xf32> to vector<8xf32>
    %57 = vector.shape_cast %56 : vector<8xf32> to vector<8x1xf32>
    %58 = vector.broadcast %57 : vector<8x1xf32> to vector<8x8xf32>
    %59 = arith.subf %55, %58 : vector<8x8xf32>
    %60 = math.exp %59 : vector<8x8xf32>
    %cst_34 = arith.constant dense<0.000000e+00> : vector<8xf32>
    %61 = vector.multi_reduction <add>, %60, %cst_34 [1] : vector<8x8xf32> to vector<8xf32>
    %62 = vector.shape_cast %61 : vector<8xf32> to vector<8x1xf32>
    %63 = tpu.reciprocal %62 : vector<8x1xf32> -> vector<8x1xf32>
    %64 = vector.broadcast %63 : vector<8x1xf32> to vector<8x8xf32>
    %65 = arith.mulf %60, %64 : vector<8x8xf32>
    %66 = arith.truncf %65 : vector<8x8xf32> to vector<8x8xbf16>
    %67 = vector.extract_strided_slice %48 {offsets = [0, 0], sizes = [8, 8], strides = [1, 1]} : vector<8x32xbf16> to vector<8x8xbf16>
    %cst_35 = arith.constant dense<0.000000e+00> : vector<8x8xf32>
    %68 = tpu.matmul %66, %67, %cst_35 {dimension_numbers = #tpu.dot_dimension_numbers<[1], [0], [0], [1], [0, 0, 1, 1], [], []>} : vector<8x8xbf16>, vector<8x8xbf16>, vector<8x8xf32> -> vector<8x8xf32>
    %c0_36 = arith.constant 0 : index
    %c0_37 = arith.constant 0 : index
    %69 = vector.load %arg21[%c0_36, %c0_37] : memref<8x32xf32, #tpu.memory_space<vmem>>, vector<8x8xf32>
    tpu.vector_store %arg21[%c0_36, %c0_37], %68 {strides = array<i32>} : memref<8x32xf32, #tpu.memory_space<vmem>>, vector<8x8xf32>,
    %70 = vector.extract_strided_slice %49 {offsets = [0, 8], sizes = [8, 8], strides = [1, 1]} : vector<8x32xbf16> to vector<8x8xbf16>
    %71 = vector.extract_strided_slice %50 {offsets = [0, 8], sizes = [8, 8], strides = [1, 1]} : vector<8x32xbf16> to vector<8x8xbf16>
    %cst_38 = arith.constant dense<0.000000e+00> : vector<8x8xf32>
    %72 = tpu.matmul %70, %71, %cst_38 {dimension_numbers = #tpu.dot_dimension_numbers<[1], [1], [0], [0], [0, 0, 1, 0], [], []>} : vector<8x8xbf16>, vector<8x8xbf16>, vector<8x8xf32> -> vector<8x8xf32>
    %cst_39 = arith.constant dense<0xFF800000> : vector<8xf32>
    %73 = vector.multi_reduction <maximumf>, %72, %cst_39 [1] : vector<8x8xf32> to vector<8xf32>
    %74 = vector.shape_cast %73 : vector<8xf32> to vector<8x1xf32>
    %75 = vector.broadcast %74 : vector<8x1xf32> to vector<8x8xf32>
    %76 = arith.subf %72, %75 : vector<8x8xf32>
    %77 = math.exp %76 : vector<8x8xf32>
    %cst_40 = arith.constant dense<0.000000e+00> : vector<8xf32>
    %78 = vector.multi_reduction <add>, %77, %cst_40 [1] : vector<8x8xf32> to vector<8xf32>
    %79 = vector.shape_cast %78 : vector<8xf32> to vector<8x1xf32>
    %80 = tpu.reciprocal %79 : vector<8x1xf32> -> vector<8x1xf32>
    %81 = vector.broadcast %80 : vector<8x1xf32> to vector<8x8xf32>
    %82 = arith.mulf %77, %81 : vector<8x8xf32>
    %83 = arith.truncf %82 : vector<8x8xf32> to vector<8x8xbf16>
    %84 = vector.extract_strided_slice %48 {offsets = [0, 8], sizes = [8, 8], strides = [1, 1]} : vector<8x32xbf16> to vector<8x8xbf16>
    %cst_41 = arith.constant dense<0.000000e+00> : vector<8x8xf32>
    %85 = tpu.matmul %83, %84, %cst_41 {dimension_numbers = #tpu.dot_dimension_numbers<[1], [0], [0], [1], [0, 0, 1, 1], [], []>} : vector<8x8xbf16>, vector<8x8xbf16>, vector<8x8xf32> -> vector<8x8xf32>
    %c0_42 = arith.constant 0 : index
    %c8 = arith.constant 8 : index
    %86 = vector.load %arg21[%c0_42, %c8] : memref<8x32xf32, #tpu.memory_space<vmem>>, vector<8x8xf32>
    tpu.vector_store %arg21[%c0_42, %c8], %85 {strides = array<i32>} : memref<8x32xf32, #tpu.memory_space<vmem>>, vector<8x8xf32>,
    %87 = vector.extract_strided_slice %49 {offsets = [0, 16], sizes = [8, 8], strides = [1, 1]} : vector<8x32xbf16> to vector<8x8xbf16>
    %88 = vector.extract_strided_slice %50 {offsets = [0, 16], sizes = [8, 8], strides = [1, 1]} : vector<8x32xbf16> to vector<8x8xbf16>
    %cst_43 = arith.constant dense<0.000000e+00> : vector<8x8xf32>
    %89 = tpu.matmul %87, %88, %cst_43 {dimension_numbers = #tpu.dot_dimension_numbers<[1], [1], [0], [0], [0, 0, 1, 0], [], []>} : vector<8x8xbf16>, vector<8x8xbf16>, vector<8x8xf32> -> vector<8x8xf32>
    %cst_44 = arith.constant dense<0xFF800000> : vector<8xf32>
    %90 = vector.multi_reduction <maximumf>, %89, %cst_44 [1] : vector<8x8xf32> to vector<8xf32>
    %91 = vector.shape_cast %90 : vector<8xf32> to vector<8x1xf32>
    %92 = vector.broadcast %91 : vector<8x1xf32> to vector<8x8xf32>
    %93 = arith.subf %89, %92 : vector<8x8xf32>
    %94 = math.exp %93 : vector<8x8xf32>
    %cst_45 = arith.constant dense<0.000000e+00> : vector<8xf32>
    %95 = vector.multi_reduction <add>, %94, %cst_45 [1] : vector<8x8xf32> to vector<8xf32>
    %96 = vector.shape_cast %95 : vector<8xf32> to vector<8x1xf32>
    %97 = tpu.reciprocal %96 : vector<8x1xf32> -> vector<8x1xf32>
    %98 = vector.broadcast %97 : vector<8x1xf32> to vector<8x8xf32>
    %99 = arith.mulf %94, %98 : vector<8x8xf32>
    %100 = arith.truncf %99 : vector<8x8xf32> to vector<8x8xbf16>
    %101 = vector.extract_strided_slice %48 {offsets = [0, 16], sizes = [8, 8], strides = [1, 1]} : vector<8x32xbf16> to vector<8x8xbf16>
    %cst_46 = arith.constant dense<0.000000e+00> : vector<8x8xf32>
    %102 = tpu.matmul %100, %101, %cst_46 {dimension_numbers = #tpu.dot_dimension_numbers<[1], [0], [0], [1], [0, 0, 1, 1], [], []>} : vector<8x8xbf16>, vector<8x8xbf16>, vector<8x8xf32> -> vector<8x8xf32>
    %c0_47 = arith.constant 0 : index
    %c16 = arith.constant 16 : index
    %103 = vector.load %arg21[%c0_47, %c16] : memref<8x32xf32, #tpu.memory_space<vmem>>, vector<8x8xf32>
    tpu.vector_store %arg21[%c0_47, %c16], %102 {strides = array<i32>} : memref<8x32xf32, #tpu.memory_space<vmem>>, vector<8x8xf32>,
    %104 = vector.extract_strided_slice %49 {offsets = [0, 24], sizes = [8, 8], strides = [1, 1]} : vector<8x32xbf16> to vector<8x8xbf16>
    %105 = vector.extract_strided_slice %50 {offsets = [0, 24], sizes = [8, 8], strides = [1, 1]} : vector<8x32xbf16> to vector<8x8xbf16>
    %cst_48 = arith.constant dense<0.000000e+00> : vector<8x8xf32>
    %106 = tpu.matmul %104, %105, %cst_48 {dimension_numbers = #tpu.dot_dimension_numbers<[1], [1], [0], [0], [0, 0, 1, 0], [], []>} : vector<8x8xbf16>, vector<8x8xbf16>, vector<8x8xf32> -> vector<8x8xf32>
    %cst_49 = arith.constant dense<0xFF800000> : vector<8xf32>
    %107 = vector.multi_reduction <maximumf>, %106, %cst_49 [1] : vector<8x8xf32> to vector<8xf32>
    %108 = vector.shape_cast %107 : vector<8xf32> to vector<8x1xf32>
    %109 = vector.broadcast %108 : vector<8x1xf32> to vector<8x8xf32>
    %110 = arith.subf %106, %109 : vector<8x8xf32>
    %111 = math.exp %110 : vector<8x8xf32>
    %cst_50 = arith.constant dense<0.000000e+00> : vector<8xf32>
    %112 = vector.multi_reduction <add>, %111, %cst_50 [1] : vector<8x8xf32> to vector<8xf32>
    %113 = vector.shape_cast %112 : vector<8xf32> to vector<8x1xf32>
    %114 = tpu.reciprocal %113 : vector<8x1xf32> -> vector<8x1xf32>
    %115 = vector.broadcast %114 : vector<8x1xf32> to vector<8x8xf32>
    %116 = arith.mulf %111, %115 : vector<8x8xf32>
    %117 = arith.truncf %116 : vector<8x8xf32> to vector<8x8xbf16>
    %118 = vector.extract_strided_slice %48 {offsets = [0, 24], sizes = [8, 8], strides = [1, 1]} : vector<8x32xbf16> to vector<8x8xbf16>
    %cst_51 = arith.constant dense<0.000000e+00> : vector<8x8xf32>
    %119 = tpu.matmul %117, %118, %cst_51 {dimension_numbers = #tpu.dot_dimension_numbers<[1], [0], [0], [1], [0, 0, 1, 1], [], []>} : vector<8x8xbf16>, vector<8x8xbf16>, vector<8x8xf32> -> vector<8x8xf32>
    %c0_52 = arith.constant 0 : index
    %c24 = arith.constant 24 : index
    %120 = vector.load %arg21[%c0_52, %c24] : memref<8x32xf32, #tpu.memory_space<vmem>>, vector<8x8xf32>
    tpu.vector_store %arg21[%c0_52, %c24], %119 {strides = array<i32>} : memref<8x32xf32, #tpu.memory_space<vmem>>, vector<8x8xf32>,
    %c0_53 = arith.constant 0 : index
    %c0_54 = arith.constant 0 : index
    %121 = vector.load %arg21[%c0_53, %c0_54] : memref<8x32xf32, #tpu.memory_space<vmem>>, vector<8x32xf32>
    %122 = arith.truncf %121 : vector<8x32xf32> to vector<8x32xbf16>
    %cst_55 = arith.constant dense<0.000000e+00> : vector<8x32xf32>
    %123 = tpu.matmul %122, %52, %cst_55 {dimension_numbers = #tpu.dot_dimension_numbers<[1], [0], [0], [1], [0, 0, 1, 1], [], []>} : vector<8x32xbf16>, vector<32x32xbf16>, vector<8x32xf32> -> vector<8x32xf32>
    %124 = arith.addf %3, %123 : vector<8x32xf32>
    %cst_56 = arith.constant dense<0.000000e+00> : vector<8xf32>
    %125 = vector.multi_reduction <add>, %124, %cst_56 [1] : vector<8x32xf32> to vector<8xf32>
    %126 = vector.shape_cast %125 : vector<8xf32> to vector<8x1xf32>
    %cst_57 = arith.constant 3.200000e+01 : f32
    %127 = vector.broadcast %cst_57 : f32 to vector<8x1xf32>
    %128 = arith.divf %126, %127 : vector<8x1xf32>
    %129 = vector.broadcast %128 : vector<8x1xf32> to vector<8x32xf32>
    %130 = arith.subf %124, %129 : vector<8x32xf32>
    %131 = arith.mulf %130, %130 : vector<8x32xf32>
    %cst_58 = arith.constant dense<0.000000e+00> : vector<8xf32>
    %132 = vector.multi_reduction <add>, %131, %cst_58 [1] : vector<8x32xf32> to vector<8xf32>
    %133 = vector.shape_cast %132 : vector<8xf32> to vector<8x1xf32>
    %cst_59 = arith.constant 3.200000e+01 : f32
    %134 = vector.broadcast %cst_59 : f32 to vector<8x1xf32>
    %135 = arith.divf %133, %134 : vector<8x1xf32>
    %136 = vector.broadcast %128 : vector<8x1xf32> to vector<8x32xf32>
    %137 = arith.subf %124, %136 : vector<8x32xf32>
    %cst_60 = arith.constant 9.99999974E-6 : f32
    %138 = vector.broadcast %cst_60 : f32 to vector<8x1xf32>
    %139 = arith.addf %135, %138 : vector<8x1xf32>
    %140 = math.rsqrt %139 : vector<8x1xf32>
    %141 = vector.broadcast %140 : vector<8x1xf32> to vector<8x32xf32>
    %142 = arith.mulf %137, %141 : vector<8x32xf32>
    %143 = vector.extract_strided_slice %11 {offsets = [1, 0], sizes = [1, 32], strides = [1, 1]} : vector<3x32xf32> to vector<1x32xf32>
    %144 = vector.broadcast %143 : vector<1x32xf32> to vector<8x32xf32>
    %145 = arith.mulf %142, %144 : vector<8x32xf32>
    %146 = vector.extract_strided_slice %13 {offsets = [1, 0], sizes = [1, 32], strides = [1, 1]} : vector<3x32xf32> to vector<1x32xf32>
    %147 = vector.broadcast %146 : vector<1x32xf32> to vector<8x32xf32>
    %148 = arith.addf %145, %147 : vector<8x32xf32>
    %149 = arith.addf %148, %5 : vector<8x32xf32>
    %150 = arith.truncf %149 : vector<8x32xf32> to vector<8x32xbf16>
    %c0_61 = arith.constant 0 : index
    %c0_62 = arith.constant 0 : index
    %c0_63 = arith.constant 0 : index
    %151 = vector.load %arg9[%c0_61, %c0_62, %c0_63] : memref<1x32x32xbf16, #tpu.memory_space<vmem>>, vector<1x32x32xbf16>
    %152 = vector.shape_cast %151 : vector<1x32x32xbf16> to vector<32x32xbf16>
    %cst_64 = arith.constant dense<0.000000e+00> : vector<8x32xf32>
    %153 = tpu.matmul %150, %152, %cst_64 {dimension_numbers = #tpu.dot_dimension_numbers<[1], [0], [0], [1], [0, 0, 1, 1], [], []>} : vector<8x32xbf16>, vector<32x32xbf16>, vector<8x32xf32> -> vector<8x32xf32>
    %154 = arith.truncf %153 : vector<8x32xf32> to vector<8x32xbf16>
    %c0_65 = arith.constant 0 : index
    %c0_66 = arith.constant 0 : index
    %c0_67 = arith.constant 0 : index
    %155 = vector.load %arg10[%c0_65, %c0_66, %c0_67] : memref<1x32x32xbf16, #tpu.memory_space<vmem>>, vector<1x32x32xbf16>
    %156 = vector.shape_cast %155 : vector<1x32x32xbf16> to vector<32x32xbf16>
    %cst_68 = arith.constant dense<0.000000e+00> : vector<16x32xf32>
    %157 = tpu.matmul %9, %156, %cst_68 {dimension_numbers = #tpu.dot_dimension_numbers<[1], [0], [0], [1], [0, 0, 1, 1], [], []>} : vector<16x32xbf16>, vector<32x32xbf16>, vector<16x32xf32> -> vector<16x32xf32>
    %158 = arith.truncf %157 : vector<16x32xf32> to vector<16x32xbf16>
    %c0_69 = arith.constant 0 : index
    %c0_70 = arith.constant 0 : index
    %c0_71 = arith.constant 0 : index
    %159 = vector.load %arg11[%c0_69, %c0_70, %c0_71] : memref<1x32x32xbf16, #tpu.memory_space<vmem>>, vector<1x32x32xbf16>
    %160 = vector.shape_cast %159 : vector<1x32x32xbf16> to vector<32x32xbf16>
    %cst_72 = arith.constant dense<0.000000e+00> : vector<16x32xf32>
    %161 = tpu.matmul %7, %160, %cst_72 {dimension_numbers = #tpu.dot_dimension_numbers<[1], [0], [0], [1], [0, 0, 1, 1], [], []>} : vector<16x32xbf16>, vector<32x32xbf16>, vector<16x32xf32> -> vector<16x32xf32>
    %162 = arith.truncf %161 : vector<16x32xf32> to vector<16x32xbf16>
    %c0_73 = arith.constant 0 : index
    %c0_74 = arith.constant 0 : index
    %c0_75 = arith.constant 0 : index
    %163 = vector.load %arg12[%c0_73, %c0_74, %c0_75] : memref<1x32x32xbf16, #tpu.memory_space<vmem>>, vector<1x32x32xbf16>
    %164 = vector.shape_cast %163 : vector<1x32x32xbf16> to vector<32x32xbf16>
    %165 = vector.extract_strided_slice %154 {offsets = [0, 0], sizes = [8, 8], strides = [1, 1]} : vector<8x32xbf16> to vector<8x8xbf16>
    %166 = vector.extract_strided_slice %158 {offsets = [0, 0], sizes = [16, 8], strides = [1, 1]} : vector<16x32xbf16> to vector<16x8xbf16>
    %cst_76 = arith.constant dense<0.000000e+00> : vector<8x16xf32>
    %167 = tpu.matmul %165, %166, %cst_76 {dimension_numbers = #tpu.dot_dimension_numbers<[1], [1], [0], [0], [0, 0, 1, 0], [], []>} : vector<8x8xbf16>, vector<16x8xbf16>, vector<8x16xf32> -> vector<8x16xf32>
    %cst_77 = arith.constant dense<0xFF800000> : vector<8xf32>
    %168 = vector.multi_reduction <maximumf>, %167, %cst_77 [1] : vector<8x16xf32> to vector<8xf32>
    %169 = vector.shape_cast %168 : vector<8xf32> to vector<8x1xf32>
    %170 = vector.broadcast %169 : vector<8x1xf32> to vector<8x16xf32>
    %171 = arith.subf %167, %170 : vector<8x16xf32>
    %172 = math.exp %171 : vector<8x16xf32>
    %cst_78 = arith.constant dense<0.000000e+00> : vector<8xf32>
    %173 = vector.multi_reduction <add>, %172, %cst_78 [1] : vector<8x16xf32> to vector<8xf32>
    %174 = vector.shape_cast %173 : vector<8xf32> to vector<8x1xf32>
    %175 = tpu.reciprocal %174 : vector<8x1xf32> -> vector<8x1xf32>
    %176 = vector.broadcast %175 : vector<8x1xf32> to vector<8x16xf32>
    %177 = arith.mulf %172, %176 : vector<8x16xf32>
    %178 = arith.truncf %177 : vector<8x16xf32> to vector<8x16xbf16>
    %179 = vector.extract_strided_slice %162 {offsets = [0, 0], sizes = [16, 8], strides = [1, 1]} : vector<16x32xbf16> to vector<16x8xbf16>
    %cst_79 = arith.constant dense<0.000000e+00> : vector<8x8xf32>
    %180 = tpu.matmul %178, %179, %cst_79 {dimension_numbers = #tpu.dot_dimension_numbers<[1], [0], [0], [1], [0, 0, 1, 1], [], []>} : vector<8x16xbf16>, vector<16x8xbf16>, vector<8x8xf32> -> vector<8x8xf32>
    %c0_80 = arith.constant 0 : index
    %c0_81 = arith.constant 0 : index
    %181 = vector.load %arg21[%c0_80, %c0_81] : memref<8x32xf32, #tpu.memory_space<vmem>>, vector<8x8xf32>
    tpu.vector_store %arg21[%c0_80, %c0_81], %180 {strides = array<i32>} : memref<8x32xf32, #tpu.memory_space<vmem>>, vector<8x8xf32>,
    %182 = vector.extract_strided_slice %154 {offsets = [0, 8], sizes = [8, 8], strides = [1, 1]} : vector<8x32xbf16> to vector<8x8xbf16>
    %183 = vector.extract_strided_slice %158 {offsets = [0, 8], sizes = [16, 8], strides = [1, 1]} : vector<16x32xbf16> to vector<16x8xbf16>
    %cst_82 = arith.constant dense<0.000000e+00> : vector<8x16xf32>
    %184 = tpu.matmul %182, %183, %cst_82 {dimension_numbers = #tpu.dot_dimension_numbers<[1], [1], [0], [0], [0, 0, 1, 0], [], []>} : vector<8x8xbf16>, vector<16x8xbf16>, vector<8x16xf32> -> vector<8x16xf32>
    %cst_83 = arith.constant dense<0xFF800000> : vector<8xf32>
    %185 = vector.multi_reduction <maximumf>, %184, %cst_83 [1] : vector<8x16xf32> to vector<8xf32>
    %186 = vector.shape_cast %185 : vector<8xf32> to vector<8x1xf32>
    %187 = vector.broadcast %186 : vector<8x1xf32> to vector<8x16xf32>
    %188 = arith.subf %184, %187 : vector<8x16xf32>
    %189 = math.exp %188 : vector<8x16xf32>
    %cst_84 = arith.constant dense<0.000000e+00> : vector<8xf32>
    %190 = vector.multi_reduction <add>, %189, %cst_84 [1] : vector<8x16xf32> to vector<8xf32>
    %191 = vector.shape_cast %190 : vector<8xf32> to vector<8x1xf32>
    %192 = tpu.reciprocal %191 : vector<8x1xf32> -> vector<8x1xf32>
    %193 = vector.broadcast %192 : vector<8x1xf32> to vector<8x16xf32>
    %194 = arith.mulf %189, %193 : vector<8x16xf32>
    %195 = arith.truncf %194 : vector<8x16xf32> to vector<8x16xbf16>
    %196 = vector.extract_strided_slice %162 {offsets = [0, 8], sizes = [16, 8], strides = [1, 1]} : vector<16x32xbf16> to vector<16x8xbf16>
    %cst_85 = arith.constant dense<0.000000e+00> : vector<8x8xf32>
    %197 = tpu.matmul %195, %196, %cst_85 {dimension_numbers = #tpu.dot_dimension_numbers<[1], [0], [0], [1], [0, 0, 1, 1], [], []>} : vector<8x16xbf16>, vector<16x8xbf16>, vector<8x8xf32> -> vector<8x8xf32>
    %c0_86 = arith.constant 0 : index
    %c8_87 = arith.constant 8 : index
    %198 = vector.load %arg21[%c0_86, %c8_87] : memref<8x32xf32, #tpu.memory_space<vmem>>, vector<8x8xf32>
    tpu.vector_store %arg21[%c0_86, %c8_87], %197 {strides = array<i32>} : memref<8x32xf32, #tpu.memory_space<vmem>>, vector<8x8xf32>,
    %199 = vector.extract_strided_slice %154 {offsets = [0, 16], sizes = [8, 8], strides = [1, 1]} : vector<8x32xbf16> to vector<8x8xbf16>
    %200 = vector.extract_strided_slice %158 {offsets = [0, 16], sizes = [16, 8], strides = [1, 1]} : vector<16x32xbf16> to vector<16x8xbf16>
    %cst_88 = arith.constant dense<0.000000e+00> : vector<8x16xf32>
    %201 = tpu.matmul %199, %200, %cst_88 {dimension_numbers = #tpu.dot_dimension_numbers<[1], [1], [0], [0], [0, 0, 1, 0], [], []>} : vector<8x8xbf16>, vector<16x8xbf16>, vector<8x16xf32> -> vector<8x16xf32>
    %cst_89 = arith.constant dense<0xFF800000> : vector<8xf32>
    %202 = vector.multi_reduction <maximumf>, %201, %cst_89 [1] : vector<8x16xf32> to vector<8xf32>
    %203 = vector.shape_cast %202 : vector<8xf32> to vector<8x1xf32>
    %204 = vector.broadcast %203 : vector<8x1xf32> to vector<8x16xf32>
    %205 = arith.subf %201, %204 : vector<8x16xf32>
    %206 = math.exp %205 : vector<8x16xf32>
    %cst_90 = arith.constant dense<0.000000e+00> : vector<8xf32>
    %207 = vector.multi_reduction <add>, %206, %cst_90 [1] : vector<8x16xf32> to vector<8xf32>
    %208 = vector.shape_cast %207 : vector<8xf32> to vector<8x1xf32>
    %209 = tpu.reciprocal %208 : vector<8x1xf32> -> vector<8x1xf32>
    %210 = vector.broadcast %209 : vector<8x1xf32> to vector<8x16xf32>
    %211 = arith.mulf %206, %210 : vector<8x16xf32>
    %212 = arith.truncf %211 : vector<8x16xf32> to vector<8x16xbf16>
    %213 = vector.extract_strided_slice %162 {offsets = [0, 16], sizes = [16, 8], strides = [1, 1]} : vector<16x32xbf16> to vector<16x8xbf16>
    %cst_91 = arith.constant dense<0.000000e+00> : vector<8x8xf32>
    %214 = tpu.matmul %212, %213, %cst_91 {dimension_numbers = #tpu.dot_dimension_numbers<[1], [0], [0], [1], [0, 0, 1, 1], [], []>} : vector<8x16xbf16>, vector<16x8xbf16>, vector<8x8xf32> -> vector<8x8xf32>
    %c0_92 = arith.constant 0 : index
    %c16_93 = arith.constant 16 : index
    %215 = vector.load %arg21[%c0_92, %c16_93] : memref<8x32xf32, #tpu.memory_space<vmem>>, vector<8x8xf32>
    tpu.vector_store %arg21[%c0_92, %c16_93], %214 {strides = array<i32>} : memref<8x32xf32, #tpu.memory_space<vmem>>, vector<8x8xf32>,
    %216 = vector.extract_strided_slice %154 {offsets = [0, 24], sizes = [8, 8], strides = [1, 1]} : vector<8x32xbf16> to vector<8x8xbf16>
    %217 = vector.extract_strided_slice %158 {offsets = [0, 24], sizes = [16, 8], strides = [1, 1]} : vector<16x32xbf16> to vector<16x8xbf16>
    %cst_94 = arith.constant dense<0.000000e+00> : vector<8x16xf32>
    %218 = tpu.matmul %216, %217, %cst_94 {dimension_numbers = #tpu.dot_dimension_numbers<[1], [1], [0], [0], [0, 0, 1, 0], [], []>} : vector<8x8xbf16>, vector<16x8xbf16>, vector<8x16xf32> -> vector<8x16xf32>
    %cst_95 = arith.constant dense<0xFF800000> : vector<8xf32>
    %219 = vector.multi_reduction <maximumf>, %218, %cst_95 [1] : vector<8x16xf32> to vector<8xf32>
    %220 = vector.shape_cast %219 : vector<8xf32> to vector<8x1xf32>
    %221 = vector.broadcast %220 : vector<8x1xf32> to vector<8x16xf32>
    %222 = arith.subf %218, %221 : vector<8x16xf32>
    %223 = math.exp %222 : vector<8x16xf32>
    %cst_96 = arith.constant dense<0.000000e+00> : vector<8xf32>
    %224 = vector.multi_reduction <add>, %223, %cst_96 [1] : vector<8x16xf32> to vector<8xf32>
    %225 = vector.shape_cast %224 : vector<8xf32> to vector<8x1xf32>
    %226 = tpu.reciprocal %225 : vector<8x1xf32> -> vector<8x1xf32>
    %227 = vector.broadcast %226 : vector<8x1xf32> to vector<8x16xf32>
    %228 = arith.mulf %223, %227 : vector<8x16xf32>
    %229 = arith.truncf %228 : vector<8x16xf32> to vector<8x16xbf16>
    %230 = vector.extract_strided_slice %162 {offsets = [0, 24], sizes = [16, 8], strides = [1, 1]} : vector<16x32xbf16> to vector<16x8xbf16>
    %cst_97 = arith.constant dense<0.000000e+00> : vector<8x8xf32>
    %231 = tpu.matmul %229, %230, %cst_97 {dimension_numbers = #tpu.dot_dimension_numbers<[1], [0], [0], [1], [0, 0, 1, 1], [], []>} : vector<8x16xbf16>, vector<16x8xbf16>, vector<8x8xf32> -> vector<8x8xf32>
    %c0_98 = arith.constant 0 : index
    %c24_99 = arith.constant 24 : index
    %232 = vector.load %arg21[%c0_98, %c24_99] : memref<8x32xf32, #tpu.memory_space<vmem>>, vector<8x8xf32>
    tpu.vector_store %arg21[%c0_98, %c24_99], %231 {strides = array<i32>} : memref<8x32xf32, #tpu.memory_space<vmem>>, vector<8x8xf32>,
    %c0_100 = arith.constant 0 : index
    %c0_101 = arith.constant 0 : index
    %233 = vector.load %arg21[%c0_100, %c0_101] : memref<8x32xf32, #tpu.memory_space<vmem>>, vector<8x32xf32>
    %234 = arith.truncf %233 : vector<8x32xf32> to vector<8x32xbf16>
    %cst_102 = arith.constant dense<0.000000e+00> : vector<8x32xf32>
    %235 = tpu.matmul %234, %164, %cst_102 {dimension_numbers = #tpu.dot_dimension_numbers<[1], [0], [0], [1], [0, 0, 1, 1], [], []>} : vector<8x32xbf16>, vector<32x32xbf16>, vector<8x32xf32> -> vector<8x32xf32>
    %236 = arith.addf %124, %235 : vector<8x32xf32>
    %cst_103 = arith.constant dense<0.000000e+00> : vector<8xf32>
    %237 = vector.multi_reduction <add>, %236, %cst_103 [1] : vector<8x32xf32> to vector<8xf32>
    %238 = vector.shape_cast %237 : vector<8xf32> to vector<8x1xf32>
    %cst_104 = arith.constant 3.200000e+01 : f32
    %239 = vector.broadcast %cst_104 : f32 to vector<8x1xf32>
    %240 = arith.divf %238, %239 : vector<8x1xf32>
    %241 = vector.broadcast %240 : vector<8x1xf32> to vector<8x32xf32>
    %242 = arith.subf %236, %241 : vector<8x32xf32>
    %243 = arith.mulf %242, %242 : vector<8x32xf32>
    %cst_105 = arith.constant dense<0.000000e+00> : vector<8xf32>
    %244 = vector.multi_reduction <add>, %243, %cst_105 [1] : vector<8x32xf32> to vector<8xf32>
    %245 = vector.shape_cast %244 : vector<8xf32> to vector<8x1xf32>
    %cst_106 = arith.constant 3.200000e+01 : f32
    %246 = vector.broadcast %cst_106 : f32 to vector<8x1xf32>
    %247 = arith.divf %245, %246 : vector<8x1xf32>
    %248 = vector.broadcast %240 : vector<8x1xf32> to vector<8x32xf32>
    %249 = arith.subf %236, %248 : vector<8x32xf32>
    %cst_107 = arith.constant 9.99999974E-6 : f32
    %250 = vector.broadcast %cst_107 : f32 to vector<8x1xf32>
    %251 = arith.addf %247, %250 : vector<8x1xf32>
    %252 = math.rsqrt %251 : vector<8x1xf32>
    %253 = vector.broadcast %252 : vector<8x1xf32> to vector<8x32xf32>
    %254 = arith.mulf %249, %253 : vector<8x32xf32>
    %255 = vector.extract_strided_slice %11 {offsets = [2, 0], sizes = [1, 32], strides = [1, 1]} : vector<3x32xf32> to vector<1x32xf32>
    %256 = vector.broadcast %255 : vector<1x32xf32> to vector<8x32xf32>
    %257 = arith.mulf %254, %256 : vector<8x32xf32>
    %258 = vector.extract_strided_slice %13 {offsets = [2, 0], sizes = [1, 32], strides = [1, 1]} : vector<3x32xf32> to vector<1x32xf32>
    %259 = vector.broadcast %258 : vector<1x32xf32> to vector<8x32xf32>
    %260 = arith.addf %257, %259 : vector<8x32xf32>
    %261 = arith.truncf %260 : vector<8x32xf32> to vector<8x32xbf16>
    %c0_108 = arith.constant 0 : index
    %c0_109 = arith.constant 0 : index
    %c0_110 = arith.constant 0 : index
    %262 = vector.load %arg13[%c0_108, %c0_109, %c0_110] : memref<1x32x64xbf16, #tpu.memory_space<vmem>>, vector<1x32x64xbf16>
    %263 = vector.shape_cast %262 : vector<1x32x64xbf16> to vector<32x64xbf16>
    %cst_111 = arith.constant dense<0.000000e+00> : vector<8x64xf32>
    %264 = tpu.matmul %261, %263, %cst_111 {dimension_numbers = #tpu.dot_dimension_numbers<[1], [0], [0], [1], [0, 0, 1, 1], [], []>} : vector<8x32xbf16>, vector<32x64xbf16>, vector<8x64xf32> -> vector<8x64xf32>
    %c0_112 = arith.constant 0 : index
    %c0_113 = arith.constant 0 : index
    %c0_114 = arith.constant 0 : index
    %265 = vector.load %arg14[%c0_112, %c0_113, %c0_114] : memref<1x1x64xf32, #tpu.memory_space<vmem>>, vector<1x1x64xf32>
    %266 = vector.shape_cast %265 : vector<1x1x64xf32> to vector<1x64xf32>
    %267 = vector.broadcast %266 : vector<1x64xf32> to vector<8x64xf32>
    %268 = arith.addf %264, %267 : vector<8x64xf32>
    %cst_115 = arith.constant 0.000000e+00 : f32
    %269 = vector.broadcast %cst_115 : f32 to vector<8x64xf32>
    %270 = arith.maximumf %268, %269 : vector<8x64xf32>
    %271 = arith.truncf %270 : vector<8x64xf32> to vector<8x64xbf16>
    %c0_116 = arith.constant 0 : index
    %c0_117 = arith.constant 0 : index
    %c0_118 = arith.constant 0 : index
    %272 = vector.load %arg15[%c0_116, %c0_117, %c0_118] : memref<1x64x32xbf16, #tpu.memory_space<vmem>>, vector<1x64x32xbf16>
    %273 = vector.shape_cast %272 : vector<1x64x32xbf16> to vector<64x32xbf16>
    %cst_119 = arith.constant dense<0.000000e+00> : vector<8x32xf32>
    %274 = tpu.matmul %271, %273, %cst_119 {dimension_numbers = #tpu.dot_dimension_numbers<[1], [0], [0], [1], [0, 0, 1, 1], [], []>} : vector<8x64xbf16>, vector<64x32xbf16>, vector<8x32xf32> -> vector<8x32xf32>
    %275 = arith.addf %236, %274 : vector<8x32xf32>
    %c0_120 = arith.constant 0 : index
    %c0_121 = arith.constant 0 : index
    %c0_122 = arith.constant 0 : index
    %276 = vector.load %arg16[%c0_120, %c0_121, %c0_122] : memref<1x1x32xf32, #tpu.memory_space<vmem>>, vector<1x1x32xf32>
    %277 = vector.shape_cast %276 : vector<1x1x32xf32> to vector<1x32xf32>
    %278 = vector.broadcast %277 : vector<1x32xf32> to vector<8x32xf32>
    %279 = arith.addf %275, %278 : vector<8x32xf32>
    %c0_123 = arith.constant 0 : index
    %c0_124 = arith.constant 0 : index
    %280 = vector.load %arg20[%c0_123, %c0_124] : memref<8x32xf32, #tpu.memory_space<vmem>>, vector<8x32xf32>
    tpu.vector_store %arg20[%c0_123, %c0_124], %279 {strides = array<i32>} : memref<8x32xf32, #tpu.memory_space<vmem>>, vector<8x32xf32>,
    %c1_i32 = arith.constant 1 : i32
    %281 = arith.cmpi eq, %arg1, %c1_i32 : i32
    %282 = arith.extui %281 : i1 to i32
    %c0_i32_125 = arith.constant 0 : i32
    %283 = arith.cmpi ne, %282, %c0_i32_125 : i32
    scf.if %283 {
      %284 = vector.shape_cast %279 : vector<8x32xf32> to vector<1x8x32xf32>
      %c0_126 = arith.constant 0 : index
      %c0_127 = arith.constant 0 : index
      %c0_128 = arith.constant 0 : index
      %285 = vector.load %arg19[%c0_126, %c0_127, %c0_128] : memref<1x8x32xf32, #tpu.memory_space<vmem>>, vector<1x8x32xf32>
      tpu.vector_store %arg19[%c0_126, %c0_127, %c0_128], %284 {strides = array<i32>} : memref<1x8x32xf32, #tpu.memory_space<vmem>>, vector<1x8x32xf32>,
    } else {
    }
    return
  }
  func.func @transform_0(%arg0: i32, %arg1: i32) -> (i32, i32, i32) {
    %c0_i32 = arith.constant 0 : i32
    %c0_i32_0 = arith.constant 0 : i32
    %c0_i32_1 = arith.constant 0 : i32
    return %arg0, %c0_i32, %c0_i32_0 : i32, i32, i32
  }
  func.func @transform_1(%arg0: i32, %arg1: i32) -> (i32, i32, i32) {
    %c0_i32 = arith.constant 0 : i32
    %c0_i32_0 = arith.constant 0 : i32
    %c0_i32_1 = arith.constant 0 : i32
    return %arg0, %c0_i32, %c0_i32_0 : i32, i32, i32
  }
  func.func @transform_2(%arg0: i32, %arg1: i32) -> (i32, i32, i32) {
    %c0_i32 = arith.constant 0 : i32
    %c0_i32_0 = arith.constant 0 : i32
    %c0_i32_1 = arith.constant 0 : i32
    return %arg0, %c0_i32, %c0_i32_0 : i32, i32, i32
  }
  func.func @transform_3(%arg0: i32, %arg1: i32) -> (i32, i32, i32) {
    %c0_i32 = arith.constant 0 : i32
    %c0_i32_0 = arith.constant 0 : i32
    %c0_i32_1 = arith.constant 0 : i32
    return %arg0, %c0_i32, %c0_i32_0 : i32, i32, i32
  }
  func.func @transform_4(%arg0: i32, %arg1: i32) -> (i32, i32, i32) {
    %c0_i32 = arith.constant 0 : i32
    %c0_i32_0 = arith.constant 0 : i32
    %c0_i32_1 = arith.constant 0 : i32
    return %arg1, %c0_i32, %c0_i32_0 : i32, i32, i32
  }
  func.func @transform_5(%arg0: i32, %arg1: i32) -> (i32, i32, i32) {
    %c0_i32 = arith.constant 0 : i32
    %c0_i32_0 = arith.constant 0 : i32
    %c0_i32_1 = arith.constant 0 : i32
    return %arg1, %c0_i32, %c0_i32_0 : i32, i32, i32
  }
  func.func @transform_6(%arg0: i32, %arg1: i32) -> (i32, i32, i32) {
    %c0_i32 = arith.constant 0 : i32
    %c0_i32_0 = arith.constant 0 : i32
    %c0_i32_1 = arith.constant 0 : i32
    return %arg1, %c0_i32, %c0_i32_0 : i32, i32, i32
  }
  func.func @transform_7(%arg0: i32, %arg1: i32) -> (i32, i32, i32) {
    %c0_i32 = arith.constant 0 : i32
    %c0_i32_0 = arith.constant 0 : i32
    %c0_i32_1 = arith.constant 0 : i32
    return %arg1, %c0_i32, %c0_i32_0 : i32, i32, i32
  }
  func.func @transform_8(%arg0: i32, %arg1: i32) -> (i32, i32, i32) {
    %c0_i32 = arith.constant 0 : i32
    %c0_i32_0 = arith.constant 0 : i32
    %c0_i32_1 = arith.constant 0 : i32
    return %arg1, %c0_i32, %c0_i32_0 : i32, i32, i32
  }
  func.func @transform_9(%arg0: i32, %arg1: i32) -> (i32, i32, i32) {
    %c0_i32 = arith.constant 0 : i32
    %c0_i32_0 = arith.constant 0 : i32
    %c0_i32_1 = arith.constant 0 : i32
    return %arg1, %c0_i32, %c0_i32_0 : i32, i32, i32
  }
  func.func @transform_10(%arg0: i32, %arg1: i32) -> (i32, i32, i32) {
    %c0_i32 = arith.constant 0 : i32
    %c0_i32_0 = arith.constant 0 : i32
    %c0_i32_1 = arith.constant 0 : i32
    return %arg1, %c0_i32, %c0_i32_0 : i32, i32, i32
  }
  func.func @transform_11(%arg0: i32, %arg1: i32) -> (i32, i32, i32) {
    %c0_i32 = arith.constant 0 : i32
    %c0_i32_0 = arith.constant 0 : i32
    %c0_i32_1 = arith.constant 0 : i32
    return %arg1, %c0_i32, %c0_i32_0 : i32, i32, i32
  }
  func.func @transform_12(%arg0: i32, %arg1: i32) -> (i32, i32, i32) {
    %c0_i32 = arith.constant 0 : i32
    %c0_i32_0 = arith.constant 0 : i32
    %c0_i32_1 = arith.constant 0 : i32
    return %arg1, %c0_i32, %c0_i32_0 : i32, i32, i32
  }
  func.func @transform_13(%arg0: i32, %arg1: i32) -> (i32, i32, i32) {
    %c0_i32 = arith.constant 0 : i32
    %c0_i32_0 = arith.constant 0 : i32
    %c0_i32_1 = arith.constant 0 : i32
    return %arg1, %c0_i32, %c0_i32_0 : i32, i32, i32
  }
  func.func @transform_14(%arg0: i32, %arg1: i32) -> (i32, i32, i32) {
    %c0_i32 = arith.constant 0 : i32
    %c0_i32_0 = arith.constant 0 : i32
    %c0_i32_1 = arith.constant 0 : i32
    return %arg1, %c0_i32, %c0_i32_0 : i32, i32, i32
  }
  func.func @transform_15(%arg0: i32, %arg1: i32) -> (i32, i32, i32) {
    %c0_i32 = arith.constant 0 : i32
    %c0_i32_0 = arith.constant 0 : i32
    %c0_i32_1 = arith.constant 0 : i32
    return %arg1, %c0_i32, %c0_i32_0 : i32, i32, i32
  }
  func.func @transform_16(%arg0: i32, %arg1: i32) -> (i32, i32, i32) {
    %c0_i32 = arith.constant 0 : i32
    %c0_i32_0 = arith.constant 0 : i32
    %c0_i32_1 = arith.constant 0 : i32
    return %arg1, %c0_i32, %c0_i32_0 : i32, i32, i32
  }
  func.func @transform_17(%arg0: i32, %arg1: i32) -> (i32, i32, i32) {
    %c0_i32 = arith.constant 0 : i32
    %c0_i32_0 = arith.constant 0 : i32
    %c0_i32_1 = arith.constant 0 : i32
    return %arg0, %c0_i32, %c0_i32_0 : i32, i32, i32
  }
}

</mosaic_0001>

<llo_original>
// kernel: transformer_decoder_forward.1
$region0: #{transformer_decoder_forward.1}
  #allocation0 [shape = 'u32[]', space=smem, size = 0x4, offset = 0x4, fixed_abs, tag = 'smem constant byte address 0x4 - core index']
  #allocation1 [shape = 'u32[144,128]{1,0:T(1,128)}', space=vmem, size = 0x12000, scoped, tag = 'internal scratch']
  #allocation2 [shape = 'f32[8,32]{1,0:T(8,128)}', space=vmem, size = 0x1000, scoped, tag = 'scratch operand']
  #allocation3 [shape = 'f32[8,32]{1,0:T(8,128)}', space=vmem, size = 0x1000, scoped, tag = 'scratch operand']
  %s0 = inlined_call_operand.vmem [shape: f32[2,8,32], index: 0, kind: input, shape index: {}]
  %s1 = inlined_call_operand.vmem [shape: bf16[2,16,32], index: 1, kind: input, shape index: {}]
  %s2 = inlined_call_operand.vmem [shape: bf16[2,16,32], index: 2, kind: input, shape index: {}]
  %s3 = inlined_call_operand.vmem [shape: f32[2,8,32], index: 3, kind: input, shape index: {}]
  %s4 = inlined_call_operand.vmem [shape: bf16[2,32,64], index: 4, kind: input, shape index: {}]
  %s5 = inlined_call_operand.vmem [shape: bf16[2,32,32], index: 5, kind: input, shape index: {}]
  %s6 = inlined_call_operand.vmem [shape: bf16[2,32,32], index: 6, kind: input, shape index: {}]
  %s7 = inlined_call_operand.vmem [shape: bf16[2,32,32], index: 7, kind: input, shape index: {}]
  %s8 = inlined_call_operand.vmem [shape: bf16[2,32,32], index: 8, kind: input, shape index: {}]
  %s9 = inlined_call_operand.vmem [shape: bf16[2,32,32], index: 9, kind: input, shape index: {}]
  %s10 = inlined_call_operand.vmem [shape: bf16[2,32,32], index: 10, kind: input, shape index: {}]
  %s11 = inlined_call_operand.vmem [shape: bf16[2,32,64], index: 11, kind: input, shape index: {}]
  %s12 = inlined_call_operand.vmem [shape: f32[2,1,64], index: 12, kind: input, shape index: {}]
  %s13 = inlined_call_operand.vmem [shape: bf16[2,64,32], index: 13, kind: input, shape index: {}]
  %s14 = inlined_call_operand.hbm [shape: f32[2,1,32], index: 14, kind: input, shape index: {}]
  %s15 = inlined_call_operand.vmem [shape: f32[2,3,32], index: 15, kind: input, shape index: {}]
  %s16 = inlined_call_operand.vmem [shape: f32[2,3,32], index: 16, kind: input, shape index: {}]
  %s17 = inlined_call_operand.vmem [shape: f32[2,8,32], index: 17, kind: output, shape index: {}]
  %s18 = sld [smem:[#allocation0]]
  $region113: #{transformer_decoder_forward.1} parent=0
    _
  %s20 = ssub.s32 1, %s18
  %s21 = scalar_select 0, %s20, %s18
  $region1: #{transformer_decoder_forward.1} parent=0
    #allocation4 [shape = 'u8[1024]{0}', space=vmem, size = 0x400, scoped, tag = 'input window, operand 14']
    #allocation5 [shape = 's32[2]{0}', space=sflag, size = 0x8, scoped, tag = 'scoped memory for transformer_decoder_forward.1']
    %22 = vsyncpa [#allocation5], 0
    %s23 = scalar_lea.sflag [#allocation5], 1
    %24 = vsyncpa %s23, 0
    loop: start=0, step=1, limit=6
    $region2: #{transformer_decoder_forward.1} parent=1 // loop_pre_header
      _
    $region3: #{transformer_decoder_forward.1} parent=1 // loop_header
      %s26 = sphi 0, %s30
      %p27 = scmp.ge.s32.totalorder %s26, 6
      %s33 = sphi 0, %s45
      %s34 = sphi 0, %s41
      %s35 = sphi 0, %s33
      %s36 = sphi 0, %s34
      %s37 = sphi 0, %s35
      %s38 = sphi 0, %s36
      %s48 = sphi 0, %s50
      %s51 = sphi 0, %s48
      %s52 = sphi 0, %s51
      %s68 = sphi 0, %s52
      %s74 = sphi 0, %s76
      %s77 = sphi 0, %s74
      %s78 = sphi 0, %s77
      %s94 = sphi 0, %s78
      %s100 = sphi 0, %s102
      %s103 = sphi 0, %s100
      %s104 = sphi 0, %s103
      %s120 = sphi 0, %s104
      %s126 = sphi 0, %s128
      %s129 = sphi 0, %s126
      %s130 = sphi 0, %s129
      %s146 = sphi 0, %s130
      %s152 = sphi 0, %s154
      %s155 = sphi 0, %s152
      %s156 = sphi 0, %s155
      %s172 = sphi 0, %s156
      %s178 = sphi 0, %s180
      %s181 = sphi 0, %s178
      %s182 = sphi 0, %s181
      %s198 = sphi 0, %s182
      %s204 = sphi 0, %s206
      %s207 = sphi 0, %s204
      %s208 = sphi 0, %s207
      %s224 = sphi 0, %s208
      %s230 = sphi 0, %s232
      %s233 = sphi 0, %s230
      %s234 = sphi 0, %s233
      %s250 = sphi 0, %s234
      %s256 = sphi 0, %s258
      %s259 = sphi 0, %s256
      %s260 = sphi 0, %s259
      %s276 = sphi 0, %s260
      %s282 = sphi 0, %s284
      %s285 = sphi 0, %s282
      %s286 = sphi 0, %s285
      %s302 = sphi 0, %s286
      %s308 = sphi 0, %s310
      %s311 = sphi 0, %s308
      %s312 = sphi 0, %s311
      %s328 = sphi 0, %s312
      %s334 = sphi 0, %s336
      %s337 = sphi 0, %s334
      %s338 = sphi 0, %s337
      %s354 = sphi 0, %s338
      %s360 = sphi 0, %s362
      %s363 = sphi 0, %s360
      %s364 = sphi 0, %s363
      %s380 = sphi 0, %s364
      %s386 = sphi 0, %s388
      %s389 = sphi 0, %s386
      %s390 = sphi 0, %s389
      %s406 = sphi 0, %s390
      %s412 = sphi 0, %s414
      %s415 = sphi 0, %s412
      %s416 = sphi 0, %s415
      %s432 = sphi 0, %s416
      %s438 = sphi 0, %s440
      %s441 = sphi 0, %s438
      %s442 = sphi 0, %s441
      %s458 = sphi 0, %s442
      %s464 = sphi 0, %s466
      %s467 = sphi 0, %s464
      %s468 = sphi 0, %s467
      %s484 = sphi 0, %s468
      %s490 = sphi 0, %s492
      %s493 = sphi 0, %s490
      %s494 = sphi 0, %s493
      %s510 = sphi 0, %s494
    $region4: #{transformer_decoder_forward.1} parent=1 // loop_header_branch
      %29 = sbr.rel (%p27) target = $region8
    $region5: #{transformer_decoder_forward.1} parent=1 // loop_body
      %s31 = ssub.s32 %s26, 1
      %s32 = ssub.s32 %s26, 2
      %s39 = sadd.s32 1, %s34
      %p40 = scmp.ge.s32.totalorder %s39, 2
      %s41 = scalar_select %p40, 0, %s39
      %s42 = sadd.s32 1, %s33
      %s43 = scalar_select %p40, %s42, %s33
      %p44 = scmp.ge.s32.totalorder %s43, 2
      %s45 = scalar_select %p44, 0, %s43
      %s46 = ssub.s32 %s33, %s45
      %p47 = scmp.eq.s32.totalorder %s46, 0
      %s49 = sadd.s32 %s48, 1
      %s50 = scalar_select %p47, %s48, %s49
      %p53 = pneg %p47
      %p54 = scmp.eq.s32.totalorder %s26, 3
      %p55 = por %p53, %p54
      %p56 = scmp.ne.s32.totalorder %s48, %s51
      %p57 = scmp.eq.s32.totalorder %s26, 0
      %p58 = por %p56, %p57
      %p59 = scmp.ne.s32.totalorder %s48, %s51
      %p60 = scmp.eq.s32.totalorder %s31, 3
      %p61 = por %p59, %p60
      %p62 = scmp.ne.s32.totalorder %s51, %s52
      %p63 = scmp.eq.s32.totalorder %s31, 0
      %p64 = por %p62, %p63
      %p65 = scmp.ne.s32.totalorder %s51, %s52
      %p66 = scmp.eq.s32.totalorder %s32, 3
      %p67 = por %p65, %p66
      %p69 = scmp.ne.s32.totalorder %s52, %s68
      %p70 = scmp.eq.s32.totalorder %s32, 0
      %p71 = por %p69, %p70
      %s72 = ssub.s32 %s33, %s45
      %p73 = scmp.eq.s32.totalorder %s72, 0
      %s75 = sadd.s32 %s74, 1
      %s76 = scalar_select %p73, %s74, %s75
      %p79 = pneg %p73
      %p80 = scmp.eq.s32.totalorder %s26, 3
      %p81 = por %p79, %p80
      %p82 = scmp.ne.s32.totalorder %s74, %s77
      %p83 = scmp.eq.s32.totalorder %s26, 0
      %p84 = por %p82, %p83
      %p85 = scmp.ne.s32.totalorder %s74, %s77
      %p86 = scmp.eq.s32.totalorder %s31, 3
      %p87 = por %p85, %p86
      %p88 = scmp.ne.s32.totalorder %s77, %s78
      %p89 = scmp.eq.s32.totalorder %s31, 0
      %p90 = por %p88, %p89
      %p91 = scmp.ne.s32.totalorder %s77, %s78
      %p92 = scmp.eq.s32.totalorder %s32, 3
      %p93 = por %p91, %p92
      %p95 = scmp.ne.s32.totalorder %s78, %s94
      %p96 = scmp.eq.s32.totalorder %s32, 0
      %p97 = por %p95, %p96
      %s98 = ssub.s32 %s33, %s45
      %p99 = scmp.eq.s32.totalorder %s98, 0
      %s101 = sadd.s32 %s100, 1
      %s102 = scalar_select %p99, %s100, %s101
      %p105 = pneg %p99
      %p106 = scmp.eq.s32.totalorder %s26, 3
      %p107 = por %p105, %p106
      %p108 = scmp.ne.s32.totalorder %s100, %s103
      %p109 = scmp.eq.s32.totalorder %s26, 0
      %p110 = por %p108, %p109
      %p111 = scmp.ne.s32.totalorder %s100, %s103
      %p112 = scmp.eq.s32.totalorder %s31, 3
      %p113 = por %p111, %p112
      %p114 = scmp.ne.s32.totalorder %s103, %s104
      %p115 = scmp.eq.s32.totalorder %s31, 0
      %p116 = por %p114, %p115
      %p117 = scmp.ne.s32.totalorder %s103, %s104
      %p118 = scmp.eq.s32.totalorder %s32, 3
      %p119 = por %p117, %p118
      %p121 = scmp.ne.s32.totalorder %s104, %s120
      %p122 = scmp.eq.s32.totalorder %s32, 0
      %p123 = por %p121, %p122
      %s124 = ssub.s32 %s33, %s45
      %p125 = scmp.eq.s32.totalorder %s124, 0
      %s127 = sadd.s32 %s126, 1
      %s128 = scalar_select %p125, %s126, %s127
      %p131 = pneg %p125
      %p132 = scmp.eq.s32.totalorder %s26, 3
      %p133 = por %p131, %p132
      %p134 = scmp.ne.s32.totalorder %s126, %s129
      %p135 = scmp.eq.s32.totalorder %s26, 0
      %p136 = por %p134, %p135
      %p137 = scmp.ne.s32.totalorder %s126, %s129
      %p138 = scmp.eq.s32.totalorder %s31, 3
      %p139 = por %p137, %p138
      %p140 = scmp.ne.s32.totalorder %s129, %s130
      %p141 = scmp.eq.s32.totalorder %s31, 0
      %p142 = por %p140, %p141
      %p143 = scmp.ne.s32.totalorder %s129, %s130
      %p144 = scmp.eq.s32.totalorder %s32, 3
      %p145 = por %p143, %p144
      %p147 = scmp.ne.s32.totalorder %s130, %s146
      %p148 = scmp.eq.s32.totalorder %s32, 0
      %p149 = por %p147, %p148
      %s150 = ssub.s32 %s34, %s41
      %p151 = scmp.eq.s32.totalorder %s150, 0
      %s153 = sadd.s32 %s152, 1
      %s154 = scalar_select %p151, %s152, %s153
      %p157 = pneg %p151
      %p158 = scmp.eq.s32.totalorder %s26, 3
      %p159 = por %p157, %p158
      %p160 = scmp.ne.s32.totalorder %s152, %s155
      %p161 = scmp.eq.s32.totalorder %s26, 0
      %p162 = por %p160, %p161
      %p163 = scmp.ne.s32.totalorder %s152, %s155
      %p164 = scmp.eq.s32.totalorder %s31, 3
      %p165 = por %p163, %p164
      %p166 = scmp.ne.s32.totalorder %s155, %s156
      %p167 = scmp.eq.s32.totalorder %s31, 0
      %p168 = por %p166, %p167
      %p169 = scmp.ne.s32.totalorder %s155, %s156
      %p170 = scmp.eq.s32.totalorder %s32, 3
      %p171 = por %p169, %p170
      %p173 = scmp.ne.s32.totalorder %s156, %s172
      %p174 = scmp.eq.s32.totalorder %s32, 0
      %p175 = por %p173, %p174
      %s176 = ssub.s32 %s34, %s41
      %p177 = scmp.eq.s32.totalorder %s176, 0
      %s179 = sadd.s32 %s178, 1
      %s180 = scalar_select %p177, %s178, %s179
      %p183 = pneg %p177
      %p184 = scmp.eq.s32.totalorder %s26, 3
      %p185 = por %p183, %p184
      %p186 = scmp.ne.s32.totalorder %s178, %s181
      %p187 = scmp.eq.s32.totalorder %s26, 0
      %p188 = por %p186, %p187
      %p189 = scmp.ne.s32.totalorder %s178, %s181
      %p190 = scmp.eq.s32.totalorder %s31, 3
      %p191 = por %p189, %p190
      %p192 = scmp.ne.s32.totalorder %s181, %s182
      %p193 = scmp.eq.s32.totalorder %s31, 0
      %p194 = por %p192, %p193
      %p195 = scmp.ne.s32.totalorder %s181, %s182
      %p196 = scmp.eq.s32.totalorder %s32, 3
      %p197 = por %p195, %p196
      %p199 = scmp.ne.s32.totalorder %s182, %s198
      %p200 = scmp.eq.s32.totalorder %s32, 0
      %p201 = por %p199, %p200
      %s202 = ssub.s32 %s34, %s41
      %p203 = scmp.eq.s32.totalorder %s202, 0
      %s205 = sadd.s32 %s204, 1
      %s206 = scalar_select %p203, %s204, %s205
      %p209 = pneg %p203
      %p210 = scmp.eq.s32.totalorder %s26, 3
      %p211 = por %p209, %p210
      %p212 = scmp.ne.s32.totalorder %s204, %s207
      %p213 = scmp.eq.s32.totalorder %s26, 0
      %p214 = por %p212, %p213
      %p215 = scmp.ne.s32.totalorder %s204, %s207
      %p216 = scmp.eq.s32.totalorder %s31, 3
      %p217 = por %p215, %p216
      %p218 = scmp.ne.s32.totalorder %s207, %s208
      %p219 = scmp.eq.s32.totalorder %s31, 0
      %p220 = por %p218, %p219
      %p221 = scmp.ne.s32.totalorder %s207, %s208
      %p222 = scmp.eq.s32.totalorder %s32, 3
      %p223 = por %p221, %p222
      %p225 = scmp.ne.s32.totalorder %s208, %s224
      %p226 = scmp.eq.s32.totalorder %s32, 0
      %p227 = por %p225, %p226
      %s228 = ssub.s32 %s34, %s41
      %p229 = scmp.eq.s32.totalorder %s228, 0
      %s231 = sadd.s32 %s230, 1
      %s232 = scalar_select %p229, %s230, %s231
      %p235 = pneg %p229
      %p236 = scmp.eq.s32.totalorder %s26, 3
      %p237 = por %p235, %p236
      %p238 = scmp.ne.s32.totalorder %s230, %s233
      %p239 = scmp.eq.s32.totalorder %s26, 0
      %p240 = por %p238, %p239
      %p241 = scmp.ne.s32.totalorder %s230, %s233
      %p242 = scmp.eq.s32.totalorder %s31, 3
      %p243 = por %p241, %p242
      %p244 = scmp.ne.s32.totalorder %s233, %s234
      %p245 = scmp.eq.s32.totalorder %s31, 0
      %p246 = por %p244, %p245
      %p247 = scmp.ne.s32.totalorder %s233, %s234
      %p248 = scmp.eq.s32.totalorder %s32, 3
      %p249 = por %p247, %p248
      %p251 = scmp.ne.s32.totalorder %s234, %s250
      %p252 = scmp.eq.s32.totalorder %s32, 0
      %p253 = por %p251, %p252
      %s254 = ssub.s32 %s34, %s41
      %p255 = scmp.eq.s32.totalorder %s254, 0
      %s257 = sadd.s32 %s256, 1
      %s258 = scalar_select %p255, %s256, %s257
      %p261 = pneg %p255
      %p262 = scmp.eq.s32.totalorder %s26, 3
      %p263 = por %p261, %p262
      %p264 = scmp.ne.s32.totalorder %s256, %s259
      %p265 = scmp.eq.s32.totalorder %s26, 0
      %p266 = por %p264, %p265
      %p267 = scmp.ne.s32.totalorder %s256, %s259
      %p268 = scmp.eq.s32.totalorder %s31, 3
      %p269 = por %p267, %p268
      %p270 = scmp.ne.s32.totalorder %s259, %s260
      %p271 = scmp.eq.s32.totalorder %s31, 0
      %p272 = por %p270, %p271
      %p273 = scmp.ne.s32.totalorder %s259, %s260
      %p274 = scmp.eq.s32.totalorder %s32, 3
      %p275 = por %p273, %p274
      %p277 = scmp.ne.s32.totalorder %s260, %s276
      %p278 = scmp.eq.s32.totalorder %s32, 0
      %p279 = por %p277, %p278
      %s280 = ssub.s32 %s34, %s41
      %p281 = scmp.eq.s32.totalorder %s280, 0
      %s283 = sadd.s32 %s282, 1
      %s284 = scalar_select %p281, %s282, %s283
      %p287 = pneg %p281
      %p288 = scmp.eq.s32.totalorder %s26, 3
      %p289 = por %p287, %p288
      %p290 = scmp.ne.s32.totalorder %s282, %s285
      %p291 = scmp.eq.s32.totalorder %s26, 0
      %p292 = por %p290, %p291
      %p293 = scmp.ne.s32.totalorder %s282, %s285
      %p294 = scmp.eq.s32.totalorder %s31, 3
      %p295 = por %p293, %p294
      %p296 = scmp.ne.s32.totalorder %s285, %s286
      %p297 = scmp.eq.s32.totalorder %s31, 0
      %p298 = por %p296, %p297
      %p299 = scmp.ne.s32.totalorder %s285, %s286
      %p300 = scmp.eq.s32.totalorder %s32, 3
      %p301 = por %p299, %p300
      %p303 = scmp.ne.s32.totalorder %s286, %s302
      %p304 = scmp.eq.s32.totalorder %s32, 0
      %p305 = por %p303, %p304
      %s306 = ssub.s32 %s34, %s41
      %p307 = scmp.eq.s32.totalorder %s306, 0
      %s309 = sadd.s32 %s308, 1
      %s310 = scalar_select %p307, %s308, %s309
      %p313 = pneg %p307
      %p314 = scmp.eq.s32.totalorder %s26, 3
      %p315 = por %p313, %p314
      %p316 = scmp.ne.s32.totalorder %s308, %s311
      %p317 = scmp.eq.s32.totalorder %s26, 0
      %p318 = por %p316, %p317
      %p319 = scmp.ne.s32.totalorder %s308, %s311
      %p320 = scmp.eq.s32.totalorder %s31, 3
      %p321 = por %p319, %p320
      %p322 = scmp.ne.s32.totalorder %s311, %s312
      %p323 = scmp.eq.s32.totalorder %s31, 0
      %p324 = por %p322, %p323
      %p325 = scmp.ne.s32.totalorder %s311, %s312
      %p326 = scmp.eq.s32.totalorder %s32, 3
      %p327 = por %p325, %p326
      %p329 = scmp.ne.s32.totalorder %s312, %s328
      %p330 = scmp.eq.s32.totalorder %s32, 0
      %p331 = por %p329, %p330
      %s332 = ssub.s32 %s34, %s41
      %p333 = scmp.eq.s32.totalorder %s332, 0
      %s335 = sadd.s32 %s334, 1
      %s336 = scalar_select %p333, %s334, %s335
      %p339 = pneg %p333
      %p340 = scmp.eq.s32.totalorder %s26, 3
      %p341 = por %p339, %p340
      %p342 = scmp.ne.s32.totalorder %s334, %s337
      %p343 = scmp.eq.s32.totalorder %s26, 0
      %p344 = por %p342, %p343
      %p345 = scmp.ne.s32.totalorder %s334, %s337
      %p346 = scmp.eq.s32.totalorder %s31, 3
      %p347 = por %p345, %p346
      %p348 = scmp.ne.s32.totalorder %s337, %s338
      %p349 = scmp.eq.s32.totalorder %s31, 0
      %p350 = por %p348, %p349
      %p351 = scmp.ne.s32.totalorder %s337, %s338
      %p352 = scmp.eq.s32.totalorder %s32, 3
      %p353 = por %p351, %p352
      %p355 = scmp.ne.s32.totalorder %s338, %s354
      %p356 = scmp.eq.s32.totalorder %s32, 0
      %p357 = por %p355, %p356
      %s358 = ssub.s32 %s34, %s41
      %p359 = scmp.eq.s32.totalorder %s358, 0
      %s361 = sadd.s32 %s360, 1
      %s362 = scalar_select %p359, %s360, %s361
      %p365 = pneg %p359
      %p366 = scmp.eq.s32.totalorder %s26, 3
      %p367 = por %p365, %p366
      %p368 = scmp.ne.s32.totalorder %s360, %s363
      %p369 = scmp.eq.s32.totalorder %s26, 0
      %p370 = por %p368, %p369
      %p371 = scmp.ne.s32.totalorder %s360, %s363
      %p372 = scmp.eq.s32.totalorder %s31, 3
      %p373 = por %p371, %p372
      %p374 = scmp.ne.s32.totalorder %s363, %s364
      %p375 = scmp.eq.s32.totalorder %s31, 0
      %p376 = por %p374, %p375
      %p377 = scmp.ne.s32.totalorder %s363, %s364
      %p378 = scmp.eq.s32.totalorder %s32, 3
      %p379 = por %p377, %p378
      %p381 = scmp.ne.s32.totalorder %s364, %s380
      %p382 = scmp.eq.s32.totalorder %s32, 0
      %p383 = por %p381, %p382
      %s384 = ssub.s32 %s34, %s41
      %p385 = scmp.eq.s32.totalorder %s384, 0
      %s387 = sadd.s32 %s386, 1
      %s388 = scalar_select %p385, %s386, %s387
      %p391 = pneg %p385
      %p392 = scmp.eq.s32.totalorder %s26, 3
      %p393 = por %p391, %p392
      %p394 = scmp.ne.s32.totalorder %s386, %s389
      %p395 = scmp.eq.s32.totalorder %s26, 0
      %p396 = por %p394, %p395
      %p397 = scmp.ne.s32.totalorder %s386, %s389
      %p398 = scmp.eq.s32.totalorder %s31, 3
      %p399 = por %p397, %p398
      %p400 = scmp.ne.s32.totalorder %s389, %s390
      %p401 = scmp.eq.s32.totalorder %s31, 0
      %p402 = por %p400, %p401
      %p403 = scmp.ne.s32.totalorder %s389, %s390
      %p404 = scmp.eq.s32.totalorder %s32, 3
      %p405 = por %p403, %p404
      %p407 = scmp.ne.s32.totalorder %s390, %s406
      %p408 = scmp.eq.s32.totalorder %s32, 0
      %p409 = por %p407, %p408
      %s410 = ssub.s32 %s34, %s41
      %p411 = scmp.eq.s32.totalorder %s410, 0
      %s413 = sadd.s32 %s412, 1
      %s414 = scalar_select %p411, %s412, %s413
      %p417 = pneg %p411
      %p418 = scmp.eq.s32.totalorder %s26, 3
      %p419 = por %p417, %p418
      %p420 = scmp.ne.s32.totalorder %s412, %s415
      %p421 = scmp.eq.s32.totalorder %s26, 0
      %p422 = por %p420, %p421
      %p423 = scmp.ne.s32.totalorder %s412, %s415
      %p424 = scmp.eq.s32.totalorder %s31, 3
      %p425 = por %p423, %p424
      %p426 = scmp.ne.s32.totalorder %s415, %s416
      %p427 = scmp.eq.s32.totalorder %s31, 0
      %p428 = por %p426, %p427
      %p429 = scmp.ne.s32.totalorder %s415, %s416
      %p430 = scmp.eq.s32.totalorder %s32, 3
      %p431 = por %p429, %p430
      %p433 = scmp.ne.s32.totalorder %s416, %s432
      %p434 = scmp.eq.s32.totalorder %s32, 0
      %p435 = por %p433, %p434
      %s436 = ssub.s32 %s34, %s41
      %p437 = scmp.eq.s32.totalorder %s436, 0
      %s439 = sadd.s32 %s438, 1
      %s440 = scalar_select %p437, %s438, %s439
      %p443 = pneg %p437
      %p444 = scmp.eq.s32.totalorder %s26, 3
      %p445 = por %p443, %p444
      %p446 = scmp.ne.s32.totalorder %s438, %s441
      %p447 = scmp.eq.s32.totalorder %s26, 0
      %p448 = por %p446, %p447
      %p449 = scmp.ne.s32.totalorder %s438, %s441
      %p450 = scmp.eq.s32.totalorder %s31, 3
      %p451 = por %p449, %p450
      %p452 = scmp.ne.s32.totalorder %s441, %s442
      %p453 = scmp.eq.s32.totalorder %s31, 0
      %p454 = por %p452, %p453
      %p455 = scmp.ne.s32.totalorder %s441, %s442
      %p456 = scmp.eq.s32.totalorder %s32, 3
      %p457 = por %p455, %p456
      %p459 = scmp.ne.s32.totalorder %s442, %s458
      %p460 = scmp.eq.s32.totalorder %s32, 0
      %p461 = por %p459, %p460
      %s462 = ssub.s32 %s34, %s41
      %p463 = scmp.eq.s32.totalorder %s462, 0
      %s465 = sadd.s32 %s464, 1
      %s466 = scalar_select %p463, %s464, %s465
      %p469 = pneg %p463
      %p470 = scmp.eq.s32.totalorder %s26, 3
      %p471 = por %p469, %p470
      %p472 = scmp.ne.s32.totalorder %s464, %s467
      %p473 = scmp.eq.s32.totalorder %s26, 0
      %p474 = por %p472, %p473
      %p475 = scmp.ne.s32.totalorder %s464, %s467
      %p476 = scmp.eq.s32.totalorder %s31, 3
      %p477 = por %p475, %p476
      %p478 = scmp.ne.s32.totalorder %s467, %s468
      %p479 = scmp.eq.s32.totalorder %s31, 0
      %p480 = por %p478, %p479
      %p481 = scmp.ne.s32.totalorder %s467, %s468
      %p482 = scmp.eq.s32.totalorder %s32, 3
      %p483 = por %p481, %p482
      %p485 = scmp.ne.s32.totalorder %s468, %s484
      %p486 = scmp.eq.s32.totalorder %s32, 0
      %p487 = por %p485, %p486
      %s488 = ssub.s32 %s33, %s45
      %p489 = scmp.eq.s32.totalorder %s488, 0
      %s491 = sadd.s32 %s490, 1
      %s492 = scalar_select %p489, %s490, %s491
      %p495 = pneg %p489
      %p496 = scmp.eq.s32.totalorder %s26, 3
      %p497 = por %p495, %p496
      %p498 = scmp.ne.s32.totalorder %s490, %s493
      %p499 = scmp.eq.s32.totalorder %s26, 0
      %p500 = por %p498, %p499
      %p501 = scmp.ne.s32.totalorder %s490, %s493
      %p502 = scmp.eq.s32.totalorder %s31, 3
      %p503 = por %p501, %p502
      %p504 = scmp.ne.s32.totalorder %s493, %s494
      %p505 = scmp.eq.s32.totalorder %s31, 0
      %p506 = por %p504, %p505
      %p507 = scmp.ne.s32.totalorder %s493, %s494
      %p508 = scmp.eq.s32.totalorder %s32, 3
      %p509 = por %p507, %p508
      %p511 = scmp.ne.s32.totalorder %s494, %s510
      %p512 = scmp.eq.s32.totalorder %s32, 0
      %p513 = por %p511, %p512
      %p514 = scmp.le.s32.totalorder 1, %s26
      %p515 = scmp.lt.s32.totalorder %s26, 5
      %p516 = pnand %p514, %p515
      %p517 = pneg %p516
      // Predicated region
      $region9: #{transformer_decoder_forward.1} parent=5 // pred_check
        _
      $region10: #{transformer_decoder_forward.1} parent=5 // pred_check_branch
        %519 = sbr.rel (%p516) target = $region12
      $region11: #{transformer_decoder_forward.1} parent=5 // pred_region
        %s520 = ssub.s32 %s26, 1
      $region12: #{transformer_decoder_forward.1} parent=5 // pred_fallthru
        _
      %p521 = scmp.lt.s32.totalorder %s26, 4
      // Predicated region
      $region13: #{transformer_decoder_forward.1} parent=5 // pred_check
        %p522 = pneg %p521
      $region14: #{transformer_decoder_forward.1} parent=5 // pred_check_branch
        %524 = sbr.rel (%p522) target = $region16
      $region15: #{transformer_decoder_forward.1} parent=5 // pred_region
        // Predicated region
        $region17: #{transformer_decoder_forward.1} parent=15 // pred_check
          %p525 = pneg %p58
        $region18: #{transformer_decoder_forward.1} parent=15 // pred_check_branch
          %527 = sbr.rel (%p525) target = $region20
        $region19: #{transformer_decoder_forward.1} parent=15 // pred_region
          %p528 = scmp.lt.s32.totalorder %s33, 1
          %s529 = scalar_select %p528, %s33, 1
          %s530 = smul.addr %s529, 8
          %s531 = scalar_lea.vmem %s0, %s530
        $region20: #{transformer_decoder_forward.1} parent=15 // pred_fallthru
          _
        // Predicated region
        $region21: #{transformer_decoder_forward.1} parent=15 // pred_check
          %p532 = pneg %p84
        $region22: #{transformer_decoder_forward.1} parent=15 // pred_check_branch
          %534 = sbr.rel (%p532) target = $region24
        $region23: #{transformer_decoder_forward.1} parent=15 // pred_region
          %p535 = scmp.lt.s32.totalorder %s33, 1
          %s536 = scalar_select %p535, %s33, 1
          %s537 = smul.addr %s536, 2
          %s538 = smul.addr %s537, 4
          %s539 = scalar_lea.vmem %s1, %s538
        $region24: #{transformer_decoder_forward.1} parent=15 // pred_fallthru
          _
        // Predicated region
        $region25: #{transformer_decoder_forward.1} parent=15 // pred_check
          %p540 = pneg %p110
        $region26: #{transformer_decoder_forward.1} parent=15 // pred_check_branch
          %542 = sbr.rel (%p540) target = $region28
        $region27: #{transformer_decoder_forward.1} parent=15 // pred_region
          %p543 = scmp.lt.s32.totalorder %s33, 1
          %s544 = scalar_select %p543, %s33, 1
          %s545 = smul.addr %s544, 2
          %s546 = smul.addr %s545, 4
          %s547 = scalar_lea.vmem %s2, %s546
        $region28: #{transformer_decoder_forward.1} parent=15 // pred_fallthru
          _
        // Predicated region
        $region29: #{transformer_decoder_forward.1} parent=15 // pred_check
          %p548 = pneg %p136
        $region30: #{transformer_decoder_forward.1} parent=15 // pred_check_branch
          %550 = sbr.rel (%p548) target = $region32
        $region31: #{transformer_decoder_forward.1} parent=15 // pred_region
          %p551 = scmp.lt.s32.totalorder %s33, 1
          %s552 = scalar_select %p551, %s33, 1
          %s553 = smul.addr %s552, 8
          %s554 = scalar_lea.vmem %s3, %s553
        $region32: #{transformer_decoder_forward.1} parent=15 // pred_fallthru
          _
        // Predicated region
        $region33: #{transformer_decoder_forward.1} parent=15 // pred_check
          %p555 = pneg %p162
        $region34: #{transformer_decoder_forward.1} parent=15 // pred_check_branch
          %557 = sbr.rel (%p555) target = $region36
        $region35: #{transformer_decoder_forward.1} parent=15 // pred_region
          %p558 = scmp.lt.s32.totalorder %s34, 1
          %s559 = scalar_select %p558, %s34, 1
          %s560 = smul.addr %s559, 4
          %s561 = smul.addr %s560, 4
          %s562 = scalar_lea.vmem %s4, %s561
        $region36: #{transformer_decoder_forward.1} parent=15 // pred_fallthru
          _
        // Predicated region
        $region37: #{transformer_decoder_forward.1} parent=15 // pred_check
          %p563 = pneg %p188
        $region38: #{transformer_decoder_forward.1} parent=15 // pred_check_branch
          %565 = sbr.rel (%p563) target = $region40
        $region39: #{transformer_decoder_forward.1} parent=15 // pred_region
          %p566 = scmp.lt.s32.totalorder %s34, 1
          %s567 = scalar_select %p566, %s34, 1
          %s568 = smul.addr %s567, 4
          %s569 = smul.addr %s568, 4
          %s570 = scalar_lea.vmem %s5, %s569
        $region40: #{transformer_decoder_forward.1} parent=15 // pred_fallthru
          _
        // Predicated region
        $region41: #{transformer_decoder_forward.1} parent=15 // pred_check
          %p571 = pneg %p214
        $region42: #{transformer_decoder_forward.1} parent=15 // pred_check_branch
          %573 = sbr.rel (%p571) target = $region44
        $region43: #{transformer_decoder_forward.1} parent=15 // pred_region
          %p574 = scmp.lt.s32.totalorder %s34, 1
          %s575 = scalar_select %p574, %s34, 1
          %s576 = smul.addr %s575, 4
          %s577 = smul.addr %s576, 4
          %s578 = scalar_lea.vmem %s6, %s577
        $region44: #{transformer_decoder_forward.1} parent=15 // pred_fallthru
          _
        // Predicated region
        $region45: #{transformer_decoder_forward.1} parent=15 // pred_check
          %p579 = pneg %p240
        $region46: #{transformer_decoder_forward.1} parent=15 // pred_check_branch
          %581 = sbr.rel (%p579) target = $region48
        $region47: #{transformer_decoder_forward.1} parent=15 // pred_region
          %p582 = scmp.lt.s32.totalorder %s34, 1
          %s583 = scalar_select %p582, %s34, 1
          %s584 = smul.addr %s583, 4
          %s585 = smul.addr %s584, 4
          %s586 = scalar_lea.vmem %s7, %s585
        $region48: #{transformer_decoder_forward.1} parent=15 // pred_fallthru
          _
        // Predicated region
        $region49: #{transformer_decoder_forward.1} parent=15 // pred_check
          %p587 = pneg %p266
        $region50: #{transformer_decoder_forward.1} parent=15 // pred_check_branch
          %589 = sbr.rel (%p587) target = $region52
        $region51: #{transformer_decoder_forward.1} parent=15 // pred_region
          %p590 = scmp.lt.s32.totalorder %s34, 1
          %s591 = scalar_select %p590, %s34, 1
          %s592 = smul.addr %s591, 4
          %s593 = smul.addr %s592, 4
          %s594 = scalar_lea.vmem %s8, %s593
        $region52: #{transformer_decoder_forward.1} parent=15 // pred_fallthru
          _
        // Predicated region
        $region53: #{transformer_decoder_forward.1} parent=15 // pred_check
          %p595 = pneg %p292
        $region54: #{transformer_decoder_forward.1} parent=15 // pred_check_branch
          %597 = sbr.rel (%p595) target = $region56
        $region55: #{transformer_decoder_forward.1} parent=15 // pred_region
          %p598 = scmp.lt.s32.totalorder %s34, 1
          %s599 = scalar_select %p598, %s34, 1
          %s600 = smul.addr %s599, 4
          %s601 = smul.addr %s600, 4
          %s602 = scalar_lea.vmem %s9, %s601
        $region56: #{transformer_decoder_forward.1} parent=15 // pred_fallthru
          _
        // Predicated region
        $region57: #{transformer_decoder_forward.1} parent=15 // pred_check
          %p603 = pneg %p318
        $region58: #{transformer_decoder_forward.1} parent=15 // pred_check_branch
          %605 = sbr.rel (%p603) target = $region60
        $region59: #{transformer_decoder_forward.1} parent=15 // pred_region
          %p606 = scmp.lt.s32.totalorder %s34, 1
          %s607 = scalar_select %p606, %s34, 1
          %s608 = smul.addr %s607, 4
          %s609 = smul.addr %s608, 4
          %s610 = scalar_lea.vmem %s10, %s609
        $region60: #{transformer_decoder_forward.1} parent=15 // pred_fallthru
          _
        // Predicated region
        $region61: #{transformer_decoder_forward.1} parent=15 // pred_check
          %p611 = pneg %p344
        $region62: #{transformer_decoder_forward.1} parent=15 // pred_check_branch
          %613 = sbr.rel (%p611) target = $region64
        $region63: #{transformer_decoder_forward.1} parent=15 // pred_region
          %p614 = scmp.lt.s32.totalorder %s34, 1
          %s615 = scalar_select %p614, %s34, 1
          %s616 = smul.addr %s615, 4
          %s617 = smul.addr %s616, 4
          %s618 = scalar_lea.vmem %s11, %s617
        $region64: #{transformer_decoder_forward.1} parent=15 // pred_fallthru
          _
        // Predicated region
        $region65: #{transformer_decoder_forward.1} parent=15 // pred_check
          %p619 = pneg %p370
        $region66: #{transformer_decoder_forward.1} parent=15 // pred_check_branch
          %621 = sbr.rel (%p619) target = $region68
        $region67: #{transformer_decoder_forward.1} parent=15 // pred_region
          %p622 = scmp.lt.s32.totalorder %s34, 1
          %s623 = scalar_select %p622, %s34, 1
          %s624 = scalar_lea.vmem %s12, %s623
        $region68: #{transformer_decoder_forward.1} parent=15 // pred_fallthru
          _
        // Predicated region
        $region69: #{transformer_decoder_forward.1} parent=15 // pred_check
          %p625 = pneg %p396
        $region70: #{transformer_decoder_forward.1} parent=15 // pred_check_branch
          %627 = sbr.rel (%p625) target = $region72
        $region71: #{transformer_decoder_forward.1} parent=15 // pred_region
          %p628 = scmp.lt.s32.totalorder %s34, 1
          %s629 = scalar_select %p628, %s34, 1
          %s630 = smul.addr %s629, 8
          %s631 = smul.addr %s630, 4
          %s632 = scalar_lea.vmem %s13, %s631
        $region72: #{transformer_decoder_forward.1} parent=15 // pred_fallthru
          _
        // Predicated region
        $region73: #{transformer_decoder_forward.1} parent=15 // pred_check
          %p633 = pneg %p422
        $region74: #{transformer_decoder_forward.1} parent=15 // pred_check_branch
          %635 = sbr.rel (%p633) target = $region76
        $region75: #{transformer_decoder_forward.1} parent=15 // pred_region
          %s636 = sand.u32 %s412, 1
          %s637 = scalar_lea.sflag [#allocation5], %s636
          %s638 = sand.u32 %s412, 1
          %s639 = scalar_lea.vmem [#allocation4], %s638
          %s641 = ssub.s32 16, 16
          %642 = vsyncadd %s637, %s641
          %s643 = smul.addr %s34, 16
          %s644 = scalar_lea.hbm %s14, %s643
          %s646 = sshll.u32 %s639, 4
          %s647 = int_to_ptr.vmem [resolvable:$true] %s646
          %649 = dma.hbm_to_vmem [thread:$0]  %s644, 16, %s647, %s637
        $region76: #{transformer_decoder_forward.1} parent=15 // pred_fallthru
          _
        // Predicated region
        $region77: #{transformer_decoder_forward.1} parent=15 // pred_check
          %p650 = pneg %p448
        $region78: #{transformer_decoder_forward.1} parent=15 // pred_check_branch
          %652 = sbr.rel (%p650) target = $region80
        $region79: #{transformer_decoder_forward.1} parent=15 // pred_region
          %p653 = scmp.lt.s32.totalorder %s34, 1
          %s654 = scalar_select %p653, %s34, 1
          %s655 = smul.addr %s654, 4
          %s656 = scalar_lea.vmem %s15, %s655
        $region80: #{transformer_decoder_forward.1} parent=15 // pred_fallthru
          _
        // Predicated region
        $region81: #{transformer_decoder_forward.1} parent=15 // pred_check
          %p657 = pneg %p474
        $region82: #{transformer_decoder_forward.1} parent=15 // pred_check_branch
          %659 = sbr.rel (%p657) target = $region84
        $region83: #{transformer_decoder_forward.1} parent=15 // pred_region
          %p660 = scmp.lt.s32.totalorder %s34, 1
          %s661 = scalar_select %p660, %s34, 1
          %s662 = smul.addr %s661, 4
          %s663 = scalar_lea.vmem %s16, %s662
        $region84: #{transformer_decoder_forward.1} parent=15 // pred_fallthru
          _
      $region16: #{transformer_decoder_forward.1} parent=5 // pred_fallthru
        _
      %p664 = scmp.le.s32.totalorder 1, %s26
      %p665 = scmp.lt.s32.totalorder %s26, 5
      %p666 = pnand %p664, %p665
      %p667 = pneg %p666
      // Predicated region
      $region85: #{transformer_decoder_forward.1} parent=5 // pred_check
        _
      $region86: #{transformer_decoder_forward.1} parent=5 // pred_check_branch
        %669 = sbr.rel (%p666) target = $region88
      $region87: #{transformer_decoder_forward.1} parent=5 // pred_region
        %s670 = ssub.s32 %s26, 1
        %s671 = sand.u32 %s415, 1
        %s672 = scalar_lea.sflag [#allocation5], %s671
        %s673 = sand.u32 %s415, 1
        %s674 = scalar_lea.vmem [#allocation4], %s673
        // Predicated region
        $region89: #{transformer_decoder_forward.1} parent=87 // pred_check
          %p675 = pneg %p428
        $region90: #{transformer_decoder_forward.1} parent=87 // pred_check_branch
          %677 = sbr.rel (%p675) target = $region92
        $region91: #{transformer_decoder_forward.1} parent=87 // pred_region
          %678 = dma.done %s672, 16
        $region92: #{transformer_decoder_forward.1} parent=87 // pred_fallthru
          _
        %p679 = scmp.lt.s32.totalorder %s35, 1
        %s680 = scalar_select %p679, %s35, 1
        %s681 = smul.addr %s680, 8
        %s682 = scalar_lea.vmem %s0, %s681
        %p683 = pneg %p64
        %p684 = pneg %p61
        %p685 = scmp.lt.s32.totalorder %s35, 1
        %s686 = scalar_select %p685, %s35, 1
        %s687 = smul.addr %s686, 2
        %s688 = smul.addr %s687, 4
        %s689 = scalar_lea.vmem %s1, %s688
        %p690 = pneg %p90
        %p691 = pneg %p87
        %p692 = scmp.lt.s32.totalorder %s35, 1
        %s693 = scalar_select %p692, %s35, 1
        %s694 = smul.addr %s693, 2
        %s695 = smul.addr %s694, 4
        %s696 = scalar_lea.vmem %s2, %s695
        %p697 = pneg %p116
        %p698 = pneg %p113
        %p699 = scmp.lt.s32.totalorder %s35, 1
        %s700 = scalar_select %p699, %s35, 1
        %s701 = smul.addr %s700, 8
        %s702 = scalar_lea.vmem %s3, %s701
        %p703 = pneg %p142
        %p704 = pneg %p139
        %p705 = scmp.lt.s32.totalorder %s36, 1
        %s706 = scalar_select %p705, %s36, 1
        %s707 = smul.addr %s706, 4
        %s708 = smul.addr %s707, 4
        %s709 = scalar_lea.vmem %s4, %s708
        %p710 = pneg %p168
        %p711 = pneg %p165
        %p712 = scmp.lt.s32.totalorder %s36, 1
        %s713 = scalar_select %p712, %s36, 1
        %s714 = smul.addr %s713, 4
        %s715 = smul.addr %s714, 4
        %s716 = scalar_lea.vmem %s5, %s715
        %p717 = pneg %p194
        %p718 = pneg %p191
        %p719 = scmp.lt.s32.totalorder %s36, 1
        %s720 = scalar_select %p719, %s36, 1
        %s721 = smul.addr %s720, 4
        %s722 = smul.addr %s721, 4
        %s723 = scalar_lea.vmem %s6, %s722
        %p724 = pneg %p220
        %p725 = pneg %p217
        %p726 = scmp.lt.s32.totalorder %s36, 1
        %s727 = scalar_select %p726, %s36, 1
        %s728 = smul.addr %s727, 4
        %s729 = smul.addr %s728, 4
        %s730 = scalar_lea.vmem %s7, %s729
        %p731 = pneg %p246
        %p732 = pneg %p243
        %p733 = scmp.lt.s32.totalorder %s36, 1
        %s734 = scalar_select %p733, %s36, 1
        %s735 = smul.addr %s734, 4
        %s736 = smul.addr %s735, 4
        %s737 = scalar_lea.vmem %s8, %s736
        %p738 = pneg %p272
        %p739 = pneg %p269
        %p740 = scmp.lt.s32.totalorder %s36, 1
        %s741 = scalar_select %p740, %s36, 1
        %s742 = smul.addr %s741, 4
        %s743 = smul.addr %s742, 4
        %s744 = scalar_lea.vmem %s9, %s743
        %p745 = pneg %p298
        %p746 = pneg %p295
        %p747 = scmp.lt.s32.totalorder %s36, 1
        %s748 = scalar_select %p747, %s36, 1
        %s749 = smul.addr %s748, 4
        %s750 = smul.addr %s749, 4
        %s751 = scalar_lea.vmem %s10, %s750
        %p752 = pneg %p324
        %p753 = pneg %p321
        %p754 = scmp.lt.s32.totalorder %s36, 1
        %s755 = scalar_select %p754, %s36, 1
        %s756 = smul.addr %s755, 4
        %s757 = smul.addr %s756, 4
        %s758 = scalar_lea.vmem %s11, %s757
        %p759 = pneg %p350
        %p760 = pneg %p347
        %p761 = scmp.lt.s32.totalorder %s36, 1
        %s762 = scalar_select %p761, %s36, 1
        %s763 = scalar_lea.vmem %s12, %s762
        %p764 = pneg %p376
        %p765 = pneg %p373
        %p766 = scmp.lt.s32.totalorder %s36, 1
        %s767 = scalar_select %p766, %s36, 1
        %s768 = smul.addr %s767, 8
        %s769 = smul.addr %s768, 4
        %s770 = scalar_lea.vmem %s13, %s769
        %p771 = pneg %p402
        %p772 = pneg %p399
        %s773 = sand.u32 %s415, 1
        %s774 = scalar_lea.sflag [#allocation5], %s773
        %s775 = sand.u32 %s415, 1
        %s776 = scalar_lea.vmem [#allocation4], %s775
        %p777 = pneg %p428
        %p778 = pneg %p425
        %p779 = scmp.lt.s32.totalorder %s36, 1
        %s780 = scalar_select %p779, %s36, 1
        %s781 = smul.addr %s780, 4
        %s782 = scalar_lea.vmem %s15, %s781
        %p783 = pneg %p454
        %p784 = pneg %p451
        %p785 = scmp.lt.s32.totalorder %s36, 1
        %s786 = scalar_select %p785, %s36, 1
        %s787 = smul.addr %s786, 4
        %s788 = scalar_lea.vmem %s16, %s787
        %p789 = pneg %p480
        %p790 = pneg %p477
        %p791 = pneg %p506
        %p792 = pneg %p503
        %p793 = scmp.lt.s32.totalorder %s35, 1
        %s794 = scalar_select %p793, %s35, 1
        %s795 = smul.addr %s794, 8
        %s796 = scalar_lea.vmem %s17, %s795
        %p797 = scmp.lt.s32.totalorder %s35, 1
        %s798 = scalar_select %p797, %s35, 1
        %s799 = smul.addr %s798, 8
        %s800 = scalar_lea.vmem %s0, %s799
        %p801 = scmp.lt.s32.totalorder %s35, 1
        %s802 = scalar_select %p801, %s35, 1
        %s803 = smul.addr %s802, 2
        %s804 = smul.addr %s803, 4
        %s805 = scalar_lea.vmem %s1, %s804
        %p806 = scmp.lt.s32.totalorder %s35, 1
        %s807 = scalar_select %p806, %s35, 1
        %s808 = smul.addr %s807, 2
        %s809 = smul.addr %s808, 4
        %s810 = scalar_lea.vmem %s2, %s809
        %p811 = scmp.lt.s32.totalorder %s35, 1
        %s812 = scalar_select %p811, %s35, 1
        %s813 = smul.addr %s812, 8
        %s814 = scalar_lea.vmem %s3, %s813
        %p815 = scmp.lt.s32.totalorder %s36, 1
        %s816 = scalar_select %p815, %s36, 1
        %s817 = smul.addr %s816, 4
        %s818 = smul.addr %s817, 4
        %s819 = scalar_lea.vmem %s4, %s818
        %p820 = scmp.lt.s32.totalorder %s36, 1
        %s821 = scalar_select %p820, %s36, 1
        %s822 = smul.addr %s821, 4
        %s823 = smul.addr %s822, 4
        %s824 = scalar_lea.vmem %s5, %s823
        %p825 = scmp.lt.s32.totalorder %s36, 1
        %s826 = scalar_select %p825, %s36, 1
        %s827 = smul.addr %s826, 4
        %s828 = smul.addr %s827, 4
        %s829 = scalar_lea.vmem %s6, %s828
        %p830 = scmp.lt.s32.totalorder %s36, 1
        %s831 = scalar_select %p830, %s36, 1
        %s832 = smul.addr %s831, 4
        %s833 = smul.addr %s832, 4
        %s834 = scalar_lea.vmem %s7, %s833
        %p835 = scmp.lt.s32.totalorder %s36, 1
        %s836 = scalar_select %p835, %s36, 1
        %s837 = smul.addr %s836, 4
        %s838 = smul.addr %s837, 4
        %s839 = scalar_lea.vmem %s8, %s838
        %p840 = scmp.lt.s32.totalorder %s36, 1
        %s841 = scalar_select %p840, %s36, 1
        %s842 = smul.addr %s841, 4
        %s843 = smul.addr %s842, 4
        %s844 = scalar_lea.vmem %s9, %s843
        %p845 = scmp.lt.s32.totalorder %s36, 1
        %s846 = scalar_select %p845, %s36, 1
        %s847 = smul.addr %s846, 4
        %s848 = smul.addr %s847, 4
        %s849 = scalar_lea.vmem %s10, %s848
        %p850 = scmp.lt.s32.totalorder %s36, 1
        %s851 = scalar_select %p850, %s36, 1
        %s852 = smul.addr %s851, 4
        %s853 = smul.addr %s852, 4
        %s854 = scalar_lea.vmem %s11, %s853
        %p855 = scmp.lt.s32.totalorder %s36, 1
        %s856 = scalar_select %p855, %s36, 1
        %s857 = scalar_lea.vmem %s12, %s856
        %p858 = scmp.lt.s32.totalorder %s36, 1
        %s859 = scalar_select %p858, %s36, 1
        %s860 = smul.addr %s859, 8
        %s861 = smul.addr %s860, 4
        %s862 = scalar_lea.vmem %s13, %s861
        %p863 = scmp.lt.s32.totalorder %s36, 1
        %s864 = scalar_select %p863, %s36, 1
        %s865 = smul.addr %s864, 4
        %s866 = scalar_lea.vmem %s15, %s865
        %p867 = scmp.lt.s32.totalorder %s36, 1
        %s868 = scalar_select %p867, %s36, 1
        %s869 = smul.addr %s868, 4
        %s870 = scalar_lea.vmem %s16, %s869
        %p871 = scmp.lt.s32.totalorder %s35, 1
        %s872 = scalar_select %p871, %s35, 1
        %s873 = smul.addr %s872, 8
        %s874 = scalar_lea.vmem %s17, %s873
        %p876 = scmp.eq.s32.totalorder %s36, 0
        // Predicated region
        $region93: #{transformer_decoder_forward.1} parent=87 // pred_check
          %p877 = pneg %p876
        $region94: #{transformer_decoder_forward.1} parent=87 // pred_check_branch
          %879 = sbr.rel (%p877) target = $region96
        $region95: #{transformer_decoder_forward.1} parent=87 // pred_region
          %v880 = vld [vmem:[%s800] sm:$0xff]
          %vm881 = vcmask 261120
          %882 = vst.msk [vmem:[#allocation2] sm:$0xff] %vm881, %v880
        $region96: #{transformer_decoder_forward.1} parent=87 // pred_fallthru
          _
        %v883 = vld [vmem:[#allocation2] sm:$0xff]
        %v884 = vld [vmem:[%s814] sm:$0xff]
        %v885 = vld [vmem:[%s805] sm:$0xf]
        %v886 = vld [vmem:[%s805 + $0x4] sm:$0xf]
        %v887 = vld [vmem:[%s810] sm:$0xf]
        %v888 = vld [vmem:[%s810 + $0x4] sm:$0xf]
        %v889 = vld [vmem:[%s866] sm:$0x7]
        %v890 = vld [vmem:[%s870] sm:$0x7]
        %vm891 = vcmask 261120
        %v892 = vsel %vm891, %v883, 0.0
        %893 = vadd.xlane.f32.xlu0 %v892
        %v894 = vpop.xlane.xlu0 %893
        %v895 = vrcp.pop 32.0
        %v896 = vmul.f32 %v894, %v895
        %v897 = vsub.f32 %v883, %v896
        %v898 = vmul.f32 %v897, %v897
        %v899 = vsel %vm891, %v898, 0.0
        %900 = vadd.xlane.f32.xlu0 %v899
        %v901 = vpop.xlane.xlu0 %900
        %v902 = vmul.f32 %v901, %v895
        %v903 = vadd.f32 %v902, 1e-05
        %v904 = vrsqrt.pop %v903
        %v905 = vmul.f32 %v897, %v904
        %v906 = vlaneseq
        %v907 = vshrl.u32 %v906, 7
        %v908 = vsub.s32 0, %v907
        %v909 = vrot.slane %v889, %v908
        %v910 = vmul.f32 %v905, %v909
        %v911 = vlaneseq
        %v912 = vshrl.u32 %v911, 7
        %v913 = vsub.s32 0, %v912
        %v914 = vrot.slane %v890, %v913
        %v915 = vadd.f32 %v910, %v914
        %v916 = vpack.c.bf16 %v915, %v915
        %v917 = vadd.f32 %v915, %v884
        %v918 = vpack.c.bf16 %v917, %v917
        %v919 = vld [vmem:[%s819] sm:$0xf]
        %v920 = vld [vmem:[%s819 + $0x4] sm:$0xf]
        %v921 = vld [vmem:[%s819 + $0x8] sm:$0xf]
        %v922 = vld [vmem:[%s819 + $0xc] sm:$0xf]
        %v927 = vunpack.c.l.b16 %v919
        %v928 = vunpack.c.l.b16 %v920
        %v929 = vunpack.c.l.b16 %v921
        %v930 = vunpack.c.l.b16 %v922
        %v931 = vpack.c.b16 %v928, %v927
        %v932 = vpack.c.b16 %v930, %v929
        %v936 = vsel %vm891, %v918, 0
        %938 = vmatprep.subr.bf16.mxu0 0
        %939 = vmatpush1.bf16.msra.mxu0 %v931
        %940 = vmatprep.subr.bf16.mxu0 0
        %941 = vmatpush1.bf16.msra.mxu0 %v932
        %942 = vmatprep.subr.bf16.mxu0 0
        %943 = vmatpush1.bf16.msra.mxu0 0
        %944 = vmatprep.subr.bf16.mxu0 0
        %945 = vmatpush1.bf16.msra.mxu0 0
        %946 = vmatprep.subr.bf16.mxu0 0
        %947 = vmatpush1.bf16.msra.mxu0 0
        %948 = vmatprep.subr.bf16.mxu0 0
        %949 = vmatpush1.bf16.msra.mxu0 0
        %950 = vmatprep.subr.bf16.mxu0 0
        %951 = vmatpush1.bf16.msra.mxu0 0
        %952 = vmatprep.subr.bf16.mxu0 0
        %953 = vmatpush1.bf16.msra.mxu0 0
        %954 = vmatprep.subr.bf16.mxu0 0
        %955 = vmatpush1.bf16.msra.mxu0 0
        %956 = vmatprep.subr.bf16.mxu0 0
        %957 = vmatpush1.bf16.msra.mxu0 0
        %958 = vmatprep.subr.bf16.mxu0 0
        %959 = vmatpush1.bf16.msra.mxu0 0
        %960 = vmatprep.subr.bf16.mxu0 0
        %961 = vmatpush1.bf16.msra.mxu0 0
        %962 = vmatprep.subr.bf16.mxu0 0
        %963 = vmatpush1.bf16.msra.mxu0 0
        %964 = vmatprep.subr.bf16.mxu0 0
        %965 = vmatpush1.bf16.msra.mxu0 0
        %966 = vmatprep.subr.bf16.mxu0 0
        %967 = vmatpush1.bf16.msra.mxu0 0
        %968 = vmatprep.subr.bf16.mxu0 0
        %969 = vmatpush1.bf16.msra.mxu0 0
        %970 = vmatprep.mubr.bf16.mxu0 0
        %971 = vmatmul.mubr.bf16.gmra.mrb[0].mxu0 %v936
        %v972 = vpop.f32.mrb[0].mxu0
        %v973 = vadd.f32 0.0, %v972
        %v974 = vpop.f32.mrb[0].mxu0
        %v975 = vpop.f32.mrb[0].mxu0
        %v976 = vpop.f32.mrb[0].mxu0
        %977 = vdwg.mxu0
        %v978 = vpack.c.bf16 %v973, %v973
        %v979 = vld [vmem:[%s824] sm:$0xf]
        %v980 = vld [vmem:[%s824 + $0x4] sm:$0xf]
        %v981 = vld [vmem:[%s824 + $0x8] sm:$0xf]
        %v982 = vld [vmem:[%s824 + $0xc] sm:$0xf]
        %v987 = vunpack.c.l.b16 %v979
        %v988 = vunpack.c.l.b16 %v980
        %v989 = vunpack.c.l.b16 %v981
        %v990 = vunpack.c.l.b16 %v982
        %v991 = vpack.c.b16 %v988, %v987
        %v992 = vpack.c.b16 %v990, %v989
        %v996 = vsel %vm891, %v916, 0
        %998 = vmatprep.subr.bf16.mxu0 0
        %999 = vmatpush1.bf16.msra.mxu0 %v991
        %1000 = vmatprep.subr.bf16.mxu0 0
        %1001 = vmatpush1.bf16.msra.mxu0 %v992
        %1002 = vmatprep.subr.bf16.mxu0 0
        %1003 = vmatpush1.bf16.msra.mxu0 0
        %1004 = vmatprep.subr.bf16.mxu0 0
        %1005 = vmatpush1.bf16.msra.mxu0 0
        %1006 = vmatprep.subr.bf16.mxu0 0
        %1007 = vmatpush1.bf16.msra.mxu0 0
        %1008 = vmatprep.subr.bf16.mxu0 0
        %1009 = vmatpush1.bf16.msra.mxu0 0
        %1010 = vmatprep.subr.bf16.mxu0 0
        %1011 = vmatpush1.bf16.msra.mxu0 0
        %1012 = vmatprep.subr.bf16.mxu0 0
        %1013 = vmatpush1.bf16.msra.mxu0 0
        %1014 = vmatprep.subr.bf16.mxu0 0
        %1015 = vmatpush1.bf16.msra.mxu0 0
        %1016 = vmatprep.subr.bf16.mxu0 0
        %1017 = vmatpush1.bf16.msra.mxu0 0
        %1018 = vmatprep.subr.bf16.mxu0 0
        %1019 = vmatpush1.bf16.msra.mxu0 0
        %1020 = vmatprep.subr.bf16.mxu0 0
        %1021 = vmatpush1.bf16.msra.mxu0 0
        %1022 = vmatprep.subr.bf16.mxu0 0
        %1023 = vmatpush1.bf16.msra.mxu0 0
        %1024 = vmatprep.subr.bf16.mxu0 0
        %1025 = vmatpush1.bf16.msra.mxu0 0
        %1026 = vmatprep.subr.bf16.mxu0 0
        %1027 = vmatpush1.bf16.msra.mxu0 0
        %1028 = vmatprep.subr.bf16.mxu0 0
        %1029 = vmatpush1.bf16.msra.mxu0 0
        %1030 = vmatprep.mubr.bf16.mxu0 0
        %1031 = vmatmul.mubr.bf16.gmra.mrb[0].mxu0 %v996
        %v1032 = vpop.f32.mrb[0].mxu0
        %v1033 = vadd.f32 0.0, %v1032
        %v1034 = vpop.f32.mrb[0].mxu0
        %v1035 = vpop.f32.mrb[0].mxu0
        %v1036 = vpop.f32.mrb[0].mxu0
        %1037 = vdwg.mxu0
        %v1038 = vpack.c.bf16 %v1033, %v1033
        %v1039 = vld [vmem:[%s829] sm:$0xf]
        %v1040 = vld [vmem:[%s829 + $0x4] sm:$0xf]
        %v1041 = vld [vmem:[%s829 + $0x8] sm:$0xf]
        %v1042 = vld [vmem:[%s829 + $0xc] sm:$0xf]
        %1044 = vrot.lane.b32.xlu0 %v978, 96
        %v1045 = vpop.permute.xlu0 %1044
        %vm1046 = vcmask 64512
        %v1048 = vsel %vm1046, %v978, 0
        %v1051 = vsel %vm1046, %v1045, 0
        %1053 = vmatprep.subr.bf16.mxu0 0
        %1054 = vmatpush1.bf16.xpose.msra.mxu0 %v1051
        %1055 = vmatprep.subr.bf16.mxu0 0
        %1056 = vmatpush1.bf16.xpose.msra.mxu0 0
        %1057 = vmatprep.subr.bf16.mxu0 0
        %1058 = vmatpush1.bf16.xpose.msra.mxu0 0
        %1059 = vmatprep.subr.bf16.mxu0 0
        %1060 = vmatpush1.bf16.xpose.msra.mxu0 0
        %1061 = vmatprep.subr.bf16.mxu0 0
        %1062 = vmatpush1.bf16.xpose.msra.mxu0 0
        %1063 = vmatprep.subr.bf16.mxu0 0
        %1064 = vmatpush1.bf16.xpose.msra.mxu0 0
        %1065 = vmatprep.subr.bf16.mxu0 0
        %1066 = vmatpush1.bf16.xpose.msra.mxu0 0
        %1067 = vmatprep.subr.bf16.mxu0 0
        %1068 = vmatpush1.bf16.xpose.msra.mxu0 0
        %1069 = vmatprep.subr.bf16.mxu0 0
        %1070 = vmatpush1.bf16.xpose.msra.mxu0 0
        %1071 = vmatprep.subr.bf16.mxu0 0
        %1072 = vmatpush1.bf16.xpose.msra.mxu0 0
        %1073 = vmatprep.subr.bf16.mxu0 0
        %1074 = vmatpush1.bf16.xpose.msra.mxu0 0
        %1075 = vmatprep.subr.bf16.mxu0 0
        %1076 = vmatpush1.bf16.xpose.msra.mxu0 0
        %1077 = vmatprep.subr.bf16.mxu0 0
        %1078 = vmatpush1.bf16.xpose.msra.mxu0 0
        %1079 = vmatprep.subr.bf16.mxu0 0
        %1080 = vmatpush1.bf16.xpose.msra.mxu0 0
        %1081 = vmatprep.subr.bf16.mxu0 0
        %1082 = vmatpush1.bf16.xpose.msra.mxu0 0
        %1083 = vmatprep.subr.bf16.mxu0 0
        %1084 = vmatpush1.bf16.xpose.msra.mxu0 0
        %1085 = vmatprep.mubr.bf16.mxu0 0
        %1086 = vmatmul.mubr.bf16.gmra.mrb[0].mxu0 %v1048
        %v1087 = vpop.f32.mrb[0].mxu0
        %v1088 = vadd.f32 0.0, %v1087
        %v1089 = vpop.f32.mrb[0].mxu0
        %v1090 = vpop.f32.mrb[0].mxu0
        %v1091 = vpop.f32.mrb[0].mxu0
        %1092 = vdwg.mxu0
        %v1093 = vsel %vm1046, %v1088, -inf
        %1094 = vmax.xlane.f32.xlu0 %v1093
        %v1095 = vpop.xlane.xlu0 %1094
        %v1096 = vsub.f32 %v1088, %v1095
        %v1097 = vmul.f32 %v1096, 1.442695
        %v1098 = vpow.pop %v1097
        %v1099 = vsel %vm1046, %v1098, 0.0
        %1100 = vadd.xlane.f32.xlu0 %v1099
        %v1101 = vpop.xlane.xlu0 %1100
        %v1102 = vrcp.pop %v1101
        %v1103 = vmul.f32 %v1098, %v1102
        %v1104 = vpack.c.bf16 %v1103, %v1103
        %v1106 = vsel %vm1046, %v1104, 0
        %vm1108 = vcmask 1043456
        %v1110 = vsel %vm1108, %v1038, 0
        %1112 = vmatprep.subr.bf16.mxu0 0
        %1113 = vmatpush1.bf16.msra.mxu0 %v1110
        %1114 = vmatprep.subr.bf16.mxu0 0
        %1115 = vmatpush1.bf16.msra.mxu0 0
        %1116 = vmatprep.subr.bf16.mxu0 0
        %1117 = vmatpush1.bf16.msra.mxu0 0
        %1118 = vmatprep.subr.bf16.mxu0 0
        %1119 = vmatpush1.bf16.msra.mxu0 0
        %1120 = vmatprep.subr.bf16.mxu0 0
        %1121 = vmatpush1.bf16.msra.mxu0 0
        %1122 = vmatprep.subr.bf16.mxu0 0
        %1123 = vmatpush1.bf16.msra.mxu0 0
        %1124 = vmatprep.subr.bf16.mxu0 0
        %1125 = vmatpush1.bf16.msra.mxu0 0
        %1126 = vmatprep.subr.bf16.mxu0 0
        %1127 = vmatpush1.bf16.msra.mxu0 0
        %1128 = vmatprep.subr.bf16.mxu0 0
        %1129 = vmatpush1.bf16.msra.mxu0 0
        %1130 = vmatprep.subr.bf16.mxu0 0
        %1131 = vmatpush1.bf16.msra.mxu0 0
        %1132 = vmatprep.subr.bf16.mxu0 0
        %1133 = vmatpush1.bf16.msra.mxu0 0
        %1134 = vmatprep.subr.bf16.mxu0 0
        %1135 = vmatpush1.bf16.msra.mxu0 0
        %1136 = vmatprep.subr.bf16.mxu0 0
        %1137 = vmatpush1.bf16.msra.mxu0 0
        %1138 = vmatprep.subr.bf16.mxu0 0
        %1139 = vmatpush1.bf16.msra.mxu0 0
        %1140 = vmatprep.subr.bf16.mxu0 0
        %1141 = vmatpush1.bf16.msra.mxu0 0
        %1142 = vmatprep.subr.bf16.mxu0 0
        %1143 = vmatpush1.bf16.msra.mxu0 0
        %1144 = vmatprep.mubr.bf16.mxu0 0
        %1145 = vmatmul.mubr.bf16.gmra.mrb[0].mxu0 %v1106
        %v1146 = vpop.f32.mrb[0].mxu0
        %v1147 = vadd.f32 0.0, %v1146
        %v1148 = vpop.f32.mrb[0].mxu0
        %v1149 = vpop.f32.mrb[0].mxu0
        %v1150 = vpop.f32.mrb[0].mxu0
        %1151 = vdwg.mxu0
        %1152 = vst.msk [vmem:[#allocation3] sm:$0xff] %vm1046, %v1147
        %1153 = vrot.lane.b32.xlu0 %v978, 120
        %v1154 = vpop.permute.xlu0 %1153
        %1155 = vrot.lane.b32.xlu0 %v978, 88
        %v1156 = vpop.permute.xlu0 %1155
        %v1158 = vsel %vm1046, %v1154, 0
        %v1161 = vsel %vm1046, %v1156, 0
        %1163 = vmatprep.subr.bf16.mxu0 0
        %1164 = vmatpush1.bf16.xpose.msra.mxu0 %v1161
        %1165 = vmatprep.subr.bf16.mxu0 0
        %1166 = vmatpush1.bf16.xpose.msra.mxu0 0
        %1167 = vmatprep.subr.bf16.mxu0 0
        %1168 = vmatpush1.bf16.xpose.msra.mxu0 0
        %1169 = vmatprep.subr.bf16.mxu0 0
        %1170 = vmatpush1.bf16.xpose.msra.mxu0 0
        %1171 = vmatprep.subr.bf16.mxu0 0
        %1172 = vmatpush1.bf16.xpose.msra.mxu0 0
        %1173 = vmatprep.subr.bf16.mxu0 0
        %1174 = vmatpush1.bf16.xpose.msra.mxu0 0
        %1175 = vmatprep.subr.bf16.mxu0 0
        %1176 = vmatpush1.bf16.xpose.msra.mxu0 0
        %1177 = vmatprep.subr.bf16.mxu0 0
        %1178 = vmatpush1.bf16.xpose.msra.mxu0 0
        %1179 = vmatprep.subr.bf16.mxu0 0
        %1180 = vmatpush1.bf16.xpose.msra.mxu0 0
        %1181 = vmatprep.subr.bf16.mxu0 0
        %1182 = vmatpush1.bf16.xpose.msra.mxu0 0
        %1183 = vmatprep.subr.bf16.mxu0 0
        %1184 = vmatpush1.bf16.xpose.msra.mxu0 0
        %1185 = vmatprep.subr.bf16.mxu0 0
        %1186 = vmatpush1.bf16.xpose.msra.mxu0 0
        %1187 = vmatprep.subr.bf16.mxu0 0
        %1188 = vmatpush1.bf16.xpose.msra.mxu0 0
        %1189 = vmatprep.subr.bf16.mxu0 0
        %1190 = vmatpush1.bf16.xpose.msra.mxu0 0
        %1191 = vmatprep.subr.bf16.mxu0 0
        %1192 = vmatpush1.bf16.xpose.msra.mxu0 0
        %1193 = vmatprep.subr.bf16.mxu0 0
        %1194 = vmatpush1.bf16.xpose.msra.mxu0 0
        %1195 = vmatprep.mubr.bf16.mxu0 0
        %1196 = vmatmul.mubr.bf16.gmra.mrb[0].mxu0 %v1158
        %v1197 = vpop.f32.mrb[0].mxu0
        %v1198 = vadd.f32 0.0, %v1197
        %v1199 = vpop.f32.mrb[0].mxu0
        %v1200 = vpop.f32.mrb[0].mxu0
        %v1201 = vpop.f32.mrb[0].mxu0
        %1202 = vdwg.mxu0
        %v1203 = vsel %vm1046, %v1198, -inf
        %1204 = vmax.xlane.f32.xlu0 %v1203
        %v1205 = vpop.xlane.xlu0 %1204
        %v1206 = vsub.f32 %v1198, %v1205
        %v1207 = vmul.f32 %v1206, 1.442695
        %v1208 = vpow.pop %v1207
        %v1209 = vsel %vm1046, %v1208, 0.0
        %1210 = vadd.xlane.f32.xlu0 %v1209
        %v1211 = vpop.xlane.xlu0 %1210
        %v1212 = vrcp.pop %v1211
        %v1213 = vmul.f32 %v1208, %v1212
        %v1214 = vpack.c.bf16 %v1213, %v1213
        %1216 = vrot.lane.b32.xlu0 %v1038, 120
        %v1217 = vpop.permute.xlu0 %1216
        %v1219 = vsel %vm1046, %v1214, 0
        %v1222 = vsel %vm1108, %v1217, 0
        %1224 = vmatprep.subr.bf16.mxu0 0
        %1225 = vmatpush1.bf16.msra.mxu0 %v1222
        %1226 = vmatprep.subr.bf16.mxu0 0
        %1227 = vmatpush1.bf16.msra.mxu0 0
        %1228 = vmatprep.subr.bf16.mxu0 0
        %1229 = vmatpush1.bf16.msra.mxu0 0
        %1230 = vmatprep.subr.bf16.mxu0 0
        %1231 = vmatpush1.bf16.msra.mxu0 0
        %1232 = vmatprep.subr.bf16.mxu0 0
        %1233 = vmatpush1.bf16.msra.mxu0 0
        %1234 = vmatprep.subr.bf16.mxu0 0
        %1235 = vmatpush1.bf16.msra.mxu0 0
        %1236 = vmatprep.subr.bf16.mxu0 0
        %1237 = vmatpush1.bf16.msra.mxu0 0
        %1238 = vmatprep.subr.bf16.mxu0 0
        %1239 = vmatpush1.bf16.msra.mxu0 0
        %1240 = vmatprep.subr.bf16.mxu0 0
        %1241 = vmatpush1.bf16.msra.mxu0 0
        %1242 = vmatprep.subr.bf16.mxu0 0
        %1243 = vmatpush1.bf16.msra.mxu0 0
        %1244 = vmatprep.subr.bf16.mxu0 0
        %1245 = vmatpush1.bf16.msra.mxu0 0
        %1246 = vmatprep.subr.bf16.mxu0 0
        %1247 = vmatpush1.bf16.msra.mxu0 0
        %1248 = vmatprep.subr.bf16.mxu0 0
        %1249 = vmatpush1.bf16.msra.mxu0 0
        %1250 = vmatprep.subr.bf16.mxu0 0
        %1251 = vmatpush1.bf16.msra.mxu0 0
        %1252 = vmatprep.subr.bf16.mxu0 0
        %1253 = vmatpush1.bf16.msra.mxu0 0
        %1254 = vmatprep.subr.bf16.mxu0 0
        %1255 = vmatpush1.bf16.msra.mxu0 0
        %1256 = vmatprep.mubr.bf16.mxu0 0
        %1257 = vmatmul.mubr.bf16.gmra.mrb[0].mxu0 %v1219
        %v1258 = vpop.f32.mrb[0].mxu0
        %v1259 = vadd.f32 0.0, %v1258
        %v1260 = vpop.f32.mrb[0].mxu0
        %v1261 = vpop.f32.mrb[0].mxu0
        %v1262 = vpop.f32.mrb[0].mxu0
        %1263 = vdwg.mxu0
        %1265 = vrot.lane.b32.xlu0 %v1259, 8
        %v1266 = vpop.permute.xlu0 %1265
        %vm1268 = vcmask 130112
        %1269 = vst.msk [vmem:[#allocation3] sm:$0xff] %vm1268, %v1266
        %1270 = vrot.lane.b32.xlu0 %v978, 112
        %v1271 = vpop.permute.xlu0 %1270
        %1272 = vrot.lane.b32.xlu0 %v978, 80
        %v1273 = vpop.permute.xlu0 %1272
        %v1275 = vsel %vm1046, %v1271, 0
        %v1278 = vsel %vm1046, %v1273, 0
        %1280 = vmatprep.subr.bf16.mxu0 0
        %1281 = vmatpush1.bf16.xpose.msra.mxu0 %v1278
        %1282 = vmatprep.subr.bf16.mxu0 0
        %1283 = vmatpush1.bf16.xpose.msra.mxu0 0
        %1284 = vmatprep.subr.bf16.mxu0 0
        %1285 = vmatpush1.bf16.xpose.msra.mxu0 0
        %1286 = vmatprep.subr.bf16.mxu0 0
        %1287 = vmatpush1.bf16.xpose.msra.mxu0 0
        %1288 = vmatprep.subr.bf16.mxu0 0
        %1289 = vmatpush1.bf16.xpose.msra.mxu0 0
        %1290 = vmatprep.subr.bf16.mxu0 0
        %1291 = vmatpush1.bf16.xpose.msra.mxu0 0
        %1292 = vmatprep.subr.bf16.mxu0 0
        %1293 = vmatpush1.bf16.xpose.msra.mxu0 0
        %1294 = vmatprep.subr.bf16.mxu0 0
        %1295 = vmatpush1.bf16.xpose.msra.mxu0 0
        %1296 = vmatprep.subr.bf16.mxu0 0
        %1297 = vmatpush1.bf16.xpose.msra.mxu0 0
        %1298 = vmatprep.subr.bf16.mxu0 0
        %1299 = vmatpush1.bf16.xpose.msra.mxu0 0
        %1300 = vmatprep.subr.bf16.mxu0 0
        %1301 = vmatpush1.bf16.xpose.msra.mxu0 0
        %1302 = vmatprep.subr.bf16.mxu0 0
        %1303 = vmatpush1.bf16.xpose.msra.mxu0 0
        %1304 = vmatprep.subr.bf16.mxu0 0
        %1305 = vmatpush1.bf16.xpose.msra.mxu0 0
        %1306 = vmatprep.subr.bf16.mxu0 0
        %1307 = vmatpush1.bf16.xpose.msra.mxu0 0
        %1308 = vmatprep.subr.bf16.mxu0 0
        %1309 = vmatpush1.bf16.xpose.msra.mxu0 0
        %1310 = vmatprep.subr.bf16.mxu0 0
        %1311 = vmatpush1.bf16.xpose.msra.mxu0 0
        %1312 = vmatprep.mubr.bf16.mxu0 0
        %1313 = vmatmul.mubr.bf16.gmra.mrb[0].mxu0 %v1275
        %v1314 = vpop.f32.mrb[0].mxu0
        %v1315 = vadd.f32 0.0, %v1314
        %v1316 = vpop.f32.mrb[0].mxu0
        %v1317 = vpop.f32.mrb[0].mxu0
        %v1318 = vpop.f32.mrb[0].mxu0
        %1319 = vdwg.mxu0
        %v1320 = vsel %vm1046, %v1315, -inf
        %1321 = vmax.xlane.f32.xlu0 %v1320
        %v1322 = vpop.xlane.xlu0 %1321
        %v1323 = vsub.f32 %v1315, %v1322
        %v1324 = vmul.f32 %v1323, 1.442695
        %v1325 = vpow.pop %v1324
        %v1326 = vsel %vm1046, %v1325, 0.0
        %1327 = vadd.xlane.f32.xlu0 %v1326
        %v1328 = vpop.xlane.xlu0 %1327
        %v1329 = vrcp.pop %v1328
        %v1330 = vmul.f32 %v1325, %v1329
        %v1331 = vpack.c.bf16 %v1330, %v1330
        %1332 = vrot.lane.b32.xlu0 %v1038, 112
        %v1333 = vpop.permute.xlu0 %1332
        %v1335 = vsel %vm1046, %v1331, 0
        %v1338 = vsel %vm1108, %v1333, 0
        %1340 = vmatprep.subr.bf16.mxu0 0
        %1341 = vmatpush1.bf16.msra.mxu0 %v1338
        %1342 = vmatprep.subr.bf16.mxu0 0
        %1343 = vmatpush1.bf16.msra.mxu0 0
        %1344 = vmatprep.subr.bf16.mxu0 0
        %1345 = vmatpush1.bf16.msra.mxu0 0
        %1346 = vmatprep.subr.bf16.mxu0 0
        %1347 = vmatpush1.bf16.msra.mxu0 0
        %1348 = vmatprep.subr.bf16.mxu0 0
        %1349 = vmatpush1.bf16.msra.mxu0 0
        %1350 = vmatprep.subr.bf16.mxu0 0
        %1351 = vmatpush1.bf16.msra.mxu0 0
        %1352 = vmatprep.subr.bf16.mxu0 0
        %1353 = vmatpush1.bf16.msra.mxu0 0
        %1354 = vmatprep.subr.bf16.mxu0 0
        %1355 = vmatpush1.bf16.msra.mxu0 0
        %1356 = vmatprep.subr.bf16.mxu0 0
        %1357 = vmatpush1.bf16.msra.mxu0 0
        %1358 = vmatprep.subr.bf16.mxu0 0
        %1359 = vmatpush1.bf16.msra.mxu0 0
        %1360 = vmatprep.subr.bf16.mxu0 0
        %1361 = vmatpush1.bf16.msra.mxu0 0
        %1362 = vmatprep.subr.bf16.mxu0 0
        %1363 = vmatpush1.bf16.msra.mxu0 0
        %1364 = vmatprep.subr.bf16.mxu0 0
        %1365 = vmatpush1.bf16.msra.mxu0 0
        %1366 = vmatprep.subr.bf16.mxu0 0
        %1367 = vmatpush1.bf16.msra.mxu0 0
        %1368 = vmatprep.subr.bf16.mxu0 0
        %1369 = vmatpush1.bf16.msra.mxu0 0
        %1370 = vmatprep.subr.bf16.mxu0 0
        %1371 = vmatpush1.bf16.msra.mxu0 0
        %1372 = vmatprep.mubr.bf16.mxu0 0
        %1373 = vmatmul.mubr.bf16.gmra.mrb[0].mxu0 %v1335
        %v1374 = vpop.f32.mrb[0].mxu0
        %v1375 = vadd.f32 0.0, %v1374
        %v1376 = vpop.f32.mrb[0].mxu0
        %v1377 = vpop.f32.mrb[0].mxu0
        %v1378 = vpop.f32.mrb[0].mxu0
        %1379 = vdwg.mxu0
        %1381 = vrot.lane.b32.xlu0 %v1375, 16
        %v1382 = vpop.permute.xlu0 %1381
        %vm1384 = vcmask 195712
        %1385 = vst.msk [vmem:[#allocation3] sm:$0xff] %vm1384, %v1382
        %1386 = vrot.lane.b32.xlu0 %v978, 104
        %v1387 = vpop.permute.xlu0 %1386
        %1388 = vrot.lane.b32.xlu0 %v978, 72
        %v1389 = vpop.permute.xlu0 %1388
        %v1391 = vsel %vm1046, %v1387, 0
        %v1394 = vsel %vm1046, %v1389, 0
        %1396 = vmatprep.subr.bf16.mxu0 0
        %1397 = vmatpush1.bf16.xpose.msra.mxu0 %v1394
        %1398 = vmatprep.subr.bf16.mxu0 0
        %1399 = vmatpush1.bf16.xpose.msra.mxu0 0
        %1400 = vmatprep.subr.bf16.mxu0 0
        %1401 = vmatpush1.bf16.xpose.msra.mxu0 0
        %1402 = vmatprep.subr.bf16.mxu0 0
        %1403 = vmatpush1.bf16.xpose.msra.mxu0 0
        %1404 = vmatprep.subr.bf16.mxu0 0
        %1405 = vmatpush1.bf16.xpose.msra.mxu0 0
        %1406 = vmatprep.subr.bf16.mxu0 0
        %1407 = vmatpush1.bf16.xpose.msra.mxu0 0
        %1408 = vmatprep.subr.bf16.mxu0 0
        %1409 = vmatpush1.bf16.xpose.msra.mxu0 0
        %1410 = vmatprep.subr.bf16.mxu0 0
        %1411 = vmatpush1.bf16.xpose.msra.mxu0 0
        %1412 = vmatprep.subr.bf16.mxu0 0
        %1413 = vmatpush1.bf16.xpose.msra.mxu0 0
        %1414 = vmatprep.subr.bf16.mxu0 0
        %1415 = vmatpush1.bf16.xpose.msra.mxu0 0
        %1416 = vmatprep.subr.bf16.mxu0 0
        %1417 = vmatpush1.bf16.xpose.msra.mxu0 0
        %1418 = vmatprep.subr.bf16.mxu0 0
        %1419 = vmatpush1.bf16.xpose.msra.mxu0 0
        %1420 = vmatprep.subr.bf16.mxu0 0
        %1421 = vmatpush1.bf16.xpose.msra.mxu0 0
        %1422 = vmatprep.subr.bf16.mxu0 0
        %1423 = vmatpush1.bf16.xpose.msra.mxu0 0
        %1424 = vmatprep.subr.bf16.mxu0 0
        %1425 = vmatpush1.bf16.xpose.msra.mxu0 0
        %1426 = vmatprep.subr.bf16.mxu0 0
        %1427 = vmatpush1.bf16.xpose.msra.mxu0 0
        %1428 = vmatprep.mubr.bf16.mxu0 0
        %1429 = vmatmul.mubr.bf16.gmra.mrb[0].mxu0 %v1391
        %v1430 = vpop.f32.mrb[0].mxu0
        %v1431 = vadd.f32 0.0, %v1430
        %v1432 = vpop.f32.mrb[0].mxu0
        %v1433 = vpop.f32.mrb[0].mxu0
        %v1434 = vpop.f32.mrb[0].mxu0
        %1435 = vdwg.mxu0
        %v1436 = vsel %vm1046, %v1431, -inf
        %1437 = vmax.xlane.f32.xlu0 %v1436
        %v1438 = vpop.xlane.xlu0 %1437
        %v1439 = vsub.f32 %v1431, %v1438
        %v1440 = vmul.f32 %v1439, 1.442695
        %v1441 = vpow.pop %v1440
        %v1442 = vsel %vm1046, %v1441, 0.0
        %1443 = vadd.xlane.f32.xlu0 %v1442
        %v1444 = vpop.xlane.xlu0 %1443
        %v1445 = vrcp.pop %v1444
        %v1446 = vmul.f32 %v1441, %v1445
        %v1447 = vpack.c.bf16 %v1446, %v1446
        %1448 = vrot.lane.b32.xlu0 %v1038, 104
        %v1449 = vpop.permute.xlu0 %1448
        %v1451 = vsel %vm1046, %v1447, 0
        %v1454 = vsel %vm1108, %v1449, 0
        %1456 = vmatprep.subr.bf16.mxu0 0
        %1457 = vmatpush1.bf16.msra.mxu0 %v1454
        %1458 = vmatprep.subr.bf16.mxu0 0
        %1459 = vmatpush1.bf16.msra.mxu0 0
        %1460 = vmatprep.subr.bf16.mxu0 0
        %1461 = vmatpush1.bf16.msra.mxu0 0
        %1462 = vmatprep.subr.bf16.mxu0 0
        %1463 = vmatpush1.bf16.msra.mxu0 0
        %1464 = vmatprep.subr.bf16.mxu0 0
        %1465 = vmatpush1.bf16.msra.mxu0 0
        %1466 = vmatprep.subr.bf16.mxu0 0
        %1467 = vmatpush1.bf16.msra.mxu0 0
        %1468 = vmatprep.subr.bf16.mxu0 0
        %1469 = vmatpush1.bf16.msra.mxu0 0
        %1470 = vmatprep.subr.bf16.mxu0 0
        %1471 = vmatpush1.bf16.msra.mxu0 0
        %1472 = vmatprep.subr.bf16.mxu0 0
        %1473 = vmatpush1.bf16.msra.mxu0 0
        %1474 = vmatprep.subr.bf16.mxu0 0
        %1475 = vmatpush1.bf16.msra.mxu0 0
        %1476 = vmatprep.subr.bf16.mxu0 0
        %1477 = vmatpush1.bf16.msra.mxu0 0
        %1478 = vmatprep.subr.bf16.mxu0 0
        %1479 = vmatpush1.bf16.msra.mxu0 0
        %1480 = vmatprep.subr.bf16.mxu0 0
        %1481 = vmatpush1.bf16.msra.mxu0 0
        %1482 = vmatprep.subr.bf16.mxu0 0
        %1483 = vmatpush1.bf16.msra.mxu0 0
        %1484 = vmatprep.subr.bf16.mxu0 0
        %1485 = vmatpush1.bf16.msra.mxu0 0
        %1486 = vmatprep.subr.bf16.mxu0 0
        %1487 = vmatpush1.bf16.msra.mxu0 0
        %1488 = vmatprep.mubr.bf16.mxu0 0
        %1489 = vmatmul.mubr.bf16.gmra.mrb[0].mxu0 %v1451
        %v1490 = vpop.f32.mrb[0].mxu0
        %v1491 = vadd.f32 0.0, %v1490
        %v1492 = vpop.f32.mrb[0].mxu0
        %v1493 = vpop.f32.mrb[0].mxu0
        %v1494 = vpop.f32.mrb[0].mxu0
        %1495 = vdwg.mxu0
        %1497 = vrot.lane.b32.xlu0 %v1491, 24
        %v1498 = vpop.permute.xlu0 %1497
        %vm1500 = vcmask 261312
        %1501 = vst.msk [vmem:[#allocation3] sm:$0xff] %vm1500, %v1498
        %v1502 = vld [vmem:[#allocation3] sm:$0xff]
        %v1503 = vpack.c.bf16 %v1502, %v1502
        %v1508 = vunpack.c.l.b16 %v1039
        %v1509 = vunpack.c.l.b16 %v1040
        %v1510 = vunpack.c.l.b16 %v1041
        %v1511 = vunpack.c.l.b16 %v1042
        %v1512 = vpack.c.b16 %v1509, %v1508
        %v1513 = vpack.c.b16 %v1511, %v1510
        %v1517 = vsel %vm891, %v1503, 0
        %1519 = vmatprep.subr.bf16.mxu0 0
        %1520 = vmatpush1.bf16.msra.mxu0 %v1512
        %1521 = vmatprep.subr.bf16.mxu0 0
        %1522 = vmatpush1.bf16.msra.mxu0 %v1513
        %1523 = vmatprep.subr.bf16.mxu0 0
        %1524 = vmatpush1.bf16.msra.mxu0 0
        %1525 = vmatprep.subr.bf16.mxu0 0
        %1526 = vmatpush1.bf16.msra.mxu0 0
        %1527 = vmatprep.subr.bf16.mxu0 0
        %1528 = vmatpush1.bf16.msra.mxu0 0
        %1529 = vmatprep.subr.bf16.mxu0 0
        %1530 = vmatpush1.bf16.msra.mxu0 0
        %1531 = vmatprep.subr.bf16.mxu0 0
        %1532 = vmatpush1.bf16.msra.mxu0 0
        %1533 = vmatprep.subr.bf16.mxu0 0
        %1534 = vmatpush1.bf16.msra.mxu0 0
        %1535 = vmatprep.subr.bf16.mxu0 0
        %1536 = vmatpush1.bf16.msra.mxu0 0
        %1537 = vmatprep.subr.bf16.mxu0 0
        %1538 = vmatpush1.bf16.msra.mxu0 0
        %1539 = vmatprep.subr.bf16.mxu0 0
        %1540 = vmatpush1.bf16.msra.mxu0 0
        %1541 = vmatprep.subr.bf16.mxu0 0
        %1542 = vmatpush1.bf16.msra.mxu0 0
        %1543 = vmatprep.subr.bf16.mxu0 0
        %1544 = vmatpush1.bf16.msra.mxu0 0
        %1545 = vmatprep.subr.bf16.mxu0 0
        %1546 = vmatpush1.bf16.msra.mxu0 0
        %1547 = vmatprep.subr.bf16.mxu0 0
        %1548 = vmatpush1.bf16.msra.mxu0 0
        %1549 = vmatprep.subr.bf16.mxu0 0
        %1550 = vmatpush1.bf16.msra.mxu0 0
        %1551 = vmatprep.mubr.bf16.mxu0 0
        %1552 = vmatmul.mubr.bf16.gmra.mrb[0].mxu0 %v1517
        %v1553 = vpop.f32.mrb[0].mxu0
        %v1554 = vadd.f32 0.0, %v1553
        %v1555 = vpop.f32.mrb[0].mxu0
        %v1556 = vpop.f32.mrb[0].mxu0
        %v1557 = vpop.f32.mrb[0].mxu0
        %1558 = vdwg.mxu0
        %v1559 = vadd.f32 %v883, %v1554
        %v1560 = vsel %vm891, %v1559, 0.0
        %1561 = vadd.xlane.f32.xlu0 %v1560
        %v1562 = vpop.xlane.xlu0 %1561
        %v1563 = vmul.f32 %v1562, %v895
        %v1564 = vsub.f32 %v1559, %v1563
        %v1565 = vmul.f32 %v1564, %v1564
        %v1566 = vsel %vm891, %v1565, 0.0
        %1567 = vadd.xlane.f32.xlu0 %v1566
        %v1568 = vpop.xlane.xlu0 %1567
        %v1569 = vmul.f32 %v1568, %v895
        %v1570 = vadd.f32 %v1569, 1e-05
        %v1571 = vrsqrt.pop %v1570
        %v1572 = vmul.f32 %v1564, %v1571
        %v1573 = vlaneseq
        %v1574 = vshrl.u32 %v1573, 7
        %v1575 = vsub.s32 1, %v1574
        %v1576 = vrot.slane %v889, %v1575
        %v1577 = vmul.f32 %v1572, %v1576
        %v1578 = vlaneseq
        %v1579 = vshrl.u32 %v1578, 7
        %v1580 = vsub.s32 1, %v1579
        %v1581 = vrot.slane %v890, %v1580
        %v1582 = vadd.f32 %v1577, %v1581
        %v1583 = vadd.f32 %v1582, %v884
        %v1584 = vpack.c.bf16 %v1583, %v1583
        %v1585 = vld [vmem:[%s834] sm:$0xf]
        %v1586 = vld [vmem:[%s834 + $0x4] sm:$0xf]
        %v1587 = vld [vmem:[%s834 + $0x8] sm:$0xf]
        %v1588 = vld [vmem:[%s834 + $0xc] sm:$0xf]
        %v1593 = vunpack.c.l.b16 %v1585
        %v1594 = vunpack.c.l.b16 %v1586
        %v1595 = vunpack.c.l.b16 %v1587
        %v1596 = vunpack.c.l.b16 %v1588
        %v1597 = vpack.c.b16 %v1594, %v1593
        %v1598 = vpack.c.b16 %v1596, %v1595
        %v1602 = vsel %vm891, %v1584, 0
        %1604 = vmatprep.subr.bf16.mxu0 0
        %1605 = vmatpush1.bf16.msra.mxu0 %v1597
        %1606 = vmatprep.subr.bf16.mxu0 0
        %1607 = vmatpush1.bf16.msra.mxu0 %v1598
        %1608 = vmatprep.subr.bf16.mxu0 0
        %1609 = vmatpush1.bf16.msra.mxu0 0
        %1610 = vmatprep.subr.bf16.mxu0 0
        %1611 = vmatpush1.bf16.msra.mxu0 0
        %1612 = vmatprep.subr.bf16.mxu0 0
        %1613 = vmatpush1.bf16.msra.mxu0 0
        %1614 = vmatprep.subr.bf16.mxu0 0
        %1615 = vmatpush1.bf16.msra.mxu0 0
        %1616 = vmatprep.subr.bf16.mxu0 0
        %1617 = vmatpush1.bf16.msra.mxu0 0
        %1618 = vmatprep.subr.bf16.mxu0 0
        %1619 = vmatpush1.bf16.msra.mxu0 0
        %1620 = vmatprep.subr.bf16.mxu0 0
        %1621 = vmatpush1.bf16.msra.mxu0 0
        %1622 = vmatprep.subr.bf16.mxu0 0
        %1623 = vmatpush1.bf16.msra.mxu0 0
        %1624 = vmatprep.subr.bf16.mxu0 0
        %1625 = vmatpush1.bf16.msra.mxu0 0
        %1626 = vmatprep.subr.bf16.mxu0 0
        %1627 = vmatpush1.bf16.msra.mxu0 0
        %1628 = vmatprep.subr.bf16.mxu0 0
        %1629 = vmatpush1.bf16.msra.mxu0 0
        %1630 = vmatprep.subr.bf16.mxu0 0
        %1631 = vmatpush1.bf16.msra.mxu0 0
        %1632 = vmatprep.subr.bf16.mxu0 0
        %1633 = vmatpush1.bf16.msra.mxu0 0
        %1634 = vmatprep.subr.bf16.mxu0 0
        %1635 = vmatpush1.bf16.msra.mxu0 0
        %1636 = vmatprep.mubr.bf16.mxu0 0
        %1637 = vmatmul.mubr.bf16.gmra.mrb[0].mxu0 %v1602
        %v1638 = vpop.f32.mrb[0].mxu0
        %v1639 = vadd.f32 0.0, %v1638
        %v1640 = vpop.f32.mrb[0].mxu0
        %v1641 = vpop.f32.mrb[0].mxu0
        %v1642 = vpop.f32.mrb[0].mxu0
        %1643 = vdwg.mxu0
        %v1644 = vpack.c.bf16 %v1639, %v1639
        %v1645 = vld [vmem:[%s839] sm:$0xf]
        %v1646 = vld [vmem:[%s839 + $0x4] sm:$0xf]
        %v1647 = vld [vmem:[%s839 + $0x8] sm:$0xf]
        %v1648 = vld [vmem:[%s839 + $0xc] sm:$0xf]
        %v1651 = vunpack.c.l.b16 %v887
        %v1652 = vunpack.c.l.b16 %v888
        %v1653 = vpack.c.b16 %v1652, %v1651
        %v1658 = vunpack.c.l.b16 %v1645
        %v1659 = vunpack.c.l.b16 %v1646
        %v1660 = vunpack.c.l.b16 %v1647
        %v1661 = vunpack.c.l.b16 %v1648
        %v1662 = vpack.c.b16 %v1659, %v1658
        %v1663 = vpack.c.b16 %v1661, %v1660
        %v1667 = vsel %vm891, %v1653, 0
        %1669 = vmatprep.subr.bf16.mxu0 0
        %1670 = vmatpush1.bf16.msra.mxu0 %v1662
        %1671 = vmatprep.subr.bf16.mxu0 0
        %1672 = vmatpush1.bf16.msra.mxu0 %v1663
        %1673 = vmatprep.subr.bf16.mxu0 0
        %1674 = vmatpush1.bf16.msra.mxu0 0
        %1675 = vmatprep.subr.bf16.mxu0 0
        %1676 = vmatpush1.bf16.msra.mxu0 0
        %1677 = vmatprep.subr.bf16.mxu0 0
        %1678 = vmatpush1.bf16.msra.mxu0 0
        %1679 = vmatprep.subr.bf16.mxu0 0
        %1680 = vmatpush1.bf16.msra.mxu0 0
        %1681 = vmatprep.subr.bf16.mxu0 0
        %1682 = vmatpush1.bf16.msra.mxu0 0
        %1683 = vmatprep.subr.bf16.mxu0 0
        %1684 = vmatpush1.bf16.msra.mxu0 0
        %1685 = vmatprep.subr.bf16.mxu0 0
        %1686 = vmatpush1.bf16.msra.mxu0 0
        %1687 = vmatprep.subr.bf16.mxu0 0
        %1688 = vmatpush1.bf16.msra.mxu0 0
        %1689 = vmatprep.subr.bf16.mxu0 0
        %1690 = vmatpush1.bf16.msra.mxu0 0
        %1691 = vmatprep.subr.bf16.mxu0 0
        %1692 = vmatpush1.bf16.msra.mxu0 0
        %1693 = vmatprep.subr.bf16.mxu0 0
        %1694 = vmatpush1.bf16.msra.mxu0 0
        %1695 = vmatprep.subr.bf16.mxu0 0
        %1696 = vmatpush1.bf16.msra.mxu0 0
        %1697 = vmatprep.subr.bf16.mxu0 0
        %1698 = vmatpush1.bf16.msra.mxu0 0
        %1699 = vmatprep.subr.bf16.mxu0 0
        %1700 = vmatpush1.bf16.msra.mxu0 0
        %1701 = vmatprep.mubr.bf16.mxu0 0
        %1702 = vmatmul.mubr.bf16.gmra.mrb[0].mxu0 %v1667
        %v1703 = vpop.f32.mrb[0].mxu0
        %v1704 = vadd.f32 0.0, %v1703
        %v1705 = vpop.f32.mrb[0].mxu0
        %v1706 = vpop.f32.mrb[0].mxu0
        %v1707 = vadd.f32 0.0, %v1706
        %v1708 = vpop.f32.mrb[0].mxu0
        %1709 = vdwg.mxu0
        %v1710 = vpack.c.bf16 %v1707, %v1704
        %v1711 = vld [vmem:[%s844] sm:$0xf]
        %v1712 = vld [vmem:[%s844 + $0x4] sm:$0xf]
        %v1713 = vld [vmem:[%s844 + $0x8] sm:$0xf]
        %v1714 = vld [vmem:[%s844 + $0xc] sm:$0xf]
        %v1717 = vunpack.c.l.b16 %v885
        %v1718 = vunpack.c.l.b16 %v886
        %v1719 = vpack.c.b16 %v1718, %v1717
        %v1724 = vunpack.c.l.b16 %v1711
        %v1725 = vunpack.c.l.b16 %v1712
        %v1726 = vunpack.c.l.b16 %v1713
        %v1727 = vunpack.c.l.b16 %v1714
        %v1728 = vpack.c.b16 %v1725, %v1724
        %v1729 = vpack.c.b16 %v1727, %v1726
        %v1733 = vsel %vm891, %v1719, 0
        %1735 = vmatprep.subr.bf16.mxu0 0
        %1736 = vmatpush1.bf16.msra.mxu0 %v1728
        %1737 = vmatprep.subr.bf16.mxu0 0
        %1738 = vmatpush1.bf16.msra.mxu0 %v1729
        %1739 = vmatprep.subr.bf16.mxu0 0
        %1740 = vmatpush1.bf16.msra.mxu0 0
        %1741 = vmatprep.subr.bf16.mxu0 0
        %1742 = vmatpush1.bf16.msra.mxu0 0
        %1743 = vmatprep.subr.bf16.mxu0 0
        %1744 = vmatpush1.bf16.msra.mxu0 0
        %1745 = vmatprep.subr.bf16.mxu0 0
        %1746 = vmatpush1.bf16.msra.mxu0 0
        %1747 = vmatprep.subr.bf16.mxu0 0
        %1748 = vmatpush1.bf16.msra.mxu0 0
        %1749 = vmatprep.subr.bf16.mxu0 0
        %1750 = vmatpush1.bf16.msra.mxu0 0
        %1751 = vmatprep.subr.bf16.mxu0 0
        %1752 = vmatpush1.bf16.msra.mxu0 0
        %1753 = vmatprep.subr.bf16.mxu0 0
        %1754 = vmatpush1.bf16.msra.mxu0 0
        %1755 = vmatprep.subr.bf16.mxu0 0
        %1756 = vmatpush1.bf16.msra.mxu0 0
        %1757 = vmatprep.subr.bf16.mxu0 0
        %1758 = vmatpush1.bf16.msra.mxu0 0
        %1759 = vmatprep.subr.bf16.mxu0 0
        %1760 = vmatpush1.bf16.msra.mxu0 0
        %1761 = vmatprep.subr.bf16.mxu0 0
        %1762 = vmatpush1.bf16.msra.mxu0 0
        %1763 = vmatprep.subr.bf16.mxu0 0
        %1764 = vmatpush1.bf16.msra.mxu0 0
        %1765 = vmatprep.subr.bf16.mxu0 0
        %1766 = vmatpush1.bf16.msra.mxu0 0
        %1767 = vmatprep.mubr.bf16.mxu0 0
        %1768 = vmatmul.mubr.bf16.gmra.mrb[0].mxu0 %v1733
        %v1769 = vpop.f32.mrb[0].mxu0
        %v1770 = vadd.f32 0.0, %v1769
        %v1771 = vpop.f32.mrb[0].mxu0
        %v1772 = vpop.f32.mrb[0].mxu0
        %v1773 = vadd.f32 0.0, %v1772
        %v1774 = vpop.f32.mrb[0].mxu0
        %1775 = vdwg.mxu0
        %v1776 = vpack.c.bf16 %v1773, %v1770
        %v1777 = vld [vmem:[%s849] sm:$0xf]
        %v1778 = vld [vmem:[%s849 + $0x4] sm:$0xf]
        %v1779 = vld [vmem:[%s849 + $0x8] sm:$0xf]
        %v1780 = vld [vmem:[%s849 + $0xc] sm:$0xf]
        %v1782 = vsel %vm1046, %v1644, 0
        %v1785 = vsel %vm1046, %v1710, 0
        %1787 = vmatprep.subr.bf16.mxu0 0
        %1788 = vmatpush1.bf16.xpose.msra.mxu0 %v1785
        %1789 = vmatprep.subr.bf16.mxu0 0
        %1790 = vmatpush1.bf16.xpose.msra.mxu0 0
        %1791 = vmatprep.subr.bf16.mxu0 0
        %1792 = vmatpush1.bf16.xpose.msra.mxu0 0
        %1793 = vmatprep.subr.bf16.mxu0 0
        %1794 = vmatpush1.bf16.xpose.msra.mxu0 0
        %1795 = vmatprep.subr.bf16.mxu0 0
        %1796 = vmatpush1.bf16.xpose.msra.mxu0 0
        %1797 = vmatprep.subr.bf16.mxu0 0
        %1798 = vmatpush1.bf16.xpose.msra.mxu0 0
        %1799 = vmatprep.subr.bf16.mxu0 0
        %1800 = vmatpush1.bf16.xpose.msra.mxu0 0
        %1801 = vmatprep.subr.bf16.mxu0 0
        %1802 = vmatpush1.bf16.xpose.msra.mxu0 0
        %1803 = vmatprep.subr.bf16.mxu0 0
        %1804 = vmatpush1.bf16.xpose.msra.mxu0 0
        %1805 = vmatprep.subr.bf16.mxu0 0
        %1806 = vmatpush1.bf16.xpose.msra.mxu0 0
        %1807 = vmatprep.subr.bf16.mxu0 0
        %1808 = vmatpush1.bf16.xpose.msra.mxu0 0
        %1809 = vmatprep.subr.bf16.mxu0 0
        %1810 = vmatpush1.bf16.xpose.msra.mxu0 0
        %1811 = vmatprep.subr.bf16.mxu0 0
        %1812 = vmatpush1.bf16.xpose.msra.mxu0 0
        %1813 = vmatprep.subr.bf16.mxu0 0
        %1814 = vmatpush1.bf16.xpose.msra.mxu0 0
        %1815 = vmatprep.subr.bf16.mxu0 0
        %1816 = vmatpush1.bf16.xpose.msra.mxu0 0
        %1817 = vmatprep.subr.bf16.mxu0 0
        %1818 = vmatpush1.bf16.xpose.msra.mxu0 0
        %1819 = vmatprep.mubr.bf16.mxu0 0
        %1820 = vmatmul.mubr.bf16.gmra.mrb[0].mxu0 %v1782
        %v1821 = vpop.f32.mrb[0].mxu0
        %v1822 = vadd.f32 0.0, %v1821
        %v1823 = vpop.f32.mrb[0].mxu0
        %v1824 = vpop.f32.mrb[0].mxu0
        %v1825 = vpop.f32.mrb[0].mxu0
        %1826 = vdwg.mxu0
        %vm1827 = vcmask 130048
        %v1828 = vsel %vm1827, %v1822, -inf
        %1829 = vmax.xlane.f32.xlu0 %v1828
        %v1830 = vpop.xlane.xlu0 %1829
        %v1831 = vsub.f32 %v1822, %v1830
        %v1832 = vmul.f32 %v1831, 1.442695
        %v1833 = vpow.pop %v1832
        %v1834 = vsel %vm1827, %v1833, 0.0
        %1835 = vadd.xlane.f32.xlu0 %v1834
        %v1836 = vpop.xlane.xlu0 %1835
        %v1837 = vrcp.pop %v1836
        %v1838 = vmul.f32 %v1833, %v1837
        %v1839 = vpack.c.bf16 %v1838, %v1838
        %v1841 = vsel %vm1827, %v1839, 0
        %1843 = vmatprep.subr.bf16.mxu0 0
        %1844 = vmatpush1.bf16.msra.mxu0 %v1776
        %1845 = vmatprep.subr.bf16.mxu0 0
        %1846 = vmatpush1.bf16.msra.mxu0 0
        %1847 = vmatprep.subr.bf16.mxu0 0
        %1848 = vmatpush1.bf16.msra.mxu0 0
        %1849 = vmatprep.subr.bf16.mxu0 0
        %1850 = vmatpush1.bf16.msra.mxu0 0
        %1851 = vmatprep.subr.bf16.mxu0 0
        %1852 = vmatpush1.bf16.msra.mxu0 0
        %1853 = vmatprep.subr.bf16.mxu0 0
        %1854 = vmatpush1.bf16.msra.mxu0 0
        %1855 = vmatprep.subr.bf16.mxu0 0
        %1856 = vmatpush1.bf16.msra.mxu0 0
        %1857 = vmatprep.subr.bf16.mxu0 0
        %1858 = vmatpush1.bf16.msra.mxu0 0
        %1859 = vmatprep.subr.bf16.mxu0 0
        %1860 = vmatpush1.bf16.msra.mxu0 0
        %1861 = vmatprep.subr.bf16.mxu0 0
        %1862 = vmatpush1.bf16.msra.mxu0 0
        %1863 = vmatprep.subr.bf16.mxu0 0
        %1864 = vmatpush1.bf16.msra.mxu0 0
        %1865 = vmatprep.subr.bf16.mxu0 0
        %1866 = vmatpush1.bf16.msra.mxu0 0
        %1867 = vmatprep.subr.bf16.mxu0 0
        %1868 = vmatpush1.bf16.msra.mxu0 0
        %1869 = vmatprep.subr.bf16.mxu0 0
        %1870 = vmatpush1.bf16.msra.mxu0 0
        %1871 = vmatprep.subr.bf16.mxu0 0
        %1872 = vmatpush1.bf16.msra.mxu0 0
        %1873 = vmatprep.subr.bf16.mxu0 0
        %1874 = vmatpush1.bf16.msra.mxu0 0
        %1875 = vmatprep.mubr.bf16.mxu0 0
        %1876 = vmatmul.mubr.bf16.gmra.mrb[0].mxu0 %v1841
        %v1877 = vpop.f32.mrb[0].mxu0
        %v1878 = vadd.f32 0.0, %v1877
        %v1879 = vpop.f32.mrb[0].mxu0
        %v1880 = vpop.f32.mrb[0].mxu0
        %v1881 = vpop.f32.mrb[0].mxu0
        %1882 = vdwg.mxu0
        %1883 = vst.msk [vmem:[#allocation3] sm:$0xff] %vm1046, %v1878
        %1885 = vrot.lane.b32.xlu0 %v1644, 120
        %v1886 = vpop.permute.xlu0 %1885
        %1888 = vrot.lane.b32.xlu0 %v1710, 120
        %v1889 = vpop.permute.xlu0 %1888
        %v1891 = vsel %vm1046, %v1886, 0
        %v1894 = vsel %vm1046, %v1889, 0
        %1896 = vmatprep.subr.bf16.mxu0 0
        %1897 = vmatpush1.bf16.xpose.msra.mxu0 %v1894
        %1898 = vmatprep.subr.bf16.mxu0 0
        %1899 = vmatpush1.bf16.xpose.msra.mxu0 0
        %1900 = vmatprep.subr.bf16.mxu0 0
        %1901 = vmatpush1.bf16.xpose.msra.mxu0 0
        %1902 = vmatprep.subr.bf16.mxu0 0
        %1903 = vmatpush1.bf16.xpose.msra.mxu0 0
        %1904 = vmatprep.subr.bf16.mxu0 0
        %1905 = vmatpush1.bf16.xpose.msra.mxu0 0
        %1906 = vmatprep.subr.bf16.mxu0 0
        %1907 = vmatpush1.bf16.xpose.msra.mxu0 0
        %1908 = vmatprep.subr.bf16.mxu0 0
        %1909 = vmatpush1.bf16.xpose.msra.mxu0 0
        %1910 = vmatprep.subr.bf16.mxu0 0
        %1911 = vmatpush1.bf16.xpose.msra.mxu0 0
        %1912 = vmatprep.subr.bf16.mxu0 0
        %1913 = vmatpush1.bf16.xpose.msra.mxu0 0
        %1914 = vmatprep.subr.bf16.mxu0 0
        %1915 = vmatpush1.bf16.xpose.msra.mxu0 0
        %1916 = vmatprep.subr.bf16.mxu0 0
        %1917 = vmatpush1.bf16.xpose.msra.mxu0 0
        %1918 = vmatprep.subr.bf16.mxu0 0
        %1919 = vmatpush1.bf16.xpose.msra.mxu0 0
        %1920 = vmatprep.subr.bf16.mxu0 0
        %1921 = vmatpush1.bf16.xpose.msra.mxu0 0
        %1922 = vmatprep.subr.bf16.mxu0 0
        %1923 = vmatpush1.bf16.xpose.msra.mxu0 0
        %1924 = vmatprep.subr.bf16.mxu0 0
        %1925 = vmatpush1.bf16.xpose.msra.mxu0 0
        %1926 = vmatprep.subr.bf16.mxu0 0
        %1927 = vmatpush1.bf16.xpose.msra.mxu0 0
        %1928 = vmatprep.mubr.bf16.mxu0 0
        %1929 = vmatmul.mubr.bf16.gmra.mrb[0].mxu0 %v1891
        %v1930 = vpop.f32.mrb[0].mxu0
        %v1931 = vadd.f32 0.0, %v1930
        %v1932 = vpop.f32.mrb[0].mxu0
        %v1933 = vpop.f32.mrb[0].mxu0
        %v1934 = vpop.f32.mrb[0].mxu0
        %1935 = vdwg.mxu0
        %v1936 = vsel %vm1827, %v1931, -inf
        %1937 = vmax.xlane.f32.xlu0 %v1936
        %v1938 = vpop.xlane.xlu0 %1937
        %v1939 = vsub.f32 %v1931, %v1938
        %v1940 = vmul.f32 %v1939, 1.442695
        %v1941 = vpow.pop %v1940
        %v1942 = vsel %vm1827, %v1941, 0.0
        %1943 = vadd.xlane.f32.xlu0 %v1942
        %v1944 = vpop.xlane.xlu0 %1943
        %v1945 = vrcp.pop %v1944
        %v1946 = vmul.f32 %v1941, %v1945
        %v1947 = vpack.c.bf16 %v1946, %v1946
        %1949 = vrot.lane.b32.xlu0 %v1776, 120
        %v1950 = vpop.permute.xlu0 %1949
        %v1953 = vsel %vm1827, %v1947, 0
        %1955 = vmatprep.subr.bf16.mxu0 0
        %1956 = vmatpush1.bf16.msra.mxu0 %v1950
        %1957 = vmatprep.subr.bf16.mxu0 0
        %1958 = vmatpush1.bf16.msra.mxu0 0
        %1959 = vmatprep.subr.bf16.mxu0 0
        %1960 = vmatpush1.bf16.msra.mxu0 0
        %1961 = vmatprep.subr.bf16.mxu0 0
        %1962 = vmatpush1.bf16.msra.mxu0 0
        %1963 = vmatprep.subr.bf16.mxu0 0
        %1964 = vmatpush1.bf16.msra.mxu0 0
        %1965 = vmatprep.subr.bf16.mxu0 0
        %1966 = vmatpush1.bf16.msra.mxu0 0
        %1967 = vmatprep.subr.bf16.mxu0 0
        %1968 = vmatpush1.bf16.msra.mxu0 0
        %1969 = vmatprep.subr.bf16.mxu0 0
        %1970 = vmatpush1.bf16.msra.mxu0 0
        %1971 = vmatprep.subr.bf16.mxu0 0
        %1972 = vmatpush1.bf16.msra.mxu0 0
        %1973 = vmatprep.subr.bf16.mxu0 0
        %1974 = vmatpush1.bf16.msra.mxu0 0
        %1975 = vmatprep.subr.bf16.mxu0 0
        %1976 = vmatpush1.bf16.msra.mxu0 0
        %1977 = vmatprep.subr.bf16.mxu0 0
        %1978 = vmatpush1.bf16.msra.mxu0 0
        %1979 = vmatprep.subr.bf16.mxu0 0
        %1980 = vmatpush1.bf16.msra.mxu0 0
        %1981 = vmatprep.subr.bf16.mxu0 0
        %1982 = vmatpush1.bf16.msra.mxu0 0
        %1983 = vmatprep.subr.bf16.mxu0 0
        %1984 = vmatpush1.bf16.msra.mxu0 0
        %1985 = vmatprep.subr.bf16.mxu0 0
        %1986 = vmatpush1.bf16.msra.mxu0 0
        %1987 = vmatprep.mubr.bf16.mxu0 0
        %1988 = vmatmul.mubr.bf16.gmra.mrb[0].mxu0 %v1953
        %v1989 = vpop.f32.mrb[0].mxu0
        %v1990 = vadd.f32 0.0, %v1989
        %v1991 = vpop.f32.mrb[0].mxu0
        %v1992 = vpop.f32.mrb[0].mxu0
        %v1993 = vpop.f32.mrb[0].mxu0
        %1994 = vdwg.mxu0
        %1996 = vrot.lane.b32.xlu0 %v1990, 8
        %v1997 = vpop.permute.xlu0 %1996
        %1999 = vst.msk [vmem:[#allocation3] sm:$0xff] %vm1268, %v1997
        %2000 = vrot.lane.b32.xlu0 %v1644, 112
        %v2001 = vpop.permute.xlu0 %2000
        %2002 = vrot.lane.b32.xlu0 %v1710, 112
        %v2003 = vpop.permute.xlu0 %2002
        %v2005 = vsel %vm1046, %v2001, 0
        %v2008 = vsel %vm1046, %v2003, 0
        %2010 = vmatprep.subr.bf16.mxu0 0
        %2011 = vmatpush1.bf16.xpose.msra.mxu0 %v2008
        %2012 = vmatprep.subr.bf16.mxu0 0
        %2013 = vmatpush1.bf16.xpose.msra.mxu0 0
        %2014 = vmatprep.subr.bf16.mxu0 0
        %2015 = vmatpush1.bf16.xpose.msra.mxu0 0
        %2016 = vmatprep.subr.bf16.mxu0 0
        %2017 = vmatpush1.bf16.xpose.msra.mxu0 0
        %2018 = vmatprep.subr.bf16.mxu0 0
        %2019 = vmatpush1.bf16.xpose.msra.mxu0 0
        %2020 = vmatprep.subr.bf16.mxu0 0
        %2021 = vmatpush1.bf16.xpose.msra.mxu0 0
        %2022 = vmatprep.subr.bf16.mxu0 0
        %2023 = vmatpush1.bf16.xpose.msra.mxu0 0
        %2024 = vmatprep.subr.bf16.mxu0 0
        %2025 = vmatpush1.bf16.xpose.msra.mxu0 0
        %2026 = vmatprep.subr.bf16.mxu0 0
        %2027 = vmatpush1.bf16.xpose.msra.mxu0 0
        %2028 = vmatprep.subr.bf16.mxu0 0
        %2029 = vmatpush1.bf16.xpose.msra.mxu0 0
        %2030 = vmatprep.subr.bf16.mxu0 0
        %2031 = vmatpush1.bf16.xpose.msra.mxu0 0
        %2032 = vmatprep.subr.bf16.mxu0 0
        %2033 = vmatpush1.bf16.xpose.msra.mxu0 0
        %2034 = vmatprep.subr.bf16.mxu0 0
        %2035 = vmatpush1.bf16.xpose.msra.mxu0 0
        %2036 = vmatprep.subr.bf16.mxu0 0
        %2037 = vmatpush1.bf16.xpose.msra.mxu0 0
        %2038 = vmatprep.subr.bf16.mxu0 0
        %2039 = vmatpush1.bf16.xpose.msra.mxu0 0
        %2040 = vmatprep.subr.bf16.mxu0 0
        %2041 = vmatpush1.bf16.xpose.msra.mxu0 0
        %2042 = vmatprep.mubr.bf16.mxu0 0
        %2043 = vmatmul.mubr.bf16.gmra.mrb[0].mxu0 %v2005
        %v2044 = vpop.f32.mrb[0].mxu0
        %v2045 = vadd.f32 0.0, %v2044
        %v2046 = vpop.f32.mrb[0].mxu0
        %v2047 = vpop.f32.mrb[0].mxu0
        %v2048 = vpop.f32.mrb[0].mxu0
        %2049 = vdwg.mxu0
        %v2050 = vsel %vm1827, %v2045, -inf
        %2051 = vmax.xlane.f32.xlu0 %v2050
        %v2052 = vpop.xlane.xlu0 %2051
        %v2053 = vsub.f32 %v2045, %v2052
        %v2054 = vmul.f32 %v2053, 1.442695
        %v2055 = vpow.pop %v2054
        %v2056 = vsel %vm1827, %v2055, 0.0
        %2057 = vadd.xlane.f32.xlu0 %v2056
        %v2058 = vpop.xlane.xlu0 %2057
        %v2059 = vrcp.pop %v2058
        %v2060 = vmul.f32 %v2055, %v2059
        %v2061 = vpack.c.bf16 %v2060, %v2060
        %2062 = vrot.lane.b32.xlu0 %v1776, 112
        %v2063 = vpop.permute.xlu0 %2062
        %v2066 = vsel %vm1827, %v2061, 0
        %2068 = vmatprep.subr.bf16.mxu0 0
        %2069 = vmatpush1.bf16.msra.mxu0 %v2063
        %2070 = vmatprep.subr.bf16.mxu0 0
        %2071 = vmatpush1.bf16.msra.mxu0 0
        %2072 = vmatprep.subr.bf16.mxu0 0
        %2073 = vmatpush1.bf16.msra.mxu0 0
        %2074 = vmatprep.subr.bf16.mxu0 0
        %2075 = vmatpush1.bf16.msra.mxu0 0
        %2076 = vmatprep.subr.bf16.mxu0 0
        %2077 = vmatpush1.bf16.msra.mxu0 0
        %2078 = vmatprep.subr.bf16.mxu0 0
        %2079 = vmatpush1.bf16.msra.mxu0 0
        %2080 = vmatprep.subr.bf16.mxu0 0
        %2081 = vmatpush1.bf16.msra.mxu0 0
        %2082 = vmatprep.subr.bf16.mxu0 0
        %2083 = vmatpush1.bf16.msra.mxu0 0
        %2084 = vmatprep.subr.bf16.mxu0 0
        %2085 = vmatpush1.bf16.msra.mxu0 0
        %2086 = vmatprep.subr.bf16.mxu0 0
        %2087 = vmatpush1.bf16.msra.mxu0 0
        %2088 = vmatprep.subr.bf16.mxu0 0
        %2089 = vmatpush1.bf16.msra.mxu0 0
        %2090 = vmatprep.subr.bf16.mxu0 0
        %2091 = vmatpush1.bf16.msra.mxu0 0
        %2092 = vmatprep.subr.bf16.mxu0 0
        %2093 = vmatpush1.bf16.msra.mxu0 0
        %2094 = vmatprep.subr.bf16.mxu0 0
        %2095 = vmatpush1.bf16.msra.mxu0 0
        %2096 = vmatprep.subr.bf16.mxu0 0
        %2097 = vmatpush1.bf16.msra.mxu0 0
        %2098 = vmatprep.subr.bf16.mxu0 0
        %2099 = vmatpush1.bf16.msra.mxu0 0
        %2100 = vmatprep.mubr.bf16.mxu0 0
        %2101 = vmatmul.mubr.bf16.gmra.mrb[0].mxu0 %v2066
        %v2102 = vpop.f32.mrb[0].mxu0
        %v2103 = vadd.f32 0.0, %v2102
        %v2104 = vpop.f32.mrb[0].mxu0
        %v2105 = vpop.f32.mrb[0].mxu0
        %v2106 = vpop.f32.mrb[0].mxu0
        %2107 = vdwg.mxu0
        %2109 = vrot.lane.b32.xlu0 %v2103, 16
        %v2110 = vpop.permute.xlu0 %2109
        %2112 = vst.msk [vmem:[#allocation3] sm:$0xff] %vm1384, %v2110
        %2113 = vrot.lane.b32.xlu0 %v1644, 104
        %v2114 = vpop.permute.xlu0 %2113
        %2115 = vrot.lane.b32.xlu0 %v1710, 104
        %v2116 = vpop.permute.xlu0 %2115
        %v2118 = vsel %vm1046, %v2114, 0
        %v2121 = vsel %vm1046, %v2116, 0
        %2123 = vmatprep.subr.bf16.mxu0 0
        %2124 = vmatpush1.bf16.xpose.msra.mxu0 %v2121
        %2125 = vmatprep.subr.bf16.mxu0 0
        %2126 = vmatpush1.bf16.xpose.msra.mxu0 0
        %2127 = vmatprep.subr.bf16.mxu0 0
        %2128 = vmatpush1.bf16.xpose.msra.mxu0 0
        %2129 = vmatprep.subr.bf16.mxu0 0
        %2130 = vmatpush1.bf16.xpose.msra.mxu0 0
        %2131 = vmatprep.subr.bf16.mxu0 0
        %2132 = vmatpush1.bf16.xpose.msra.mxu0 0
        %2133 = vmatprep.subr.bf16.mxu0 0
        %2134 = vmatpush1.bf16.xpose.msra.mxu0 0
        %2135 = vmatprep.subr.bf16.mxu0 0
        %2136 = vmatpush1.bf16.xpose.msra.mxu0 0
        %2137 = vmatprep.subr.bf16.mxu0 0
        %2138 = vmatpush1.bf16.xpose.msra.mxu0 0
        %2139 = vmatprep.subr.bf16.mxu0 0
        %2140 = vmatpush1.bf16.xpose.msra.mxu0 0
        %2141 = vmatprep.subr.bf16.mxu0 0
        %2142 = vmatpush1.bf16.xpose.msra.mxu0 0
        %2143 = vmatprep.subr.bf16.mxu0 0
        %2144 = vmatpush1.bf16.xpose.msra.mxu0 0
        %2145 = vmatprep.subr.bf16.mxu0 0
        %2146 = vmatpush1.bf16.xpose.msra.mxu0 0
        %2147 = vmatprep.subr.bf16.mxu0 0
        %2148 = vmatpush1.bf16.xpose.msra.mxu0 0
        %2149 = vmatprep.subr.bf16.mxu0 0
        %2150 = vmatpush1.bf16.xpose.msra.mxu0 0
        %2151 = vmatprep.subr.bf16.mxu0 0
        %2152 = vmatpush1.bf16.xpose.msra.mxu0 0
        %2153 = vmatprep.subr.bf16.mxu0 0
        %2154 = vmatpush1.bf16.xpose.msra.mxu0 0
        %2155 = vmatprep.mubr.bf16.mxu0 0
        %2156 = vmatmul.mubr.bf16.gmra.mrb[0].mxu0 %v2118
        %v2157 = vpop.f32.mrb[0].mxu0
        %v2158 = vadd.f32 0.0, %v2157
        %v2159 = vpop.f32.mrb[0].mxu0
        %v2160 = vpop.f32.mrb[0].mxu0
        %v2161 = vpop.f32.mrb[0].mxu0
        %2162 = vdwg.mxu0
        %v2163 = vsel %vm1827, %v2158, -inf
        %2164 = vmax.xlane.f32.xlu0 %v2163
        %v2165 = vpop.xlane.xlu0 %2164
        %v2166 = vsub.f32 %v2158, %v2165
        %v2167 = vmul.f32 %v2166, 1.442695
        %v2168 = vpow.pop %v2167
        %v2169 = vsel %vm1827, %v2168, 0.0
        %2170 = vadd.xlane.f32.xlu0 %v2169
        %v2171 = vpop.xlane.xlu0 %2170
        %v2172 = vrcp.pop %v2171
        %v2173 = vmul.f32 %v2168, %v2172
        %v2174 = vpack.c.bf16 %v2173, %v2173
        %2175 = vrot.lane.b32.xlu0 %v1776, 104
        %v2176 = vpop.permute.xlu0 %2175
        %v2179 = vsel %vm1827, %v2174, 0
        %2181 = vmatprep.subr.bf16.mxu0 0
        %2182 = vmatpush1.bf16.msra.mxu0 %v2176
        %2183 = vmatprep.subr.bf16.mxu0 0
        %2184 = vmatpush1.bf16.msra.mxu0 0
        %2185 = vmatprep.subr.bf16.mxu0 0
        %2186 = vmatpush1.bf16.msra.mxu0 0
        %2187 = vmatprep.subr.bf16.mxu0 0
        %2188 = vmatpush1.bf16.msra.mxu0 0
        %2189 = vmatprep.subr.bf16.mxu0 0
        %2190 = vmatpush1.bf16.msra.mxu0 0
        %2191 = vmatprep.subr.bf16.mxu0 0
        %2192 = vmatpush1.bf16.msra.mxu0 0
        %2193 = vmatprep.subr.bf16.mxu0 0
        %2194 = vmatpush1.bf16.msra.mxu0 0
        %2195 = vmatprep.subr.bf16.mxu0 0
        %2196 = vmatpush1.bf16.msra.mxu0 0
        %2197 = vmatprep.subr.bf16.mxu0 0
        %2198 = vmatpush1.bf16.msra.mxu0 0
        %2199 = vmatprep.subr.bf16.mxu0 0
        %2200 = vmatpush1.bf16.msra.mxu0 0
        %2201 = vmatprep.subr.bf16.mxu0 0
        %2202 = vmatpush1.bf16.msra.mxu0 0
        %2203 = vmatprep.subr.bf16.mxu0 0
        %2204 = vmatpush1.bf16.msra.mxu0 0
        %2205 = vmatprep.subr.bf16.mxu0 0
        %2206 = vmatpush1.bf16.msra.mxu0 0
        %2207 = vmatprep.subr.bf16.mxu0 0
        %2208 = vmatpush1.bf16.msra.mxu0 0
        %2209 = vmatprep.subr.bf16.mxu0 0
        %2210 = vmatpush1.bf16.msra.mxu0 0
        %2211 = vmatprep.subr.bf16.mxu0 0
        %2212 = vmatpush1.bf16.msra.mxu0 0
        %2213 = vmatprep.mubr.bf16.mxu0 0
        %2214 = vmatmul.mubr.bf16.gmra.mrb[0].mxu0 %v2179
        %v2215 = vpop.f32.mrb[0].mxu0
        %v2216 = vadd.f32 0.0, %v2215
        %v2217 = vpop.f32.mrb[0].mxu0
        %v2218 = vpop.f32.mrb[0].mxu0
        %v2219 = vpop.f32.mrb[0].mxu0
        %2220 = vdwg.mxu0
        %2222 = vrot.lane.b32.xlu0 %v2216, 24
        %v2223 = vpop.permute.xlu0 %2222
        %2225 = vst.msk [vmem:[#allocation3] sm:$0xff] %vm1500, %v2223
        %v2226 = vld [vmem:[#allocation3] sm:$0xff]
        %v2227 = vpack.c.bf16 %v2226, %v2226
        %v2232 = vunpack.c.l.b16 %v1777
        %v2233 = vunpack.c.l.b16 %v1778
        %v2234 = vunpack.c.l.b16 %v1779
        %v2235 = vunpack.c.l.b16 %v1780
        %v2236 = vpack.c.b16 %v2233, %v2232
        %v2237 = vpack.c.b16 %v2235, %v2234
        %v2241 = vsel %vm891, %v2227, 0
        %2243 = vmatprep.subr.bf16.mxu0 0
        %2244 = vmatpush1.bf16.msra.mxu0 %v2236
        %2245 = vmatprep.subr.bf16.mxu0 0
        %2246 = vmatpush1.bf16.msra.mxu0 %v2237
        %2247 = vmatprep.subr.bf16.mxu0 0
        %2248 = vmatpush1.bf16.msra.mxu0 0
        %2249 = vmatprep.subr.bf16.mxu0 0
        %2250 = vmatpush1.bf16.msra.mxu0 0
        %2251 = vmatprep.subr.bf16.mxu0 0
        %2252 = vmatpush1.bf16.msra.mxu0 0
        %2253 = vmatprep.subr.bf16.mxu0 0
        %2254 = vmatpush1.bf16.msra.mxu0 0
        %2255 = vmatprep.subr.bf16.mxu0 0
        %2256 = vmatpush1.bf16.msra.mxu0 0
        %2257 = vmatprep.subr.bf16.mxu0 0
        %2258 = vmatpush1.bf16.msra.mxu0 0
        %2259 = vmatprep.subr.bf16.mxu0 0
        %2260 = vmatpush1.bf16.msra.mxu0 0
        %2261 = vmatprep.subr.bf16.mxu0 0
        %2262 = vmatpush1.bf16.msra.mxu0 0
        %2263 = vmatprep.subr.bf16.mxu0 0
        %2264 = vmatpush1.bf16.msra.mxu0 0
        %2265 = vmatprep.subr.bf16.mxu0 0
        %2266 = vmatpush1.bf16.msra.mxu0 0
        %2267 = vmatprep.subr.bf16.mxu0 0
        %2268 = vmatpush1.bf16.msra.mxu0 0
        %2269 = vmatprep.subr.bf16.mxu0 0
        %2270 = vmatpush1.bf16.msra.mxu0 0
        %2271 = vmatprep.subr.bf16.mxu0 0
        %2272 = vmatpush1.bf16.msra.mxu0 0
        %2273 = vmatprep.subr.bf16.mxu0 0
        %2274 = vmatpush1.bf16.msra.mxu0 0
        %2275 = vmatprep.mubr.bf16.mxu0 0
        %2276 = vmatmul.mubr.bf16.gmra.mrb[0].mxu0 %v2241
        %v2277 = vpop.f32.mrb[0].mxu0
        %v2278 = vadd.f32 0.0, %v2277
        %v2279 = vpop.f32.mrb[0].mxu0
        %v2280 = vpop.f32.mrb[0].mxu0
        %v2281 = vpop.f32.mrb[0].mxu0
        %2282 = vdwg.mxu0
        %v2283 = vadd.f32 %v1559, %v2278
        %v2284 = vsel %vm891, %v2283, 0.0
        %2285 = vadd.xlane.f32.xlu0 %v2284
        %v2286 = vpop.xlane.xlu0 %2285
        %v2287 = vmul.f32 %v2286, %v895
        %v2288 = vsub.f32 %v2283, %v2287
        %v2289 = vmul.f32 %v2288, %v2288
        %v2290 = vsel %vm891, %v2289, 0.0
        %2291 = vadd.xlane.f32.xlu0 %v2290
        %v2292 = vpop.xlane.xlu0 %2291
        %v2293 = vmul.f32 %v2292, %v895
        %v2294 = vadd.f32 %v2293, 1e-05
        %v2295 = vrsqrt.pop %v2294
        %v2296 = vmul.f32 %v2288, %v2295
        %v2297 = vlaneseq
        %v2298 = vshrl.u32 %v2297, 7
        %v2299 = vsub.s32 2, %v2298
        %v2300 = vrot.slane %v889, %v2299
        %v2301 = vmul.f32 %v2296, %v2300
        %v2302 = vlaneseq
        %v2303 = vshrl.u32 %v2302, 7
        %v2304 = vsub.s32 2, %v2303
        %v2305 = vrot.slane %v890, %v2304
        %v2306 = vadd.f32 %v2301, %v2305
        %v2307 = vpack.c.bf16 %v2306, %v2306
        %v2308 = vld [vmem:[%s854] sm:$0xf]
        %v2309 = vld [vmem:[%s854 + $0x4] sm:$0xf]
        %v2310 = vld [vmem:[%s854 + $0x8] sm:$0xf]
        %v2311 = vld [vmem:[%s854 + $0xc] sm:$0xf]
        %v2312 = vld [vmem:[%s857] sm:$0x1]
        %v2314 = vlaneseq
        %v2315 = vshrl.u32 %v2314, 7
        %v2316 = vsub.s32 0, %v2315
        %v2317 = vrot.slane %v2312, %v2316
        %v2323 = vunpack.c.l.b16 %v2308
        %v2324 = vunpack.c.l.b16 %v2309
        %v2325 = vunpack.c.l.b16 %v2310
        %v2326 = vunpack.c.l.b16 %v2311
        %v2327 = vpack.c.b16 %v2324, %v2323
        %v2328 = vpack.c.b16 %v2326, %v2325
        %v2332 = vsel %vm891, %v2307, 0
        %2334 = vmatprep.subr.bf16.mxu0 0
        %2335 = vmatpush1.bf16.msra.mxu0 %v2327
        %2336 = vmatprep.subr.bf16.mxu0 0
        %2337 = vmatpush1.bf16.msra.mxu0 %v2328
        %2338 = vmatprep.subr.bf16.mxu0 0
        %2339 = vmatpush1.bf16.msra.mxu0 0
        %2340 = vmatprep.subr.bf16.mxu0 0
        %2341 = vmatpush1.bf16.msra.mxu0 0
        %2342 = vmatprep.subr.bf16.mxu0 0
        %2343 = vmatpush1.bf16.msra.mxu0 0
        %2344 = vmatprep.subr.bf16.mxu0 0
        %2345 = vmatpush1.bf16.msra.mxu0 0
        %2346 = vmatprep.subr.bf16.mxu0 0
        %2347 = vmatpush1.bf16.msra.mxu0 0
        %2348 = vmatprep.subr.bf16.mxu0 0
        %2349 = vmatpush1.bf16.msra.mxu0 0
        %2350 = vmatprep.subr.bf16.mxu0 0
        %2351 = vmatpush1.bf16.msra.mxu0 0
        %2352 = vmatprep.subr.bf16.mxu0 0
        %2353 = vmatpush1.bf16.msra.mxu0 0
        %2354 = vmatprep.subr.bf16.mxu0 0
        %2355 = vmatpush1.bf16.msra.mxu0 0
        %2356 = vmatprep.subr.bf16.mxu0 0
        %2357 = vmatpush1.bf16.msra.mxu0 0
        %2358 = vmatprep.subr.bf16.mxu0 0
        %2359 = vmatpush1.bf16.msra.mxu0 0
        %2360 = vmatprep.subr.bf16.mxu0 0
        %2361 = vmatpush1.bf16.msra.mxu0 0
        %2362 = vmatprep.subr.bf16.mxu0 0
        %2363 = vmatpush1.bf16.msra.mxu0 0
        %2364 = vmatprep.subr.bf16.mxu0 0
        %2365 = vmatpush1.bf16.msra.mxu0 0
        %2366 = vmatprep.mubr.bf16.mxu0 0
        %2367 = vmatmul.mubr.bf16.gmra.mrb[0].mxu0 %v2332
        %v2368 = vpop.f32.mrb[0].mxu0
        %v2369 = vadd.f32 %v2317, %v2368
        %v2370 = vpop.f32.mrb[0].mxu0
        %v2371 = vpop.f32.mrb[0].mxu0
        %v2372 = vpop.f32.mrb[0].mxu0
        %2373 = vdwg.mxu0
        %v2374 = vmax.f32 %v2369, 0.0
        %v2375 = vpack.c.bf16 %v2374, %v2374
        %v2376 = vld [vmem:[%s862] sm:$0xf]
        %v2377 = vld [vmem:[%s862 + $0x4] sm:$0xf]
        %v2378 = vld [vmem:[%s862 + $0x8] sm:$0xf]
        %v2379 = vld [vmem:[%s862 + $0xc] sm:$0xf]
        %v2380 = vld [vmem:[%s862 + $0x10] sm:$0xf]
        %v2381 = vld [vmem:[%s862 + $0x14] sm:$0xf]
        %v2382 = vld [vmem:[%s862 + $0x18] sm:$0xf]
        %v2383 = vld [vmem:[%s862 + $0x1c] sm:$0xf]
        %v2392 = vunpack.c.l.b16 %v2376
        %v2393 = vunpack.c.l.b16 %v2377
        %v2394 = vunpack.c.l.b16 %v2378
        %v2395 = vunpack.c.l.b16 %v2379
        %v2396 = vunpack.c.l.b16 %v2380
        %v2397 = vunpack.c.l.b16 %v2381
        %v2398 = vunpack.c.l.b16 %v2382
        %v2399 = vunpack.c.l.b16 %v2383
        %v2400 = vpack.c.b16 %v2393, %v2392
        %v2401 = vpack.c.b16 %v2395, %v2394
        %v2402 = vpack.c.b16 %v2397, %v2396
        %v2403 = vpack.c.b16 %v2399, %v2398
        %vm2408 = vcmask 523264
        %v2410 = vsel %vm2408, %v2375, 0
        %2412 = vmatprep.subr.bf16.mxu0 0
        %2413 = vmatpush1.bf16.msra.mxu0 %v2400
        %2414 = vmatprep.subr.bf16.mxu0 0
        %2415 = vmatpush1.bf16.msra.mxu0 %v2401
        %2416 = vmatprep.subr.bf16.mxu0 0
        %2417 = vmatpush1.bf16.msra.mxu0 %v2402
        %2418 = vmatprep.subr.bf16.mxu0 0
        %2419 = vmatpush1.bf16.msra.mxu0 %v2403
        %2420 = vmatprep.subr.bf16.mxu0 0
        %2421 = vmatpush1.bf16.msra.mxu0 0
        %2422 = vmatprep.subr.bf16.mxu0 0
        %2423 = vmatpush1.bf16.msra.mxu0 0
        %2424 = vmatprep.subr.bf16.mxu0 0
        %2425 = vmatpush1.bf16.msra.mxu0 0
        %2426 = vmatprep.subr.bf16.mxu0 0
        %2427 = vmatpush1.bf16.msra.mxu0 0
        %2428 = vmatprep.subr.bf16.mxu0 0
        %2429 = vmatpush1.bf16.msra.mxu0 0
        %2430 = vmatprep.subr.bf16.mxu0 0
        %2431 = vmatpush1.bf16.msra.mxu0 0
        %2432 = vmatprep.subr.bf16.mxu0 0
        %2433 = vmatpush1.bf16.msra.mxu0 0
        %2434 = vmatprep.subr.bf16.mxu0 0
        %2435 = vmatpush1.bf16.msra.mxu0 0
        %2436 = vmatprep.subr.bf16.mxu0 0
        %2437 = vmatpush1.bf16.msra.mxu0 0
        %2438 = vmatprep.subr.bf16.mxu0 0
        %2439 = vmatpush1.bf16.msra.mxu0 0
        %2440 = vmatprep.subr.bf16.mxu0 0
        %2441 = vmatpush1.bf16.msra.mxu0 0
        %2442 = vmatprep.subr.bf16.mxu0 0
        %2443 = vmatpush1.bf16.msra.mxu0 0
        %2444 = vmatprep.mubr.bf16.mxu0 0
        %2445 = vmatmul.mubr.bf16.gmra.mrb[0].mxu0 %v2410
        %v2446 = vpop.f32.mrb[0].mxu0
        %v2447 = vadd.f32 0.0, %v2446
        %v2448 = vpop.f32.mrb[0].mxu0
        %v2449 = vpop.f32.mrb[0].mxu0
        %v2450 = vpop.f32.mrb[0].mxu0
        %2451 = vdwg.mxu0
        %v2452 = vadd.f32 %v2283, %v2447
        %v2453 = vld [vmem:[%s674] sm:$0x1]
        %v2455 = vlaneseq
        %v2456 = vshrl.u32 %v2455, 7
        %v2457 = vsub.s32 0, %v2456
        %v2458 = vrot.slane %v2453, %v2457
        %v2460 = vadd.f32 %v2452, %v2458
        %2461 = vst.msk [vmem:[#allocation2] sm:$0xff] %vm891, %v2460
        %p2462 = scmp.eq.s32.totalorder %s36, 1
        // Predicated region
        $region97: #{transformer_decoder_forward.1} parent=87 // pred_check
          %p2463 = pneg %p2462
        $region98: #{transformer_decoder_forward.1} parent=87 // pred_check_branch
          %2465 = sbr.rel (%p2463) target = $region100
        $region99: #{transformer_decoder_forward.1} parent=87 // pred_region
          %2466 = vst.msk [vmem:[%s874] sm:$0xff] %vm891, %v2460
        $region100: #{transformer_decoder_forward.1} parent=87 // pred_fallthru
          _
        %p2467 = scmp.lt.s32.totalorder %s35, 1
        %s2468 = scalar_select %p2467, %s35, 1
        %s2469 = smul.addr %s2468, 8
        %s2470 = scalar_lea.vmem %s17, %s2469
        // Predicated region
        $region101: #{transformer_decoder_forward.1} parent=87 // pred_check
          %p2471 = pneg %p503
        $region102: #{transformer_decoder_forward.1} parent=87 // pred_check_branch
          %2473 = sbr.rel (%p2471) target = $region104
        $region103: #{transformer_decoder_forward.1} parent=87 // pred_region
          _
        $region104: #{transformer_decoder_forward.1} parent=87 // pred_fallthru
          _
      $region88: #{transformer_decoder_forward.1} parent=5 // pred_fallthru
        _
      %p2474 = scmp.le.s32.totalorder 2, %s26
      // Predicated region
      $region105: #{transformer_decoder_forward.1} parent=5 // pred_check
        %p2475 = pneg %p2474
      $region106: #{transformer_decoder_forward.1} parent=5 // pred_check_branch
        %2477 = sbr.rel (%p2475) target = $region108
      $region107: #{transformer_decoder_forward.1} parent=5 // pred_region
        %s2478 = ssub.s32 %s26, 2
        // Predicated region
        $region109: #{transformer_decoder_forward.1} parent=107 // pred_check
          %p2479 = pneg %p509
        $region110: #{transformer_decoder_forward.1} parent=107 // pred_check_branch
          %2481 = sbr.rel (%p2479) target = $region112
        $region111: #{transformer_decoder_forward.1} parent=107 // pred_region
          %p2482 = scmp.lt.s32.totalorder %s37, 1
          %s2483 = scalar_select %p2482, %s37, 1
          %s2484 = smul.addr %s2483, 8
          %s2485 = scalar_lea.vmem %s17, %s2484
        $region112: #{transformer_decoder_forward.1} parent=107 // pred_fallthru
          _
      $region108: #{transformer_decoder_forward.1} parent=5 // pred_fallthru
        _
    $region6: #{transformer_decoder_forward.1} parent=1 // loop_footer
      %s30 = sadd.s32 1, %s26
    $region7: #{transformer_decoder_forward.1} parent=1 // loop_footer_branch
      %25 = sbr.rel target = $region3
    $region8: #{transformer_decoder_forward.1} parent=1 // loop_exit
      _
    %2486 = vsyncpa [#allocation5], 1
    %s2487 = scalar_lea.sflag [#allocation5], 1
    %2488 = vsyncpa %s2487, 1

</llo_original>
